<compile_context>
chip_gen: v5e
topology: v5e:2x2
jax: 0.10.0
libtpu: 0.0.40
codegen_flags: <defaults>
</compile_context>

<pallas_src>
import functools

import jax
import jax.numpy as jnp
import numpy as np
from jax.experimental import pallas as pl
from jax.experimental.pallas import tpu as pltpu


def _round_up(x: int, m: int) -> int:
    return (x + m - 1) // m * m


def _sage_layer_body(a_ref, hk_ref, hd_ref, ws_ref, b_ref, wn_ref,
                     o_ref, acc_ref, self_ref, deg_ref,
                     *, apply_relu: bool, project_first: bool):
    """One SAGEConv('mean') layer.  Grid = (dst row tiles i, src K tiles k).

    a_ref    : (TM, TK)           bf16 0/1 adjacency tile (un-normalized)
    hk_ref   : (TK, Fk_pad)       bf16 k-streamed operand: HP = H@W_neigh (hoisted,
                                  project_first) or raw H (otherwise)
    hd_ref   : (TM, Fin_pad)      f32 dst features (dst = prefix of src), per-i resident
    ws_ref   : (Fin_pad, Fout_pad) f32 W_self (resident)
    b_ref    : (1, Fout_pad)      f32 bias (resident)
    wn_ref   : (Fin_pad, Fout_pad) f32 W_neigh (only passed when not project_first)
    o_ref    : (TM, Fout_pad)     f32 output tile
    acc_ref  : (TM, Fk_pad)       f32 neighbor-sum accumulator scratch
    self_ref : (TM, Fout_pad)     f32 self term + bias scratch (filled at k==0)
    deg_ref  : (TM, 1)            f32 in-kernel degree accumulator scratch
    """
    k = pl.program_id(1)

    @pl.when(k == 0)
    def _init():
        acc_ref[...] = jnp.zeros_like(acc_ref)
        deg_ref[...] = jnp.zeros_like(deg_ref)
        # Self term hoisted off the last-k epilogue; overlaps with the k pipeline.
        self_ref[...] = (jnp.dot(hd_ref[...], ws_ref[...],
                                 preferred_element_type=jnp.float32)
                         + b_ref[...])

    a = a_ref[...]                                  # bf16 0/1, fed straight to the MXU
    acc_ref[...] += jnp.dot(a, hk_ref[...], preferred_element_type=jnp.float32)
    # degree = row count of 0/1 entries; f32 row-sum is exact.  VPU/XLU work that
    # hides under the MXU matmul above.
    deg_ref[...] += jnp.sum(a.astype(jnp.float32), axis=1, keepdims=True)

    @pl.when(k == pl.num_programs(1) - 1)
    def _finalize():
        neigh = acc_ref[...] / jnp.maximum(deg_ref[...], 1.0)     # mean aggregation
        if not project_first:
            neigh = jnp.dot(neigh, wn_ref[...], preferred_element_type=jnp.float32)
        out = neigh + self_ref[...]
        if apply_relu:
            out = jnp.maximum(out, 0.0)
        o_ref[...] = out.astype(o_ref.dtype)


def _sage_kernel_project_first(a_ref, hp_ref, hd_ref, ws_ref, b_ref,
                               o_ref, acc_ref, self_ref, deg_ref, *, apply_relu):
    _sage_layer_body(a_ref, hp_ref, hd_ref, ws_ref, b_ref, None,
                     o_ref, acc_ref, self_ref, deg_ref,
                     apply_relu=apply_relu, project_first=True)


def _sage_kernel_project_last(a_ref, h_ref, hd_ref, ws_ref, b_ref, wn_ref,
                              o_ref, acc_ref, self_ref, deg_ref, *, apply_relu):
    _sage_layer_body(a_ref, h_ref, hd_ref, ws_ref, b_ref, wn_ref,
                     o_ref, acc_ref, self_ref, deg_ref,
                     apply_relu=apply_relu, project_first=False)


def sage_conv_layer(a01, h_src, w_neigh, w_self, bias, *, apply_relu,
                    tm_max: int = 512, tk_max: int = 512):
    """One SAGEConv('mean') layer via a tiled, pipelined pallas_call.

    a01   : [n_dst, n_src] bf16 0/1 adjacency (dst nodes = prefix of src nodes)
    h_src : [n_src, f_in]  f32 source-node features
    """
    n_dst, n_src = a01.shape
    f_in = h_src.shape[1]
    f_out = w_neigh.shape[1]

    fin_pad = _round_up(f_in, 128)
    fout_pad = _round_up(f_out, 128)

    # When the output feature space is smaller, hoist the projection out of the
    # k-loop: HP = H @ W_neigh computed once (XLA matmul) over all src nodes; the
    # kernel then only aggregates acc += A @ HP in the smaller space.
    project_first = fout_pad < fin_pad

    # Row tile multiple of 8, K tile multiple of 128.  Cap tm so there are at least
    # two dst tiles whenever possible: dst axis is "parallel" and v7x shards it
    # across its 2 TensorCores.
    tm = min(tm_max, _round_up(n_dst, 8))
    if n_dst > 8:
        tm = min(tm, _round_up(-(-n_dst // 2), 8))
    tk = min(tk_max, _round_up(n_src, 128))
    nd_pad = _round_up(n_dst, tm)
    ns_pad = _round_up(n_src, tk)

    # k-streamed feature operand stored/streamed as bf16 (halves its HBM traffic and
    # feeds the bf16 MXU path directly); A is exact 0/1 in bf16.
    if project_first:
        hk = jnp.dot(h_src, w_neigh, preferred_element_type=jnp.float32)
        fk_pad = fout_pad
    else:
        hk = h_src
        fk_pad = fin_pad
    hk_p = jnp.pad(hk.astype(jnp.bfloat16),
                   ((0, ns_pad - n_src), (0, fk_pad - hk.shape[1])))

    # Zero padding is exact; jnp.pad is a single fused copy per operand.
    a_p = jnp.pad(a01.astype(jnp.bfloat16),
                  ((0, nd_pad - n_dst), (0, ns_pad - n_src)))
    hd_p = jnp.pad(h_src[:n_dst], ((0, nd_pad - n_dst), (0, fin_pad - f_in)))
    ws_p = jnp.pad(w_self, ((0, fin_pad - f_in), (0, fout_pad - f_out)))
    b_p = jnp.pad(bias.reshape(1, -1), ((0, 0), (0, fout_pad - f_out)))

    in_specs = [
        pl.BlockSpec((tm, tk), lambda i, k: (i, k)),               # A (bf16 0/1)
        pl.BlockSpec((tk, fk_pad), lambda i, k: (k, 0)),           # HP or H (bf16)
        pl.BlockSpec((tm, fin_pad), lambda i, k: (i, 0)),          # H_dst (per-i)
        pl.BlockSpec((fin_pad, fout_pad), lambda i, k: (0, 0)),    # W_self (resident)
        pl.BlockSpec((1, fout_pad), lambda i, k: (0, 0)),          # bias (resident)
    ]
    inputs = [a_p, hk_p, hd_p, ws_p, b_p]
    if project_first:
        kernel = functools.partial(_sage_kernel_project_first, apply_relu=apply_relu)
        f_acc = fout_pad
    else:
        wn_p = jnp.pad(w_neigh, ((0, fin_pad - f_in), (0, fout_pad - f_out)))
        in_specs.append(pl.BlockSpec((fin_pad, fout_pad), lambda i, k: (0, 0)))
        inputs.append(wn_p)
        kernel = functools.partial(_sage_kernel_project_last, apply_relu=apply_relu)
        f_acc = fin_pad

    grid = (nd_pad // tm, ns_pad // tk)
    out_p = pl.pallas_call(
        kernel,
        out_shape=jax.ShapeDtypeStruct((nd_pad, fout_pad), jnp.float32),
        grid_spec=pltpu.PrefetchScalarGridSpec(
            num_scalar_prefetch=0,
            grid=grid,
            in_specs=in_specs,
            out_specs=pl.BlockSpec((tm, fout_pad), lambda i, k: (i, 0)),
            scratch_shapes=[pltpu.VMEM((tm, f_acc), jnp.float32),    # neighbor-sum acc
                            pltpu.VMEM((tm, fout_pad), jnp.float32),  # self term + bias
                            pltpu.VMEM((tm, 1), jnp.float32)],        # degree
        ),
        compiler_params=pltpu.CompilerParams(
            dimension_semantics=("parallel", "arbitrary"),
            vmem_limit_bytes=48 * 1024 * 1024,   # fits v7x's 64 MiB; headroom on v5e/v6e
        ),
    )(*inputs)

    return out_p[:n_dst, :f_out]


def init_sage_params(key, in_feats, n_hidden, n_classes, n_layers):
    """Deterministic parameter init.  Weights stored as [f_in, f_out]."""
    dims = [in_feats] + [n_hidden] * (n_layers - 1) + [n_classes]
    params = []
    for l in range(n_layers):
        f_in, f_out = dims[l], dims[l + 1]
        key, k1, k2, k3 = jax.random.split(key, 4)
        scale = 1.0 / np.sqrt(f_in)
        w_neigh = jax.random.uniform(k1, (f_in, f_out), jnp.float32, -scale, scale)
        w_self = jax.random.uniform(k2, (f_in, f_out), jnp.float32, -scale, scale)
        bias = jax.random.uniform(k3, (1, f_out), jnp.float32, -scale, scale)
        params.append((w_neigh, w_self, bias))
    return params


def sage_forward(blocks, x, params):
    """blocks: list of un-normalized 0/1 adjacencies [Nd_l, Ns_l] (bf16); x: [Ns_0, in_feats]."""
    h = x
    n_layers = len(params)
    for l, (a01, (w_neigh, w_self, bias)) in enumerate(zip(blocks, params)):
        h = sage_conv_layer(a01, h, w_neigh, w_self, bias,
                            apply_relu=(l != n_layers - 1))
        # dropout: identity in eval mode
    return h


def sage_forward_ref(blocks, x, params):
    """Pure-jnp f32 reference for correctness checking (mean aggregator)."""
    h = x
    n_layers = len(params)
    for l, (a01, (w_neigh, w_self, bias)) in enumerate(zip(blocks, params)):
        n_dst = a01.shape[0]
        a = a01.astype(jnp.float32)
        deg = jnp.maximum(jnp.sum(a, axis=1, keepdims=True), 1.0)
        neigh = (a @ h) / deg
        out = neigh @ w_neigh + h[:n_dst] @ w_self + bias
        if l != n_layers - 1:
            out = jnp.maximum(out, 0.0)
        h = out
    return h


def make_block(key, n_dst, n_src, p=0.05):
    """Random bipartite 0/1 block; dst nodes are the prefix of src nodes.

    Kept UN-normalized and produced once in bf16 (0/1 exactly representable); the
    kernel derives 1/deg itself and applies it after the aggregation matmul.
    """
    adj = (jax.random.uniform(key, (n_dst, n_src)) < p).astype(jnp.float32)
    # guarantee at least one neighbor per dst node (self edge; dst is a src prefix)
    adj = adj.at[jnp.arange(n_dst), jnp.arange(n_dst)].set(1.0)
    return adj.astype(jnp.bfloat16)


if __name__ == "__main__":
    # Small but grid-exercising configuration: layer 0 has 2 dst tiles x 2 K tiles and
    # uses the hoisted project-first path (256->128); layers 1/2 use the project-last
    # path; every layer has >= 2 dst tiles for the "parallel" axis.
    in_feats, n_hidden, n_classes, n_layers = 256, 128, 16, 3
    node_counts = [1024, 512, 256, 128]   # src of layer l -> dst of layer l == src of l+1

    key = jax.random.PRNGKey(0)
    key, kx = jax.random.split(key)
    x = jax.random.normal(kx, (node_counts[0], in_feats), jnp.float32)

    blocks = []
    for l in range(n_layers):
        key, kb = jax.random.split(key)
        blocks.append(make_block(kb, node_counts[l + 1], node_counts[l], p=0.05))

    key, kp = jax.random.split(key)
    params = init_sage_params(kp, in_feats, n_hidden, n_classes, n_layers)

    out = jax.block_until_ready(sage_forward(blocks, x, params))
    ref = jax.block_until_ready(sage_forward_ref(blocks, x, params))

    # Tolerance reflects the bf16 feature path for the aggregation matmul (A is exact
    # 0/1; accumulation is f32).  Measured error is well inside this bound.
    np.testing.assert_allclose(np.asarray(out), np.asarray(ref), rtol=3e-3, atol=3e-3)
    assert out.shape == (node_counts[-1], n_classes)

    print("KERNEL_OK")
</pallas_src>

<mosaic_0001>
module attributes {stable_mosaic.version = 11 : i64} {
  func.func @_sage_kernel_project_first(%arg0: i32, %arg1: i32, %arg2: memref<256x512xbf16, #tpu.memory_space<vmem>>, %arg3: memref<512x128xbf16, #tpu.memory_space<vmem>>, %arg4: memref<256x256xf32, #tpu.memory_space<vmem>>, %arg5: memref<256x128xf32, #tpu.memory_space<vmem>>, %arg6: memref<1x128xf32, #tpu.memory_space<vmem>>, %arg7: memref<256x128xf32, #tpu.memory_space<vmem>>, %arg8: memref<256x128xf32, #tpu.memory_space<vmem>>, %arg9: memref<256x128xf32, #tpu.memory_space<vmem>>, %arg10: memref<256x1xf32, #tpu.memory_space<vmem>>) attributes {dimension_semantics = [#tpu.dimension_semantics<parallel>, #tpu.dimension_semantics<arbitrary>], iteration_bounds = array<i64: 2, 2>, scalar_prefetch = 0 : i64, scratch_operands = 3 : i64, tpu.core_type = #tpu.core_type<tc>, window_params = [{transform_indices = @transform_0, window_bounds = array<i64: 256, 512>}, {transform_indices = @transform_1, window_bounds = array<i64: 512, 128>}, {transform_indices = @transform_2, window_bounds = array<i64: 256, 256>}, {pipeline_mode = #tpu.pipeline_mode<synchronous>, transform_indices = @transform_3, window_bounds = array<i64: 256, 128>}, {pipeline_mode = #tpu.pipeline_mode<synchronous>, transform_indices = @transform_4, window_bounds = array<i64: 1, 128>}, {transform_indices = @transform_5, window_bounds = array<i64: 256, 128>}]} {
    %c0_i32 = arith.constant 0 : i32
    %0 = arith.cmpi eq, %arg1, %c0_i32 : i32
    %1 = arith.extui %0 : i1 to i32
    %c0_i32_0 = arith.constant 0 : i32
    %2 = arith.cmpi ne, %1, %c0_i32_0 : i32
    scf.if %2 {
      %cst_14 = arith.constant 0.000000e+00 : f32
      %18 = vector.broadcast %cst_14 : f32 to vector<256x128xf32>
      %c0_15 = arith.constant 0 : index
      %c0_16 = arith.constant 0 : index
      %19 = vector.load %arg8[%c0_15, %c0_16] : memref<256x128xf32, #tpu.memory_space<vmem>>, vector<256x128xf32>
      tpu.vector_store %arg8[%c0_15, %c0_16], %18 {strides = array<i32>} : memref<256x128xf32, #tpu.memory_space<vmem>>, vector<256x128xf32>,
      %cst_17 = arith.constant 0.000000e+00 : f32
      %20 = vector.broadcast %cst_17 : f32 to vector<256x1xf32>
      %c0_18 = arith.constant 0 : index
      %c0_19 = arith.constant 0 : index
      %21 = vector.load %arg10[%c0_18, %c0_19] : memref<256x1xf32, #tpu.memory_space<vmem>>, vector<256x1xf32>
      tpu.vector_store %arg10[%c0_18, %c0_19], %20 {strides = array<i32>} : memref<256x1xf32, #tpu.memory_space<vmem>>, vector<256x1xf32>,
      %c0_20 = arith.constant 0 : index
      %c0_21 = arith.constant 0 : index
      %22 = vector.load %arg4[%c0_20, %c0_21] : memref<256x256xf32, #tpu.memory_space<vmem>>, vector<256x256xf32>
      %c0_22 = arith.constant 0 : index
      %c0_23 = arith.constant 0 : index
      %23 = vector.load %arg5[%c0_22, %c0_23] : memref<256x128xf32, #tpu.memory_space<vmem>>, vector<256x128xf32>
      %cst_24 = arith.constant dense<0.000000e+00> : vector<256x128xf32>
      %24 = tpu.matmul %22, %23, %cst_24 {dimension_numbers = #tpu.dot_dimension_numbers<[1], [0], [0], [1], [0, 0, 1, 1], [], []>} : vector<256x256xf32>, vector<256x128xf32>, vector<256x128xf32> -> vector<256x128xf32>
      %c0_25 = arith.constant 0 : index
      %c0_26 = arith.constant 0 : index
      %25 = vector.load %arg6[%c0_25, %c0_26] : memref<1x128xf32, #tpu.memory_space<vmem>>, vector<1x128xf32>
      %26 = vector.broadcast %25 : vector<1x128xf32> to vector<256x128xf32>
      %27 = arith.addf %24, %26 : vector<256x128xf32>
      %c0_27 = arith.constant 0 : index
      %c0_28 = arith.constant 0 : index
      %28 = vector.load %arg9[%c0_27, %c0_28] : memref<256x128xf32, #tpu.memory_space<vmem>>, vector<256x128xf32>
      tpu.vector_store %arg9[%c0_27, %c0_28], %27 {strides = array<i32>} : memref<256x128xf32, #tpu.memory_space<vmem>>, vector<256x128xf32>,
    } else {
    }
    %c0 = arith.constant 0 : index
    %c0_1 = arith.constant 0 : index
    %3 = vector.load %arg2[%c0, %c0_1] : memref<256x512xbf16, #tpu.memory_space<vmem>>, vector<256x512xbf16>
    %c0_2 = arith.constant 0 : index
    %c0_3 = arith.constant 0 : index
    %4 = vector.load %arg8[%c0_2, %c0_3] : memref<256x128xf32, #tpu.memory_space<vmem>>, vector<256x128xf32>
    %c0_4 = arith.constant 0 : index
    %c0_5 = arith.constant 0 : index
    %5 = vector.load %arg3[%c0_4, %c0_5] : memref<512x128xbf16, #tpu.memory_space<vmem>>, vector<512x128xbf16>
    %cst = arith.constant dense<0.000000e+00> : vector<256x128xf32>
    %6 = tpu.matmul %3, %5, %cst {dimension_numbers = #tpu.dot_dimension_numbers<[1], [0], [0], [1], [0, 0, 1, 1], [], []>} : vector<256x512xbf16>, vector<512x128xbf16>, vector<256x128xf32> -> vector<256x128xf32>
    %7 = arith.addf %4, %6 : vector<256x128xf32>
    %c0_6 = arith.constant 0 : index
    %c0_7 = arith.constant 0 : index
    %8 = vector.load %arg8[%c0_6, %c0_7] : memref<256x128xf32, #tpu.memory_space<vmem>>, vector<256x128xf32>
    tpu.vector_store %arg8[%c0_6, %c0_7], %7 {strides = array<i32>} : memref<256x128xf32, #tpu.memory_space<vmem>>, vector<256x128xf32>,
    %c0_8 = arith.constant 0 : index
    %c0_9 = arith.constant 0 : index
    %9 = vector.load %arg10[%c0_8, %c0_9] : memref<256x1xf32, #tpu.memory_space<vmem>>, vector<256x1xf32>
    %10 = arith.extf %3 : vector<256x512xbf16> to vector<256x512xf32>
    %cst_10 = arith.constant dense<0.000000e+00> : vector<256xf32>
    %11 = vector.multi_reduction <add>, %10, %cst_10 [1] : vector<256x512xf32> to vector<256xf32>
    %12 = vector.shape_cast %11 : vector<256xf32> to vector<256x1xf32>
    %13 = arith.addf %9, %12 : vector<256x1xf32>
    %c0_11 = arith.constant 0 : index
    %c0_12 = arith.constant 0 : index
    %14 = vector.load %arg10[%c0_11, %c0_12] : memref<256x1xf32, #tpu.memory_space<vmem>>, vector<256x1xf32>
    tpu.vector_store %arg10[%c0_11, %c0_12], %13 {strides = array<i32>} : memref<256x1xf32, #tpu.memory_space<vmem>>, vector<256x1xf32>,
    %c1_i32 = arith.constant 1 : i32
    %15 = arith.cmpi eq, %arg1, %c1_i32 : i32
    %16 = arith.extui %15 : i1 to i32
    %c0_i32_13 = arith.constant 0 : i32
    %17 = arith.cmpi ne, %16, %c0_i32_13 : i32
    scf.if %17 {
      %c0_14 = arith.constant 0 : index
      %c0_15 = arith.constant 0 : index
      %18 = vector.load %arg8[%c0_14, %c0_15] : memref<256x128xf32, #tpu.memory_space<vmem>>, vector<256x128xf32>
      %c0_16 = arith.constant 0 : index
      %c0_17 = arith.constant 0 : index
      %19 = vector.load %arg10[%c0_16, %c0_17] : memref<256x1xf32, #tpu.memory_space<vmem>>, vector<256x1xf32>
      %cst_18 = arith.constant 1.000000e+00 : f32
      %20 = vector.broadcast %cst_18 : f32 to vector<256x1xf32>
      %21 = arith.maximumf %19, %20 : vector<256x1xf32>
      %22 = vector.broadcast %21 : vector<256x1xf32> to vector<256x128xf32>
      %23 = arith.divf %18, %22 : vector<256x128xf32>
      %c0_19 = arith.constant 0 : index
      %c0_20 = arith.constant 0 : index
      %24 = vector.load %arg9[%c0_19, %c0_20] : memref<256x128xf32, #tpu.memory_space<vmem>>, vector<256x128xf32>
      %25 = arith.addf %23, %24 : vector<256x128xf32>
      %cst_21 = arith.constant 0.000000e+00 : f32
      %26 = vector.broadcast %cst_21 : f32 to vector<256x128xf32>
      %27 = arith.maximumf %25, %26 : vector<256x128xf32>
      %c0_22 = arith.constant 0 : index
      %c0_23 = arith.constant 0 : index
      %28 = vector.load %arg7[%c0_22, %c0_23] : memref<256x128xf32, #tpu.memory_space<vmem>>, vector<256x128xf32>
      tpu.vector_store %arg7[%c0_22, %c0_23], %27 {strides = array<i32>} : memref<256x128xf32, #tpu.memory_space<vmem>>, vector<256x128xf32>,
    } else {
    }
    return
  }
  func.func @transform_0(%arg0: i32, %arg1: i32) -> (i32, i32) {
    %c0_i32 = arith.constant 0 : i32
    return %arg0, %arg1 : i32, i32
  }
  func.func @transform_1(%arg0: i32, %arg1: i32) -> (i32, i32) {
    %c0_i32 = arith.constant 0 : i32
    %c0_i32_0 = arith.constant 0 : i32
    return %arg1, %c0_i32 : i32, i32
  }
  func.func @transform_2(%arg0: i32, %arg1: i32) -> (i32, i32) {
    %c0_i32 = arith.constant 0 : i32
    %c0_i32_0 = arith.constant 0 : i32
    return %arg0, %c0_i32 : i32, i32
  }
  func.func @transform_3(%arg0: i32, %arg1: i32) -> (i32, i32) {
    %c0_i32 = arith.constant 0 : i32
    %c0_i32_0 = arith.constant 0 : i32
    %c0_i32_1 = arith.constant 0 : i32
    return %c0_i32, %c0_i32_0 : i32, i32
  }
  func.func @transform_4(%arg0: i32, %arg1: i32) -> (i32, i32) {
    %c0_i32 = arith.constant 0 : i32
    %c0_i32_0 = arith.constant 0 : i32
    %c0_i32_1 = arith.constant 0 : i32
    return %c0_i32, %c0_i32_0 : i32, i32
  }
  func.func @transform_5(%arg0: i32, %arg1: i32) -> (i32, i32) {
    %c0_i32 = arith.constant 0 : i32
    %c0_i32_0 = arith.constant 0 : i32
    return %arg0, %c0_i32 : i32, i32
  }
}

</mosaic_0001>

<llo_original>
// kernel: tpu_custom_call.1
$region0: #{tpu_custom_call.1}
  #allocation0 [shape = 'u32[]', space=smem, size = 0x4, offset = 0x4, fixed_abs, tag = 'smem constant byte address 0x4 - core index']
  #allocation1 [shape = 'u32[72,128]{1,0:T(1,128)}', space=vmem, size = 0x9000, scoped, tag = 'internal scratch']
  #allocation2 [shape = 'f32[256,128]{1,0:T(8,128)}', space=vmem, size = 0x20000, scoped, tag = 'scratch operand']
  #allocation3 [shape = 'f32[256,128]{1,0:T(8,128)}', space=vmem, size = 0x20000, scoped, tag = 'scratch operand']
  #allocation4 [shape = 'f32[256,1]{1,0:T(8,128)}', space=vmem, size = 0x20000, scoped, tag = 'scratch operand']
  %s0 = inlined_call_operand.hbm [shape: bf16[512,1024], index: 0, kind: input, shape index: {}]
  %s1 = inlined_call_operand.hbm [shape: bf16[1024,128], index: 1, kind: input, shape index: {}]
  %s2 = inlined_call_operand.hbm [shape: f32[512,256], index: 2, kind: input, shape index: {}]
  %s3 = inlined_call_operand.hbm [shape: f32[256,128], index: 3, kind: input, shape index: {}]
  %s4 = inlined_call_operand.vmem [shape: f32[1,128], index: 4, kind: input, shape index: {}]
  %s5 = inlined_call_operand.hbm [shape: f32[512,128], index: 5, kind: output, shape index: {}]
  %s6 = sld [smem:[#allocation0]]
  $region77: #{tpu_custom_call.1} parent=0
    _
  %s8 = ssub.s32 1, %s6
  %s9 = scalar_select 0, %s8, %s6
  $region1: #{tpu_custom_call.1} parent=0
    #allocation5 [shape = 'u8[524288]{0}', space=vmem, size = 0x80000, scoped, tag = 'input window, operand 0']
    #allocation6 [shape = 's32[2]{0}', space=sflag, size = 0x8, scoped, tag = 'scoped memory for tpu_custom_call.1']
    #allocation7 [shape = 's32[2]{0}', space=sflag, size = 0x8, scoped, tag = 'scoped memory for tpu_custom_call.1']
    #allocation8 [shape = 'u8[262144]{0}', space=vmem, size = 0x40000, scoped, tag = 'input window, operand 1']
    #allocation9 [shape = 's32[2]{0}', space=sflag, size = 0x8, scoped, tag = 'scoped memory for tpu_custom_call.1']
    #allocation10 [shape = 'u8[524288]{0}', space=vmem, size = 0x80000, scoped, tag = 'input window, operand 2']
    #allocation11 [shape = 'u8[131072]{0}', space=vmem, size = 0x20000, scoped, tag = 'input window, operand 3, single buffered']
    #allocation12 [shape = 's32[1]{0}', space=sflag, size = 0x4, scoped, tag = 'scoped memory for tpu_custom_call.1']
    #allocation13 [shape = 'u8[262144]{0}', space=vmem, size = 0x40000, scoped, tag = 'output window, operand 0']
    %10 = vsyncpa [#allocation6], 0
    %s11 = scalar_lea.sflag [#allocation6], 1
    %12 = vsyncpa %s11, 0
    %13 = vsyncpa [#allocation9], 0
    %s14 = scalar_lea.sflag [#allocation9], 1
    %15 = vsyncpa %s14, 0
    %16 = vsyncpa [#allocation12], 0
    %17 = vsyncpa [#allocation7], 0
    %s18 = scalar_lea.sflag [#allocation7], 1
    %19 = vsyncpa %s18, 0
    loop: start=0, step=1, limit=6
    $region2: #{tpu_custom_call.1} parent=1 // loop_pre_header
      _
    $region3: #{tpu_custom_call.1} parent=1 // loop_header
      %s21 = sphi 0, %s25
      %p22 = scmp.ge.s32.totalorder %s21, 6
      %s28 = sphi 0, %s40
      %s29 = sphi 0, %s36
      %s30 = sphi 0, %s28
      %s31 = sphi 0, %s29
      %s32 = sphi 0, %s30
      %s33 = sphi 0, %s31
      %s45 = sphi 0, %s47
      %s48 = sphi 0, %s45
      %s49 = sphi 0, %s48
      %s65 = sphi 0, %s49
      %s71 = sphi 0, %s73
      %s74 = sphi 0, %s71
      %s75 = sphi 0, %s74
      %s91 = sphi 0, %s75
      %s97 = sphi 0, %s99
      %s100 = sphi 0, %s97
      %s101 = sphi 0, %s100
      %s117 = sphi 0, %s101
      %s121 = sphi 0, %s121
      %s123 = sphi 0, %s121
      %s124 = sphi 0, %s123
      %s138 = sphi 0, %s124
      %s142 = sphi 0, %s142
      %s144 = sphi 0, %s142
      %s145 = sphi 0, %s144
      %s159 = sphi 0, %s145
      %s165 = sphi 0, %s167
      %s168 = sphi 0, %s165
      %s169 = sphi 0, %s168
      %s185 = sphi 0, %s169
    $region4: #{tpu_custom_call.1} parent=1 // loop_header_branch
      %24 = sbr.rel (%p22) target = $region8
    $region5: #{tpu_custom_call.1} parent=1 // loop_body
      %s26 = ssub.s32 %s21, 1
      %s27 = ssub.s32 %s21, 2
      %s34 = sadd.s32 1, %s29
      %p35 = scmp.ge.s32.totalorder %s34, 2
      %s36 = scalar_select %p35, 0, %s34
      %s37 = sadd.s32 1, %s28
      %s38 = scalar_select %p35, %s37, %s28
      %p39 = scmp.ge.s32.totalorder %s38, 2
      %s40 = scalar_select %p39, 0, %s38
      %s41 = ssub.s32 %s28, %s40
      %s42 = ssub.s32 %s29, %s36
      %s43 = sor.u32 %s41, %s42
      %p44 = scmp.eq.s32.totalorder %s43, 0
      %s46 = sadd.s32 %s45, 1
      %s47 = scalar_select %p44, %s45, %s46
      %p50 = pneg %p44
      %p51 = scmp.eq.s32.totalorder %s21, 3
      %p52 = por %p50, %p51
      %p53 = scmp.ne.s32.totalorder %s45, %s48
      %p54 = scmp.eq.s32.totalorder %s21, 0
      %p55 = por %p53, %p54
      %p56 = scmp.ne.s32.totalorder %s45, %s48
      %p57 = scmp.eq.s32.totalorder %s26, 3
      %p58 = por %p56, %p57
      %p59 = scmp.ne.s32.totalorder %s48, %s49
      %p60 = scmp.eq.s32.totalorder %s26, 0
      %p61 = por %p59, %p60
      %p62 = scmp.ne.s32.totalorder %s48, %s49
      %p63 = scmp.eq.s32.totalorder %s27, 3
      %p64 = por %p62, %p63
      %p66 = scmp.ne.s32.totalorder %s49, %s65
      %p67 = scmp.eq.s32.totalorder %s27, 0
      %p68 = por %p66, %p67
      %s69 = ssub.s32 %s29, %s36
      %p70 = scmp.eq.s32.totalorder %s69, 0
      %s72 = sadd.s32 %s71, 1
      %s73 = scalar_select %p70, %s71, %s72
      %p76 = pneg %p70
      %p77 = scmp.eq.s32.totalorder %s21, 3
      %p78 = por %p76, %p77
      %p79 = scmp.ne.s32.totalorder %s71, %s74
      %p80 = scmp.eq.s32.totalorder %s21, 0
      %p81 = por %p79, %p80
      %p82 = scmp.ne.s32.totalorder %s71, %s74
      %p83 = scmp.eq.s32.totalorder %s26, 3
      %p84 = por %p82, %p83
      %p85 = scmp.ne.s32.totalorder %s74, %s75
      %p86 = scmp.eq.s32.totalorder %s26, 0
      %p87 = por %p85, %p86
      %p88 = scmp.ne.s32.totalorder %s74, %s75
      %p89 = scmp.eq.s32.totalorder %s27, 3
      %p90 = por %p88, %p89
      %p92 = scmp.ne.s32.totalorder %s75, %s91
      %p93 = scmp.eq.s32.totalorder %s27, 0
      %p94 = por %p92, %p93
      %s95 = ssub.s32 %s28, %s40
      %p96 = scmp.eq.s32.totalorder %s95, 0
      %s98 = sadd.s32 %s97, 1
      %s99 = scalar_select %p96, %s97, %s98
      %p102 = pneg %p96
      %p103 = scmp.eq.s32.totalorder %s21, 3
      %p104 = por %p102, %p103
      %p105 = scmp.ne.s32.totalorder %s97, %s100
      %p106 = scmp.eq.s32.totalorder %s21, 0
      %p107 = por %p105, %p106
      %p108 = scmp.ne.s32.totalorder %s97, %s100
      %p109 = scmp.eq.s32.totalorder %s26, 3
      %p110 = por %p108, %p109
      %p111 = scmp.ne.s32.totalorder %s100, %s101
      %p112 = scmp.eq.s32.totalorder %s26, 0
      %p113 = por %p111, %p112
      %p114 = scmp.ne.s32.totalorder %s100, %s101
      %p115 = scmp.eq.s32.totalorder %s27, 3
      %p116 = por %p114, %p115
      %p118 = scmp.ne.s32.totalorder %s101, %s117
      %p119 = scmp.eq.s32.totalorder %s27, 0
      %p120 = por %p118, %p119
      %s122 = sadd.s32 %s121, 1
      %p125 = scmp.eq.s32.totalorder %s21, 3
      %p126 = scmp.ne.s32.totalorder %s121, %s123
      %p127 = scmp.eq.s32.totalorder %s21, 0
      %p128 = por %p126, %p127
      %p129 = scmp.ne.s32.totalorder %s121, %s123
      %p130 = scmp.eq.s32.totalorder %s26, 3
      %p131 = por %p129, %p130
      %p132 = scmp.ne.s32.totalorder %s123, %s124
      %p133 = scmp.eq.s32.totalorder %s26, 0
      %p134 = por %p132, %p133
      %p135 = scmp.ne.s32.totalorder %s123, %s124
      %p136 = scmp.eq.s32.totalorder %s27, 3
      %p137 = por %p135, %p136
      %p139 = scmp.ne.s32.totalorder %s124, %s138
      %p140 = scmp.eq.s32.totalorder %s27, 0
      %p141 = por %p139, %p140
      %s143 = sadd.s32 %s142, 1
      %p146 = scmp.eq.s32.totalorder %s21, 3
      %p147 = scmp.ne.s32.totalorder %s142, %s144
      %p148 = scmp.eq.s32.totalorder %s21, 0
      %p149 = por %p147, %p148
      %p150 = scmp.ne.s32.totalorder %s142, %s144
      %p151 = scmp.eq.s32.totalorder %s26, 3
      %p152 = por %p150, %p151
      %p153 = scmp.ne.s32.totalorder %s144, %s145
      %p154 = scmp.eq.s32.totalorder %s26, 0
      %p155 = por %p153, %p154
      %p156 = scmp.ne.s32.totalorder %s144, %s145
      %p157 = scmp.eq.s32.totalorder %s27, 3
      %p158 = por %p156, %p157
      %p160 = scmp.ne.s32.totalorder %s145, %s159
      %p161 = scmp.eq.s32.totalorder %s27, 0
      %p162 = por %p160, %p161
      %s163 = ssub.s32 %s28, %s40
      %p164 = scmp.eq.s32.totalorder %s163, 0
      %s166 = sadd.s32 %s165, 1
      %s167 = scalar_select %p164, %s165, %s166
      %p170 = pneg %p164
      %p171 = scmp.eq.s32.totalorder %s21, 3
      %p172 = por %p170, %p171
      %p173 = scmp.ne.s32.totalorder %s165, %s168
      %p174 = scmp.eq.s32.totalorder %s21, 0
      %p175 = por %p173, %p174
      %p176 = scmp.ne.s32.totalorder %s165, %s168
      %p177 = scmp.eq.s32.totalorder %s26, 3
      %p178 = por %p176, %p177
      %p179 = scmp.ne.s32.totalorder %s168, %s169
      %p180 = scmp.eq.s32.totalorder %s26, 0
      %p181 = por %p179, %p180
      %p182 = scmp.ne.s32.totalorder %s168, %s169
      %p183 = scmp.eq.s32.totalorder %s27, 3
      %p184 = por %p182, %p183
      %p186 = scmp.ne.s32.totalorder %s169, %s185
      %p187 = scmp.eq.s32.totalorder %s27, 0
      %p188 = por %p186, %p187
      %p189 = scmp.le.s32.totalorder 1, %s21
      %p190 = scmp.lt.s32.totalorder %s21, 5
      %p191 = pnand %p189, %p190
      %p192 = pneg %p191
      // Predicated region
      $region9: #{tpu_custom_call.1} parent=5 // pred_check
        _
      $region10: #{tpu_custom_call.1} parent=5 // pred_check_branch
        %194 = sbr.rel (%p191) target = $region12
      $region11: #{tpu_custom_call.1} parent=5 // pred_region
        %s195 = ssub.s32 %s21, 1
        // Predicated region
        $region13: #{tpu_custom_call.1} parent=11 // pred_check
          %p196 = pneg %p134
        $region14: #{tpu_custom_call.1} parent=11 // pred_check_branch
          %198 = sbr.rel (%p196) target = $region16
        $region15: #{tpu_custom_call.1} parent=11 // pred_region
          %200 = vsyncadd [#allocation12], 0
          %s201 = sshll.u32 %s3, 4
          %s202 = int_to_ptr.hbm [resolvable:$true] %s201
          %s203 = sshll.u32 [#allocation11], 4
          %s204 = int_to_ptr.vmem [resolvable:$true] %s203
          %209 = dma.hbm_to_vmem [thread:$0]  %s202, 4096, %s204, [#allocation12], 128, 128, 8
        $region16: #{tpu_custom_call.1} parent=11 // pred_fallthru
          _
        // Predicated region
        $region17: #{tpu_custom_call.1} parent=11 // pred_check
          %p210 = pneg %p155
        $region18: #{tpu_custom_call.1} parent=11 // pred_check_branch
          %212 = sbr.rel (%p210) target = $region20
        $region19: #{tpu_custom_call.1} parent=11 // pred_region
          _
        $region20: #{tpu_custom_call.1} parent=11 // pred_fallthru
          _
      $region12: #{tpu_custom_call.1} parent=5 // pred_fallthru
        _
      %p213 = scmp.lt.s32.totalorder %s21, 4
      // Predicated region
      $region21: #{tpu_custom_call.1} parent=5 // pred_check
        %p214 = pneg %p213
      $region22: #{tpu_custom_call.1} parent=5 // pred_check_branch
        %216 = sbr.rel (%p214) target = $region24
      $region23: #{tpu_custom_call.1} parent=5 // pred_region
        // Predicated region
        $region25: #{tpu_custom_call.1} parent=23 // pred_check
          %p217 = pneg %p55
        $region26: #{tpu_custom_call.1} parent=23 // pred_check_branch
          %219 = sbr.rel (%p217) target = $region28
        $region27: #{tpu_custom_call.1} parent=23 // pred_region
          %s220 = sand.u32 %s45, 1
          %s221 = scalar_lea.sflag [#allocation6], %s220
          %s222 = sand.u32 %s45, 1
          %s223 = smul.addr %s222, 512
          %s224 = scalar_lea.vmem [#allocation5], %s223
          %s225 = smul.u32 32, %s28
          %s226 = smul.u32 4, %s29
          %228 = vsyncadd %s221, 0
          %s229 = smul.addr %s225, 8
          %s230 = sadd.s32 %s226, %s229
          %s231 = smul.addr %s230, 4
          %s232 = scalar_lea.hbm %s0, %s231
          %s233 = sshll.u32 %s232, 4
          %s234 = int_to_ptr.hbm [resolvable:$true] %s233
          %s235 = sshll.u32 %s224, 4
          %s236 = int_to_ptr.vmem [resolvable:$true] %s235
          %241 = dma.hbm_to_vmem [thread:$0]  %s234, 8192, %s236, %s221, 512, 256, 16
        $region28: #{tpu_custom_call.1} parent=23 // pred_fallthru
          _
        // Predicated region
        $region29: #{tpu_custom_call.1} parent=23 // pred_check
          %p242 = pneg %p81
        $region30: #{tpu_custom_call.1} parent=23 // pred_check_branch
          %244 = sbr.rel (%p242) target = $region32
        $region31: #{tpu_custom_call.1} parent=23 // pred_region
          %s245 = sand.u32 %s21, 1
          %s246 = scalar_lea.sflag [#allocation9], %s245
          %s247 = sand.u32 %s71, 1
          %s248 = smul.addr %s247, 256
          %s249 = scalar_lea.vmem [#allocation8], %s248
          %s250 = smul.u32 64, %s29
          %252 = vsyncadd %s246, 0
          %s253 = smul.addr %s250, 4
          %s254 = scalar_lea.hbm %s1, %s253
          %s255 = sshll.u32 %s254, 4
          %s256 = int_to_ptr.hbm [resolvable:$true] %s255
          %s257 = sshll.u32 %s249, 4
          %s258 = int_to_ptr.vmem [resolvable:$true] %s257
          %263 = dma.hbm_to_vmem [thread:$0]  %s256, 4096, %s258, %s246, 64, 64, 4
        $region32: #{tpu_custom_call.1} parent=23 // pred_fallthru
          _
        // Predicated region
        $region33: #{tpu_custom_call.1} parent=23 // pred_check
          %p264 = pneg %p107
        $region34: #{tpu_custom_call.1} parent=23 // pred_check_branch
          %266 = sbr.rel (%p264) target = $region36
        $region35: #{tpu_custom_call.1} parent=23 // pred_region
          %s267 = sand.u32 %s21, 1
          %s268 = scalar_lea.sflag [#allocation9], %s267
          %s269 = sand.u32 %s97, 1
          %s270 = smul.addr %s269, 512
          %s271 = scalar_lea.vmem [#allocation10], %s270
          %s272 = smul.u32 32, %s28
          %274 = vsyncadd %s268, 0
          %s275 = smul.addr %s272, 2
          %s276 = smul.addr %s275, 8
          %s277 = scalar_lea.hbm %s2, %s276
          %s278 = sshll.u32 %s277, 4
          %s279 = int_to_ptr.hbm [resolvable:$true] %s278
          %s280 = sshll.u32 %s271, 4
          %s281 = int_to_ptr.vmem [resolvable:$true] %s280
          %286 = dma.hbm_to_vmem [thread:$0]  %s279, 8192, %s281, %s268, 256, 256, 16
        $region36: #{tpu_custom_call.1} parent=23 // pred_fallthru
          _
      $region24: #{tpu_custom_call.1} parent=5 // pred_fallthru
        _
      %p287 = scmp.le.s32.totalorder 1, %s21
      %p288 = scmp.lt.s32.totalorder %s21, 5
      %p289 = pnand %p287, %p288
      %p290 = pneg %p289
      // Predicated region
      $region37: #{tpu_custom_call.1} parent=5 // pred_check
        _
      $region38: #{tpu_custom_call.1} parent=5 // pred_check_branch
        %292 = sbr.rel (%p289) target = $region40
      $region39: #{tpu_custom_call.1} parent=5 // pred_region
        %s293 = ssub.s32 %s21, 1
        %s294 = sand.u32 %s48, 1
        %s295 = scalar_lea.sflag [#allocation6], %s294
        %s296 = sand.u32 %s48, 1
        %s297 = smul.addr %s296, 512
        %s298 = scalar_lea.vmem [#allocation5], %s297
        // Predicated region
        $region41: #{tpu_custom_call.1} parent=39 // pred_check
          %p299 = pneg %p61
        $region42: #{tpu_custom_call.1} parent=39 // pred_check_branch
          %301 = sbr.rel (%p299) target = $region44
        $region43: #{tpu_custom_call.1} parent=39 // pred_region
          %303 = dma.done %s295, 8192
        $region44: #{tpu_custom_call.1} parent=39 // pred_fallthru
          _
        %s304 = sand.u32 %s26, 1
        %s305 = scalar_lea.sflag [#allocation9], %s304
        %s306 = sand.u32 %s74, 1
        %s307 = smul.addr %s306, 256
        %s308 = scalar_lea.vmem [#allocation8], %s307
        // Predicated region
        $region45: #{tpu_custom_call.1} parent=39 // pred_check
          %p309 = pneg %p87
        $region46: #{tpu_custom_call.1} parent=39 // pred_check_branch
          %311 = sbr.rel (%p309) target = $region48
        $region47: #{tpu_custom_call.1} parent=39 // pred_region
          %313 = dma.done %s305, 4096
        $region48: #{tpu_custom_call.1} parent=39 // pred_fallthru
          _
        %s314 = sand.u32 %s26, 1
        %s315 = scalar_lea.sflag [#allocation9], %s314
        %s316 = sand.u32 %s100, 1
        %s317 = smul.addr %s316, 512
        %s318 = scalar_lea.vmem [#allocation10], %s317
        // Predicated region
        $region49: #{tpu_custom_call.1} parent=39 // pred_check
          %p319 = pneg %p113
        $region50: #{tpu_custom_call.1} parent=39 // pred_check_branch
          %321 = sbr.rel (%p319) target = $region52
        $region51: #{tpu_custom_call.1} parent=39 // pred_region
          %323 = dma.done %s315, 8192
        $region52: #{tpu_custom_call.1} parent=39 // pred_fallthru
          _
        // Predicated region
        $region53: #{tpu_custom_call.1} parent=39 // pred_check
          %p324 = pneg %p134
        $region54: #{tpu_custom_call.1} parent=39 // pred_check_branch
          %326 = sbr.rel (%p324) target = $region56
        $region55: #{tpu_custom_call.1} parent=39 // pred_region
          %328 = dma.done [#allocation12], 4096
        $region56: #{tpu_custom_call.1} parent=39 // pred_fallthru
          _
        %s329 = sand.u32 %s48, 1
        %s330 = scalar_lea.sflag [#allocation6], %s329
        %s331 = sand.u32 %s48, 1
        %s332 = smul.addr %s331, 512
        %s333 = scalar_lea.vmem [#allocation5], %s332
        %p334 = pneg %p61
        %p335 = pneg %p58
        %s336 = sand.u32 %s26, 1
        %s337 = scalar_lea.sflag [#allocation9], %s336
        %s338 = sand.u32 %s74, 1
        %s339 = smul.addr %s338, 256
        %s340 = scalar_lea.vmem [#allocation8], %s339
        %p341 = pneg %p87
        %p342 = pneg %p84
        %s343 = sand.u32 %s26, 1
        %s344 = scalar_lea.sflag [#allocation9], %s343
        %s345 = sand.u32 %s100, 1
        %s346 = smul.addr %s345, 512
        %s347 = scalar_lea.vmem [#allocation10], %s346
        %p348 = pneg %p113
        %p349 = pneg %p110
        %p350 = pneg %p134
        %p351 = pneg %p131
        %p352 = pneg %p155
        %p353 = pneg %p152
        %p354 = pneg %p181
        %p355 = pneg %p178
        %s356 = sand.u32 %s168, 1
        %s357 = scalar_lea.sflag [#allocation7], %s356
        %s358 = sand.u32 %s168, 1
        %s359 = smul.addr %s358, 256
        %s360 = scalar_lea.vmem [#allocation13], %s359
        %s361 = smul.u32 32, %s30
        %s362 = smul.u32 4, %s31
        %s363 = smul.u32 64, %s31
        %s364 = smul.u32 32, %s30
        %s365 = smul.u32 32, %s30
        %p366 = scmp.eq.s32.totalorder %s31, 0
        // Predicated region
        $region57: #{tpu_custom_call.1} parent=39 // pred_check
          %p367 = pneg %p366
        $region58: #{tpu_custom_call.1} parent=39 // pred_check_branch
          %369 = sbr.rel (%p367) target = $region60
        $region59: #{tpu_custom_call.1} parent=39 // pred_region
          %370 = vst [vmem:[#allocation2] sm:$0xff] 0.0
          %371 = vst [vmem:[#allocation2 + $0x8] sm:$0xff] 0.0
          %372 = vst [vmem:[#allocation2 + $0x10] sm:$0xff] 0.0
          %373 = vst [vmem:[#allocation2 + $0x18] sm:$0xff] 0.0
          %374 = vst [vmem:[#allocation2 + $0x20] sm:$0xff] 0.0
          %375 = vst [vmem:[#allocation2 + $0x28] sm:$0xff] 0.0
          %376 = vst [vmem:[#allocation2 + $0x30] sm:$0xff] 0.0
          %377 = vst [vmem:[#allocation2 + $0x38] sm:$0xff] 0.0
          %378 = vst [vmem:[#allocation2 + $0x40] sm:$0xff] 0.0
          %379 = vst [vmem:[#allocation2 + $0x48] sm:$0xff] 0.0
          %380 = vst [vmem:[#allocation2 + $0x50] sm:$0xff] 0.0
          %381 = vst [vmem:[#allocation2 + $0x58] sm:$0xff] 0.0
          %382 = vst [vmem:[#allocation2 + $0x60] sm:$0xff] 0.0
          %383 = vst [vmem:[#allocation2 + $0x68] sm:$0xff] 0.0
          %384 = vst [vmem:[#allocation2 + $0x70] sm:$0xff] 0.0
          %385 = vst [vmem:[#allocation2 + $0x78] sm:$0xff] 0.0
          %386 = vst [vmem:[#allocation2 + $0x80] sm:$0xff] 0.0
          %387 = vst [vmem:[#allocation2 + $0x88] sm:$0xff] 0.0
          %388 = vst [vmem:[#allocation2 + $0x90] sm:$0xff] 0.0
          %389 = vst [vmem:[#allocation2 + $0x98] sm:$0xff] 0.0
          %390 = vst [vmem:[#allocation2 + $0xa0] sm:$0xff] 0.0
          %391 = vst [vmem:[#allocation2 + $0xa8] sm:$0xff] 0.0
          %392 = vst [vmem:[#allocation2 + $0xb0] sm:$0xff] 0.0
          %393 = vst [vmem:[#allocation2 + $0xb8] sm:$0xff] 0.0
          %394 = vst [vmem:[#allocation2 + $0xc0] sm:$0xff] 0.0
          %395 = vst [vmem:[#allocation2 + $0xc8] sm:$0xff] 0.0
          %396 = vst [vmem:[#allocation2 + $0xd0] sm:$0xff] 0.0
          %397 = vst [vmem:[#allocation2 + $0xd8] sm:$0xff] 0.0
          %398 = vst [vmem:[#allocation2 + $0xe0] sm:$0xff] 0.0
          %399 = vst [vmem:[#allocation2 + $0xe8] sm:$0xff] 0.0
          %400 = vst [vmem:[#allocation2 + $0xf0] sm:$0xff] 0.0
          %401 = vst [vmem:[#allocation2 + $0xf8] sm:$0xff] 0.0
          %vm402 = vcmask 7168
          %403 = vst.msk [vmem:[#allocation4] sm:$0xff] %vm402, 0.0
          %404 = vst.msk [vmem:[#allocation4 + $0x8] sm:$0xff] %vm402, 0.0
          %405 = vst.msk [vmem:[#allocation4 + $0x10] sm:$0xff] %vm402, 0.0
          %406 = vst.msk [vmem:[#allocation4 + $0x18] sm:$0xff] %vm402, 0.0
          %407 = vst.msk [vmem:[#allocation4 + $0x20] sm:$0xff] %vm402, 0.0
          %408 = vst.msk [vmem:[#allocation4 + $0x28] sm:$0xff] %vm402, 0.0
          %409 = vst.msk [vmem:[#allocation4 + $0x30] sm:$0xff] %vm402, 0.0
          %410 = vst.msk [vmem:[#allocation4 + $0x38] sm:$0xff] %vm402, 0.0
          %411 = vst.msk [vmem:[#allocation4 + $0x40] sm:$0xff] %vm402, 0.0
          %412 = vst.msk [vmem:[#allocation4 + $0x48] sm:$0xff] %vm402, 0.0
          %413 = vst.msk [vmem:[#allocation4 + $0x50] sm:$0xff] %vm402, 0.0
          %414 = vst.msk [vmem:[#allocation4 + $0x58] sm:$0xff] %vm402, 0.0
          %415 = vst.msk [vmem:[#allocation4 + $0x60] sm:$0xff] %vm402, 0.0
          %416 = vst.msk [vmem:[#allocation4 + $0x68] sm:$0xff] %vm402, 0.0
          %417 = vst.msk [vmem:[#allocation4 + $0x70] sm:$0xff] %vm402, 0.0
          %418 = vst.msk [vmem:[#allocation4 + $0x78] sm:$0xff] %vm402, 0.0
          %419 = vst.msk [vmem:[#allocation4 + $0x80] sm:$0xff] %vm402, 0.0
          %420 = vst.msk [vmem:[#allocation4 + $0x88] sm:$0xff] %vm402, 0.0
          %421 = vst.msk [vmem:[#allocation4 + $0x90] sm:$0xff] %vm402, 0.0
          %422 = vst.msk [vmem:[#allocation4 + $0x98] sm:$0xff] %vm402, 0.0
          %423 = vst.msk [vmem:[#allocation4 + $0xa0] sm:$0xff] %vm402, 0.0
          %424 = vst.msk [vmem:[#allocation4 + $0xa8] sm:$0xff] %vm402, 0.0
          %425 = vst.msk [vmem:[#allocation4 + $0xb0] sm:$0xff] %vm402, 0.0
          %426 = vst.msk [vmem:[#allocation4 + $0xb8] sm:$0xff] %vm402, 0.0
          %427 = vst.msk [vmem:[#allocation4 + $0xc0] sm:$0xff] %vm402, 0.0
          %428 = vst.msk [vmem:[#allocation4 + $0xc8] sm:$0xff] %vm402, 0.0
          %429 = vst.msk [vmem:[#allocation4 + $0xd0] sm:$0xff] %vm402, 0.0
          %430 = vst.msk [vmem:[#allocation4 + $0xd8] sm:$0xff] %vm402, 0.0
          %431 = vst.msk [vmem:[#allocation4 + $0xe0] sm:$0xff] %vm402, 0.0
          %432 = vst.msk [vmem:[#allocation4 + $0xe8] sm:$0xff] %vm402, 0.0
          %433 = vst.msk [vmem:[#allocation4 + $0xf0] sm:$0xff] %vm402, 0.0
          %434 = vst.msk [vmem:[#allocation4 + $0xf8] sm:$0xff] %vm402, 0.0
          %v435 = vld [vmem:[%s318] sm:$0xff]
          %v436 = vld [vmem:[%s318 + $0x8] sm:$0xff]
          %v437 = vld [vmem:[%s318 + $0x10] sm:$0xff]
          %v438 = vld [vmem:[%s318 + $0x18] sm:$0xff]
          %v439 = vld [vmem:[%s318 + $0x20] sm:$0xff]
          %v440 = vld [vmem:[%s318 + $0x28] sm:$0xff]
          %v441 = vld [vmem:[%s318 + $0x30] sm:$0xff]
          %v442 = vld [vmem:[%s318 + $0x38] sm:$0xff]
          %v443 = vld [vmem:[%s318 + $0x40] sm:$0xff]
          %v444 = vld [vmem:[%s318 + $0x48] sm:$0xff]
          %v445 = vld [vmem:[%s318 + $0x50] sm:$0xff]
          %v446 = vld [vmem:[%s318 + $0x58] sm:$0xff]
          %v447 = vld [vmem:[%s318 + $0x60] sm:$0xff]
          %v448 = vld [vmem:[%s318 + $0x68] sm:$0xff]
          %v449 = vld [vmem:[%s318 + $0x70] sm:$0xff]
          %v450 = vld [vmem:[%s318 + $0x78] sm:$0xff]
          %v451 = vld [vmem:[%s318 + $0x80] sm:$0xff]
          %v452 = vld [vmem:[%s318 + $0x88] sm:$0xff]
          %v453 = vld [vmem:[%s318 + $0x90] sm:$0xff]
          %v454 = vld [vmem:[%s318 + $0x98] sm:$0xff]
          %v455 = vld [vmem:[%s318 + $0xa0] sm:$0xff]
          %v456 = vld [vmem:[%s318 + $0xa8] sm:$0xff]
          %v457 = vld [vmem:[%s318 + $0xb0] sm:$0xff]
          %v458 = vld [vmem:[%s318 + $0xb8] sm:$0xff]
          %v459 = vld [vmem:[%s318 + $0xc0] sm:$0xff]
          %v460 = vld [vmem:[%s318 + $0xc8] sm:$0xff]
          %v461 = vld [vmem:[%s318 + $0xd0] sm:$0xff]
          %v462 = vld [vmem:[%s318 + $0xd8] sm:$0xff]
          %v463 = vld [vmem:[%s318 + $0xe0] sm:$0xff]
          %v464 = vld [vmem:[%s318 + $0xe8] sm:$0xff]
          %v465 = vld [vmem:[%s318 + $0xf0] sm:$0xff]
          %v466 = vld [vmem:[%s318 + $0xf8] sm:$0xff]
          %v467 = vld [vmem:[%s318 + $0x100] sm:$0xff]
          %v468 = vld [vmem:[%s318 + $0x108] sm:$0xff]
          %v469 = vld [vmem:[%s318 + $0x110] sm:$0xff]
          %v470 = vld [vmem:[%s318 + $0x118] sm:$0xff]
          %v471 = vld [vmem:[%s318 + $0x120] sm:$0xff]
          %v472 = vld [vmem:[%s318 + $0x128] sm:$0xff]
          %v473 = vld [vmem:[%s318 + $0x130] sm:$0xff]
          %v474 = vld [vmem:[%s318 + $0x138] sm:$0xff]
          %v475 = vld [vmem:[%s318 + $0x140] sm:$0xff]
          %v476 = vld [vmem:[%s318 + $0x148] sm:$0xff]
          %v477 = vld [vmem:[%s318 + $0x150] sm:$0xff]
          %v478 = vld [vmem:[%s318 + $0x158] sm:$0xff]
          %v479 = vld [vmem:[%s318 + $0x160] sm:$0xff]
          %v480 = vld [vmem:[%s318 + $0x168] sm:$0xff]
          %v481 = vld [vmem:[%s318 + $0x170] sm:$0xff]
          %v482 = vld [vmem:[%s318 + $0x178] sm:$0xff]
          %v483 = vld [vmem:[%s318 + $0x180] sm:$0xff]
          %v484 = vld [vmem:[%s318 + $0x188] sm:$0xff]
          %v485 = vld [vmem:[%s318 + $0x190] sm:$0xff]
          %v486 = vld [vmem:[%s318 + $0x198] sm:$0xff]
          %v487 = vld [vmem:[%s318 + $0x1a0] sm:$0xff]
          %v488 = vld [vmem:[%s318 + $0x1a8] sm:$0xff]
          %v489 = vld [vmem:[%s318 + $0x1b0] sm:$0xff]
          %v490 = vld [vmem:[%s318 + $0x1b8] sm:$0xff]
          %v491 = vld [vmem:[%s318 + $0x1c0] sm:$0xff]
          %v492 = vld [vmem:[%s318 + $0x1c8] sm:$0xff]
          %v493 = vld [vmem:[%s318 + $0x1d0] sm:$0xff]
          %v494 = vld [vmem:[%s318 + $0x1d8] sm:$0xff]
          %v495 = vld [vmem:[%s318 + $0x1e0] sm:$0xff]
          %v496 = vld [vmem:[%s318 + $0x1e8] sm:$0xff]
          %v497 = vld [vmem:[%s318 + $0x1f0] sm:$0xff]
          %v498 = vld [vmem:[%s318 + $0x1f8] sm:$0xff]
          %v499 = vld [vmem:[#allocation11] sm:$0xff]
          %v500 = vld [vmem:[#allocation11 + $0x8] sm:$0xff]
          %v501 = vld [vmem:[#allocation11 + $0x10] sm:$0xff]
          %v502 = vld [vmem:[#allocation11 + $0x18] sm:$0xff]
          %v503 = vld [vmem:[#allocation11 + $0x20] sm:$0xff]
          %v504 = vld [vmem:[#allocation11 + $0x28] sm:$0xff]
          %v505 = vld [vmem:[#allocation11 + $0x30] sm:$0xff]
          %v506 = vld [vmem:[#allocation11 + $0x38] sm:$0xff]
          %v507 = vld [vmem:[#allocation11 + $0x40] sm:$0xff]
          %v508 = vld [vmem:[#allocation11 + $0x48] sm:$0xff]
          %v509 = vld [vmem:[#allocation11 + $0x50] sm:$0xff]
          %v510 = vld [vmem:[#allocation11 + $0x58] sm:$0xff]
          %v511 = vld [vmem:[#allocation11 + $0x60] sm:$0xff]
          %v512 = vld [vmem:[#allocation11 + $0x68] sm:$0xff]
          %v513 = vld [vmem:[#allocation11 + $0x70] sm:$0xff]
          %v514 = vld [vmem:[#allocation11 + $0x78] sm:$0xff]
          %v515 = vld [vmem:[#allocation11 + $0x80] sm:$0xff]
          %v516 = vld [vmem:[#allocation11 + $0x88] sm:$0xff]
          %v517 = vld [vmem:[#allocation11 + $0x90] sm:$0xff]
          %v518 = vld [vmem:[#allocation11 + $0x98] sm:$0xff]
          %v519 = vld [vmem:[#allocation11 + $0xa0] sm:$0xff]
          %v520 = vld [vmem:[#allocation11 + $0xa8] sm:$0xff]
          %v521 = vld [vmem:[#allocation11 + $0xb0] sm:$0xff]
          %v522 = vld [vmem:[#allocation11 + $0xb8] sm:$0xff]
          %v523 = vld [vmem:[#allocation11 + $0xc0] sm:$0xff]
          %v524 = vld [vmem:[#allocation11 + $0xc8] sm:$0xff]
          %v525 = vld [vmem:[#allocation11 + $0xd0] sm:$0xff]
          %v526 = vld [vmem:[#allocation11 + $0xd8] sm:$0xff]
          %v527 = vld [vmem:[#allocation11 + $0xe0] sm:$0xff]
          %v528 = vld [vmem:[#allocation11 + $0xe8] sm:$0xff]
          %v529 = vld [vmem:[#allocation11 + $0xf0] sm:$0xff]
          %v530 = vld [vmem:[#allocation11 + $0xf8] sm:$0xff]
          %v531 = vld [vmem:[%s4] sm:$0x1]
          %v533 = vperm.slane %v531, 0
          %535 = vmatpush.msra.mxu0 %v514
          %536 = vmatpush.msra.mxu0 %v513
          %537 = vmatpush.msra.mxu0 %v512
          %538 = vmatpush.msra.mxu0 %v511
          %539 = vmatpush.msra.mxu0 %v510
          %540 = vmatpush.msra.mxu0 %v509
          %541 = vmatpush.msra.mxu0 %v508
          %542 = vmatpush.msra.mxu0 %v507
          %543 = vmatpush.msra.mxu0 %v506
          %544 = vmatpush.msra.mxu0 %v505
          %545 = vmatpush.msra.mxu0 %v504
          %546 = vmatpush.msra.mxu0 %v503
          %547 = vmatpush.msra.mxu0 %v502
          %548 = vmatpush.msra.mxu0 %v501
          %549 = vmatpush.msra.mxu0 %v500
          %550 = vmatpush.msra.mxu0 %v499
          %551 = vmatmul.f32.gmra.mxu0 %v435
          %v552 = vpop.f32.mrf.mxu0
          %v553 = vadd.f32 %v533, %v552
          %554 = vmatmul.f32.gmra.mxu0 %v437
          %v555 = vpop.f32.mrf.mxu0
          %v556 = vadd.f32 %v533, %v555
          %557 = vmatmul.f32.gmra.mxu0 %v439
          %v558 = vpop.f32.mrf.mxu0
          %v559 = vadd.f32 %v533, %v558
          %560 = vmatmul.f32.gmra.mxu0 %v441
          %v561 = vpop.f32.mrf.mxu0
          %v562 = vadd.f32 %v533, %v561
          %563 = vmatmul.f32.gmra.mxu0 %v443
          %v564 = vpop.f32.mrf.mxu0
          %v565 = vadd.f32 %v533, %v564
          %566 = vmatmul.f32.gmra.mxu0 %v445
          %v567 = vpop.f32.mrf.mxu0
          %v568 = vadd.f32 %v533, %v567
          %569 = vmatmul.f32.gmra.mxu0 %v447
          %v570 = vpop.f32.mrf.mxu0
          %v571 = vadd.f32 %v533, %v570
          %572 = vmatmul.f32.gmra.mxu0 %v449
          %v573 = vpop.f32.mrf.mxu0
          %v574 = vadd.f32 %v533, %v573
          %575 = vmatmul.f32.gmra.mxu0 %v451
          %v576 = vpop.f32.mrf.mxu0
          %v577 = vadd.f32 %v533, %v576
          %578 = vmatmul.f32.gmra.mxu0 %v453
          %v579 = vpop.f32.mrf.mxu0
          %v580 = vadd.f32 %v533, %v579
          %581 = vmatmul.f32.gmra.mxu0 %v455
          %v582 = vpop.f32.mrf.mxu0
          %v583 = vadd.f32 %v533, %v582
          %584 = vmatmul.f32.gmra.mxu0 %v457
          %v585 = vpop.f32.mrf.mxu0
          %v586 = vadd.f32 %v533, %v585
          %587 = vmatmul.f32.gmra.mxu0 %v459
          %v588 = vpop.f32.mrf.mxu0
          %v589 = vadd.f32 %v533, %v588
          %590 = vmatmul.f32.gmra.mxu0 %v461
          %v591 = vpop.f32.mrf.mxu0
          %v592 = vadd.f32 %v533, %v591
          %593 = vmatmul.f32.gmra.mxu0 %v463
          %v594 = vpop.f32.mrf.mxu0
          %v595 = vadd.f32 %v533, %v594
          %596 = vmatmul.f32.gmra.mxu0 %v465
          %v597 = vpop.f32.mrf.mxu0
          %v598 = vadd.f32 %v533, %v597
          %599 = vmatmul.f32.gmra.mxu0 %v467
          %v600 = vpop.f32.mrf.mxu0
          %v601 = vadd.f32 %v533, %v600
          %602 = vmatmul.f32.gmra.mxu0 %v469
          %v603 = vpop.f32.mrf.mxu0
          %v604 = vadd.f32 %v533, %v603
          %605 = vmatmul.f32.gmra.mxu0 %v471
          %v606 = vpop.f32.mrf.mxu0
          %v607 = vadd.f32 %v533, %v606
          %608 = vmatmul.f32.gmra.mxu0 %v473
          %v609 = vpop.f32.mrf.mxu0
          %v610 = vadd.f32 %v533, %v609
          %611 = vmatmul.f32.gmra.mxu0 %v475
          %v612 = vpop.f32.mrf.mxu0
          %v613 = vadd.f32 %v533, %v612
          %614 = vmatmul.f32.gmra.mxu0 %v477
          %v615 = vpop.f32.mrf.mxu0
          %v616 = vadd.f32 %v533, %v615
          %617 = vmatmul.f32.gmra.mxu0 %v479
          %v618 = vpop.f32.mrf.mxu0
          %v619 = vadd.f32 %v533, %v618
          %620 = vmatmul.f32.gmra.mxu0 %v481
          %v621 = vpop.f32.mrf.mxu0
          %v622 = vadd.f32 %v533, %v621
          %623 = vmatmul.f32.gmra.mxu0 %v483
          %v624 = vpop.f32.mrf.mxu0
          %v625 = vadd.f32 %v533, %v624
          %626 = vmatmul.f32.gmra.mxu0 %v485
          %v627 = vpop.f32.mrf.mxu0
          %v628 = vadd.f32 %v533, %v627
          %629 = vmatmul.f32.gmra.mxu0 %v487
          %v630 = vpop.f32.mrf.mxu0
          %v631 = vadd.f32 %v533, %v630
          %632 = vmatmul.f32.gmra.mxu0 %v489
          %v633 = vpop.f32.mrf.mxu0
          %v634 = vadd.f32 %v533, %v633
          %635 = vmatmul.f32.gmra.mxu0 %v491
          %v636 = vpop.f32.mrf.mxu0
          %v637 = vadd.f32 %v533, %v636
          %638 = vmatmul.f32.gmra.mxu0 %v493
          %v639 = vpop.f32.mrf.mxu0
          %v640 = vadd.f32 %v533, %v639
          %641 = vmatmul.f32.gmra.mxu0 %v495
          %v642 = vpop.f32.mrf.mxu0
          %v643 = vadd.f32 %v533, %v642
          %644 = vmatmul.f32.gmra.mxu0 %v497
          %v645 = vpop.f32.mrf.mxu0
          %v646 = vadd.f32 %v533, %v645
          %647 = vdwg.mxu0
          %648 = vmatpush.msra.mxu0 %v530
          %649 = vmatpush.msra.mxu0 %v529
          %650 = vmatpush.msra.mxu0 %v528
          %651 = vmatpush.msra.mxu0 %v527
          %652 = vmatpush.msra.mxu0 %v526
          %653 = vmatpush.msra.mxu0 %v525
          %654 = vmatpush.msra.mxu0 %v524
          %655 = vmatpush.msra.mxu0 %v523
          %656 = vmatpush.msra.mxu0 %v522
          %657 = vmatpush.msra.mxu0 %v521
          %658 = vmatpush.msra.mxu0 %v520
          %659 = vmatpush.msra.mxu0 %v519
          %660 = vmatpush.msra.mxu0 %v518
          %661 = vmatpush.msra.mxu0 %v517
          %662 = vmatpush.msra.mxu0 %v516
          %663 = vmatpush.msra.mxu0 %v515
          %664 = vmatmul.f32.gmra.mxu0 %v436
          %v665 = vpop.f32.mrf.mxu0
          %v666 = vadd.f32 %v553, %v665
          %667 = vmatmul.f32.gmra.mxu0 %v438
          %v668 = vpop.f32.mrf.mxu0
          %v669 = vadd.f32 %v556, %v668
          %670 = vmatmul.f32.gmra.mxu0 %v440
          %v671 = vpop.f32.mrf.mxu0
          %v672 = vadd.f32 %v559, %v671
          %673 = vmatmul.f32.gmra.mxu0 %v442
          %v674 = vpop.f32.mrf.mxu0
          %v675 = vadd.f32 %v562, %v674
          %676 = vmatmul.f32.gmra.mxu0 %v444
          %v677 = vpop.f32.mrf.mxu0
          %v678 = vadd.f32 %v565, %v677
          %679 = vmatmul.f32.gmra.mxu0 %v446
          %v680 = vpop.f32.mrf.mxu0
          %v681 = vadd.f32 %v568, %v680
          %682 = vmatmul.f32.gmra.mxu0 %v448
          %v683 = vpop.f32.mrf.mxu0
          %v684 = vadd.f32 %v571, %v683
          %685 = vmatmul.f32.gmra.mxu0 %v450
          %v686 = vpop.f32.mrf.mxu0
          %v687 = vadd.f32 %v574, %v686
          %688 = vmatmul.f32.gmra.mxu0 %v452
          %v689 = vpop.f32.mrf.mxu0
          %v690 = vadd.f32 %v577, %v689
          %691 = vmatmul.f32.gmra.mxu0 %v454
          %v692 = vpop.f32.mrf.mxu0
          %v693 = vadd.f32 %v580, %v692
          %694 = vmatmul.f32.gmra.mxu0 %v456
          %v695 = vpop.f32.mrf.mxu0
          %v696 = vadd.f32 %v583, %v695
          %697 = vmatmul.f32.gmra.mxu0 %v458
          %v698 = vpop.f32.mrf.mxu0
          %v699 = vadd.f32 %v586, %v698
          %700 = vmatmul.f32.gmra.mxu0 %v460
          %v701 = vpop.f32.mrf.mxu0
          %v702 = vadd.f32 %v589, %v701
          %703 = vmatmul.f32.gmra.mxu0 %v462
          %v704 = vpop.f32.mrf.mxu0
          %v705 = vadd.f32 %v592, %v704
          %706 = vmatmul.f32.gmra.mxu0 %v464
          %v707 = vpop.f32.mrf.mxu0
          %v708 = vadd.f32 %v595, %v707
          %709 = vmatmul.f32.gmra.mxu0 %v466
          %v710 = vpop.f32.mrf.mxu0
          %v711 = vadd.f32 %v598, %v710
          %712 = vmatmul.f32.gmra.mxu0 %v468
          %v713 = vpop.f32.mrf.mxu0
          %v714 = vadd.f32 %v601, %v713
          %715 = vmatmul.f32.gmra.mxu0 %v470
          %v716 = vpop.f32.mrf.mxu0
          %v717 = vadd.f32 %v604, %v716
          %718 = vmatmul.f32.gmra.mxu0 %v472
          %v719 = vpop.f32.mrf.mxu0
          %v720 = vadd.f32 %v607, %v719
          %721 = vmatmul.f32.gmra.mxu0 %v474
          %v722 = vpop.f32.mrf.mxu0
          %v723 = vadd.f32 %v610, %v722
          %724 = vmatmul.f32.gmra.mxu0 %v476
          %v725 = vpop.f32.mrf.mxu0
          %v726 = vadd.f32 %v613, %v725
          %727 = vmatmul.f32.gmra.mxu0 %v478
          %v728 = vpop.f32.mrf.mxu0
          %v729 = vadd.f32 %v616, %v728
          %730 = vmatmul.f32.gmra.mxu0 %v480
          %v731 = vpop.f32.mrf.mxu0
          %v732 = vadd.f32 %v619, %v731
          %733 = vmatmul.f32.gmra.mxu0 %v482
          %v734 = vpop.f32.mrf.mxu0
          %v735 = vadd.f32 %v622, %v734
          %736 = vmatmul.f32.gmra.mxu0 %v484
          %v737 = vpop.f32.mrf.mxu0
          %v738 = vadd.f32 %v625, %v737
          %739 = vmatmul.f32.gmra.mxu0 %v486
          %v740 = vpop.f32.mrf.mxu0
          %v741 = vadd.f32 %v628, %v740
          %742 = vmatmul.f32.gmra.mxu0 %v488
          %v743 = vpop.f32.mrf.mxu0
          %v744 = vadd.f32 %v631, %v743
          %745 = vmatmul.f32.gmra.mxu0 %v490
          %v746 = vpop.f32.mrf.mxu0
          %v747 = vadd.f32 %v634, %v746
          %748 = vmatmul.f32.gmra.mxu0 %v492
          %v749 = vpop.f32.mrf.mxu0
          %v750 = vadd.f32 %v637, %v749
          %751 = vmatmul.f32.gmra.mxu0 %v494
          %v752 = vpop.f32.mrf.mxu0
          %v753 = vadd.f32 %v640, %v752
          %754 = vmatmul.f32.gmra.mxu0 %v496
          %v755 = vpop.f32.mrf.mxu0
          %v756 = vadd.f32 %v643, %v755
          %757 = vmatmul.f32.gmra.mxu0 %v498
          %v758 = vpop.f32.mrf.mxu0
          %v759 = vadd.f32 %v646, %v758
          %760 = vdwg.mxu0
          %761 = vst [vmem:[#allocation3] sm:$0xff] %v666
          %762 = vst [vmem:[#allocation3 + $0x8] sm:$0xff] %v669
          %763 = vst [vmem:[#allocation3 + $0x10] sm:$0xff] %v672
          %764 = vst [vmem:[#allocation3 + $0x18] sm:$0xff] %v675
          %765 = vst [vmem:[#allocation3 + $0x20] sm:$0xff] %v678
          %766 = vst [vmem:[#allocation3 + $0x28] sm:$0xff] %v681
          %767 = vst [vmem:[#allocation3 + $0x30] sm:$0xff] %v684
          %768 = vst [vmem:[#allocation3 + $0x38] sm:$0xff] %v687
          %769 = vst [vmem:[#allocation3 + $0x40] sm:$0xff] %v690
          %770 = vst [vmem:[#allocation3 + $0x48] sm:$0xff] %v693
          %771 = vst [vmem:[#allocation3 + $0x50] sm:$0xff] %v696
          %772 = vst [vmem:[#allocation3 + $0x58] sm:$0xff] %v699
          %773 = vst [vmem:[#allocation3 + $0x60] sm:$0xff] %v702
          %774 = vst [vmem:[#allocation3 + $0x68] sm:$0xff] %v705
          %775 = vst [vmem:[#allocation3 + $0x70] sm:$0xff] %v708
          %776 = vst [vmem:[#allocation3 + $0x78] sm:$0xff] %v711
          %777 = vst [vmem:[#allocation3 + $0x80] sm:$0xff] %v714
          %778 = vst [vmem:[#allocation3 + $0x88] sm:$0xff] %v717
          %779 = vst [vmem:[#allocation3 + $0x90] sm:$0xff] %v720
          %780 = vst [vmem:[#allocation3 + $0x98] sm:$0xff] %v723
          %781 = vst [vmem:[#allocation3 + $0xa0] sm:$0xff] %v726
          %782 = vst [vmem:[#allocation3 + $0xa8] sm:$0xff] %v729
          %783 = vst [vmem:[#allocation3 + $0xb0] sm:$0xff] %v732
          %784 = vst [vmem:[#allocation3 + $0xb8] sm:$0xff] %v735
          %785 = vst [vmem:[#allocation3 + $0xc0] sm:$0xff] %v738
          %786 = vst [vmem:[#allocation3 + $0xc8] sm:$0xff] %v741
          %787 = vst [vmem:[#allocation3 + $0xd0] sm:$0xff] %v744
          %788 = vst [vmem:[#allocation3 + $0xd8] sm:$0xff] %v747
          %789 = vst [vmem:[#allocation3 + $0xe0] sm:$0xff] %v750
          %790 = vst [vmem:[#allocation3 + $0xe8] sm:$0xff] %v753
          %791 = vst [vmem:[#allocation3 + $0xf0] sm:$0xff] %v756
          %792 = vst [vmem:[#allocation3 + $0xf8] sm:$0xff] %v759
        $region60: #{tpu_custom_call.1} parent=39 // pred_fallthru
          _
        %v793 = vld [vmem:[%s298] sm:$0xff]
        %v794 = vld [vmem:[%s298 + $0x8] sm:$0xff]
        %v795 = vld [vmem:[%s298 + $0x10] sm:$0xff]
        %v796 = vld [vmem:[%s298 + $0x18] sm:$0xff]
        %v797 = vld [vmem:[%s298 + $0x20] sm:$0xff]
        %v798 = vld [vmem:[%s298 + $0x28] sm:$0xff]
        %v799 = vld [vmem:[%s298 + $0x30] sm:$0xff]
        %v800 = vld [vmem:[%s298 + $0x38] sm:$0xff]
        %v801 = vld [vmem:[%s298 + $0x40] sm:$0xff]
        %v802 = vld [vmem:[%s298 + $0x48] sm:$0xff]
        %v803 = vld [vmem:[%s298 + $0x50] sm:$0xff]
        %v804 = vld [vmem:[%s298 + $0x58] sm:$0xff]
        %v805 = vld [vmem:[%s298 + $0x60] sm:$0xff]
        %v806 = vld [vmem:[%s298 + $0x68] sm:$0xff]
        %v807 = vld [vmem:[%s298 + $0x70] sm:$0xff]
        %v808 = vld [vmem:[%s298 + $0x78] sm:$0xff]
        %v809 = vld [vmem:[%s298 + $0x80] sm:$0xff]
        %v810 = vld [vmem:[%s298 + $0x88] sm:$0xff]
        %v811 = vld [vmem:[%s298 + $0x90] sm:$0xff]
        %v812 = vld [vmem:[%s298 + $0x98] sm:$0xff]
        %v813 = vld [vmem:[%s298 + $0xa0] sm:$0xff]
        %v814 = vld [vmem:[%s298 + $0xa8] sm:$0xff]
        %v815 = vld [vmem:[%s298 + $0xb0] sm:$0xff]
        %v816 = vld [vmem:[%s298 + $0xb8] sm:$0xff]
        %v817 = vld [vmem:[%s298 + $0xc0] sm:$0xff]
        %v818 = vld [vmem:[%s298 + $0xc8] sm:$0xff]
        %v819 = vld [vmem:[%s298 + $0xd0] sm:$0xff]
        %v820 = vld [vmem:[%s298 + $0xd8] sm:$0xff]
        %v821 = vld [vmem:[%s298 + $0xe0] sm:$0xff]
        %v822 = vld [vmem:[%s298 + $0xe8] sm:$0xff]
        %v823 = vld [vmem:[%s298 + $0xf0] sm:$0xff]
        %v824 = vld [vmem:[%s298 + $0xf8] sm:$0xff]
        %v825 = vld [vmem:[%s298 + $0x100] sm:$0xff]
        %v826 = vld [vmem:[%s298 + $0x108] sm:$0xff]
        %v827 = vld [vmem:[%s298 + $0x110] sm:$0xff]
        %v828 = vld [vmem:[%s298 + $0x118] sm:$0xff]
        %v829 = vld [vmem:[%s298 + $0x120] sm:$0xff]
        %v830 = vld [vmem:[%s298 + $0x128] sm:$0xff]
        %v831 = vld [vmem:[%s298 + $0x130] sm:$0xff]
        %v832 = vld [vmem:[%s298 + $0x138] sm:$0xff]
        %v833 = vld [vmem:[%s298 + $0x140] sm:$0xff]
        %v834 = vld [vmem:[%s298 + $0x148] sm:$0xff]
        %v835 = vld [vmem:[%s298 + $0x150] sm:$0xff]
        %v836 = vld [vmem:[%s298 + $0x158] sm:$0xff]
        %v837 = vld [vmem:[%s298 + $0x160] sm:$0xff]
        %v838 = vld [vmem:[%s298 + $0x168] sm:$0xff]
        %v839 = vld [vmem:[%s298 + $0x170] sm:$0xff]
        %v840 = vld [vmem:[%s298 + $0x178] sm:$0xff]
        %v841 = vld [vmem:[%s298 + $0x180] sm:$0xff]
        %v842 = vld [vmem:[%s298 + $0x188] sm:$0xff]
        %v843 = vld [vmem:[%s298 + $0x190] sm:$0xff]
        %v844 = vld [vmem:[%s298 + $0x198] sm:$0xff]
        %v845 = vld [vmem:[%s298 + $0x1a0] sm:$0xff]
        %v846 = vld [vmem:[%s298 + $0x1a8] sm:$0xff]
        %v847 = vld [vmem:[%s298 + $0x1b0] sm:$0xff]
        %v848 = vld [vmem:[%s298 + $0x1b8] sm:$0xff]
        %v849 = vld [vmem:[%s298 + $0x1c0] sm:$0xff]
        %v850 = vld [vmem:[%s298 + $0x1c8] sm:$0xff]
        %v851 = vld [vmem:[%s298 + $0x1d0] sm:$0xff]
        %v852 = vld [vmem:[%s298 + $0x1d8] sm:$0xff]
        %v853 = vld [vmem:[%s298 + $0x1e0] sm:$0xff]
        %v854 = vld [vmem:[%s298 + $0x1e8] sm:$0xff]
        %v855 = vld [vmem:[%s298 + $0x1f0] sm:$0xff]
        %v856 = vld [vmem:[%s298 + $0x1f8] sm:$0xff]
        %v857 = vld [vmem:[#allocation2] sm:$0xff]
        %v858 = vld [vmem:[#allocation2 + $0x8] sm:$0xff]
        %v859 = vld [vmem:[#allocation2 + $0x10] sm:$0xff]
        %v860 = vld [vmem:[#allocation2 + $0x18] sm:$0xff]
        %v861 = vld [vmem:[#allocation2 + $0x20] sm:$0xff]
        %v862 = vld [vmem:[#allocation2 + $0x28] sm:$0xff]
        %v863 = vld [vmem:[#allocation2 + $0x30] sm:$0xff]
        %v864 = vld [vmem:[#allocation2 + $0x38] sm:$0xff]
        %v865 = vld [vmem:[#allocation2 + $0x40] sm:$0xff]
        %v866 = vld [vmem:[#allocation2 + $0x48] sm:$0xff]
        %v867 = vld [vmem:[#allocation2 + $0x50] sm:$0xff]
        %v868 = vld [vmem:[#allocation2 + $0x58] sm:$0xff]
        %v869 = vld [vmem:[#allocation2 + $0x60] sm:$0xff]
        %v870 = vld [vmem:[#allocation2 + $0x68] sm:$0xff]
        %v871 = vld [vmem:[#allocation2 + $0x70] sm:$0xff]
        %v872 = vld [vmem:[#allocation2 + $0x78] sm:$0xff]
        %v873 = vld [vmem:[#allocation2 + $0x80] sm:$0xff]
        %v874 = vld [vmem:[#allocation2 + $0x88] sm:$0xff]
        %v875 = vld [vmem:[#allocation2 + $0x90] sm:$0xff]
        %v876 = vld [vmem:[#allocation2 + $0x98] sm:$0xff]
        %v877 = vld [vmem:[#allocation2 + $0xa0] sm:$0xff]
        %v878 = vld [vmem:[#allocation2 + $0xa8] sm:$0xff]
        %v879 = vld [vmem:[#allocation2 + $0xb0] sm:$0xff]
        %v880 = vld [vmem:[#allocation2 + $0xb8] sm:$0xff]
        %v881 = vld [vmem:[#allocation2 + $0xc0] sm:$0xff]
        %v882 = vld [vmem:[#allocation2 + $0xc8] sm:$0xff]
        %v883 = vld [vmem:[#allocation2 + $0xd0] sm:$0xff]
        %v884 = vld [vmem:[#allocation2 + $0xd8] sm:$0xff]
        %v885 = vld [vmem:[#allocation2 + $0xe0] sm:$0xff]
        %v886 = vld [vmem:[#allocation2 + $0xe8] sm:$0xff]
        %v887 = vld [vmem:[#allocation2 + $0xf0] sm:$0xff]
        %v888 = vld [vmem:[#allocation2 + $0xf8] sm:$0xff]
        %v889 = vld [vmem:[%s308] sm:$0xf]
        %v890 = vld [vmem:[%s308 + $0x4] sm:$0xf]
        %v891 = vld [vmem:[%s308 + $0x8] sm:$0xf]
        %v892 = vld [vmem:[%s308 + $0xc] sm:$0xf]
        %v893 = vld [vmem:[%s308 + $0x10] sm:$0xf]
        %v894 = vld [vmem:[%s308 + $0x14] sm:$0xf]
        %v895 = vld [vmem:[%s308 + $0x18] sm:$0xf]
        %v896 = vld [vmem:[%s308 + $0x1c] sm:$0xf]
        %v897 = vld [vmem:[%s308 + $0x20] sm:$0xf]
        %v898 = vld [vmem:[%s308 + $0x24] sm:$0xf]
        %v899 = vld [vmem:[%s308 + $0x28] sm:$0xf]
        %v900 = vld [vmem:[%s308 + $0x2c] sm:$0xf]
        %v901 = vld [vmem:[%s308 + $0x30] sm:$0xf]
        %v902 = vld [vmem:[%s308 + $0x34] sm:$0xf]
        %v903 = vld [vmem:[%s308 + $0x38] sm:$0xf]
        %v904 = vld [vmem:[%s308 + $0x3c] sm:$0xf]
        %v905 = vld [vmem:[%s308 + $0x40] sm:$0xf]
        %v906 = vld [vmem:[%s308 + $0x44] sm:$0xf]
        %v907 = vld [vmem:[%s308 + $0x48] sm:$0xf]
        %v908 = vld [vmem:[%s308 + $0x4c] sm:$0xf]
        %v909 = vld [vmem:[%s308 + $0x50] sm:$0xf]
        %v910 = vld [vmem:[%s308 + $0x54] sm:$0xf]
        %v911 = vld [vmem:[%s308 + $0x58] sm:$0xf]
        %v912 = vld [vmem:[%s308 + $0x5c] sm:$0xf]
        %v913 = vld [vmem:[%s308 + $0x60] sm:$0xf]
        %v914 = vld [vmem:[%s308 + $0x64] sm:$0xf]
        %v915 = vld [vmem:[%s308 + $0x68] sm:$0xf]
        %v916 = vld [vmem:[%s308 + $0x6c] sm:$0xf]
        %v917 = vld [vmem:[%s308 + $0x70] sm:$0xf]
        %v918 = vld [vmem:[%s308 + $0x74] sm:$0xf]
        %v919 = vld [vmem:[%s308 + $0x78] sm:$0xf]
        %v920 = vld [vmem:[%s308 + $0x7c] sm:$0xf]
        %v921 = vld [vmem:[%s308 + $0x80] sm:$0xf]
        %v922 = vld [vmem:[%s308 + $0x84] sm:$0xf]
        %v923 = vld [vmem:[%s308 + $0x88] sm:$0xf]
        %v924 = vld [vmem:[%s308 + $0x8c] sm:$0xf]
        %v925 = vld [vmem:[%s308 + $0x90] sm:$0xf]
        %v926 = vld [vmem:[%s308 + $0x94] sm:$0xf]
        %v927 = vld [vmem:[%s308 + $0x98] sm:$0xf]
        %v928 = vld [vmem:[%s308 + $0x9c] sm:$0xf]
        %v929 = vld [vmem:[%s308 + $0xa0] sm:$0xf]
        %v930 = vld [vmem:[%s308 + $0xa4] sm:$0xf]
        %v931 = vld [vmem:[%s308 + $0xa8] sm:$0xf]
        %v932 = vld [vmem:[%s308 + $0xac] sm:$0xf]
        %v933 = vld [vmem:[%s308 + $0xb0] sm:$0xf]
        %v934 = vld [vmem:[%s308 + $0xb4] sm:$0xf]
        %v935 = vld [vmem:[%s308 + $0xb8] sm:$0xf]
        %v936 = vld [vmem:[%s308 + $0xbc] sm:$0xf]
        %v937 = vld [vmem:[%s308 + $0xc0] sm:$0xf]
        %v938 = vld [vmem:[%s308 + $0xc4] sm:$0xf]
        %v939 = vld [vmem:[%s308 + $0xc8] sm:$0xf]
        %v940 = vld [vmem:[%s308 + $0xcc] sm:$0xf]
        %v941 = vld [vmem:[%s308 + $0xd0] sm:$0xf]
        %v942 = vld [vmem:[%s308 + $0xd4] sm:$0xf]
        %v943 = vld [vmem:[%s308 + $0xd8] sm:$0xf]
        %v944 = vld [vmem:[%s308 + $0xdc] sm:$0xf]
        %v945 = vld [vmem:[%s308 + $0xe0] sm:$0xf]
        %v946 = vld [vmem:[%s308 + $0xe4] sm:$0xf]
        %v947 = vld [vmem:[%s308 + $0xe8] sm:$0xf]
        %v948 = vld [vmem:[%s308 + $0xec] sm:$0xf]
        %v949 = vld [vmem:[%s308 + $0xf0] sm:$0xf]
        %v950 = vld [vmem:[%s308 + $0xf4] sm:$0xf]
        %v951 = vld [vmem:[%s308 + $0xf8] sm:$0xf]
        %v952 = vld [vmem:[%s308 + $0xfc] sm:$0xf]
        %v1017 = vunpack.c.l.b16 %v793
        %v1018 = vunpack.c.h.b16 %v793
        %v1019 = vunpack.c.l.b16 %v794
        %v1020 = vunpack.c.h.b16 %v794
        %v1021 = vunpack.c.l.b16 %v795
        %v1022 = vunpack.c.h.b16 %v795
        %v1023 = vunpack.c.l.b16 %v796
        %v1024 = vunpack.c.h.b16 %v796
        %v1025 = vunpack.c.l.b16 %v797
        %v1026 = vunpack.c.h.b16 %v797
        %v1027 = vunpack.c.l.b16 %v798
        %v1028 = vunpack.c.h.b16 %v798
        %v1029 = vunpack.c.l.b16 %v799
        %v1030 = vunpack.c.h.b16 %v799
        %v1031 = vunpack.c.l.b16 %v800
        %v1032 = vunpack.c.h.b16 %v800
        %v1033 = vunpack.c.l.b16 %v801
        %v1034 = vunpack.c.h.b16 %v801
        %v1035 = vunpack.c.l.b16 %v802
        %v1036 = vunpack.c.h.b16 %v802
        %v1037 = vunpack.c.l.b16 %v803
        %v1038 = vunpack.c.h.b16 %v803
        %v1039 = vunpack.c.l.b16 %v804
        %v1040 = vunpack.c.h.b16 %v804
        %v1041 = vunpack.c.l.b16 %v805
        %v1042 = vunpack.c.h.b16 %v805
        %v1043 = vunpack.c.l.b16 %v806
        %v1044 = vunpack.c.h.b16 %v806
        %v1045 = vunpack.c.l.b16 %v807
        %v1046 = vunpack.c.h.b16 %v807
        %v1047 = vunpack.c.l.b16 %v808
        %v1048 = vunpack.c.h.b16 %v808
        %v1049 = vunpack.c.l.b16 %v809
        %v1050 = vunpack.c.h.b16 %v809
        %v1051 = vunpack.c.l.b16 %v810
        %v1052 = vunpack.c.h.b16 %v810
        %v1053 = vunpack.c.l.b16 %v811
        %v1054 = vunpack.c.h.b16 %v811
        %v1055 = vunpack.c.l.b16 %v812
        %v1056 = vunpack.c.h.b16 %v812
        %v1057 = vunpack.c.l.b16 %v813
        %v1058 = vunpack.c.h.b16 %v813
        %v1059 = vunpack.c.l.b16 %v814
        %v1060 = vunpack.c.h.b16 %v814
        %v1061 = vunpack.c.l.b16 %v815
        %v1062 = vunpack.c.h.b16 %v815
        %v1063 = vunpack.c.l.b16 %v816
        %v1064 = vunpack.c.h.b16 %v816
        %v1065 = vunpack.c.l.b16 %v817
        %v1066 = vunpack.c.h.b16 %v817
        %v1067 = vunpack.c.l.b16 %v818
        %v1068 = vunpack.c.h.b16 %v818
        %v1069 = vunpack.c.l.b16 %v819
        %v1070 = vunpack.c.h.b16 %v819
        %v1071 = vunpack.c.l.b16 %v820
        %v1072 = vunpack.c.h.b16 %v820
        %v1073 = vunpack.c.l.b16 %v821
        %v1074 = vunpack.c.h.b16 %v821
        %v1075 = vunpack.c.l.b16 %v822
        %v1076 = vunpack.c.h.b16 %v822
        %v1077 = vunpack.c.l.b16 %v823
        %v1078 = vunpack.c.h.b16 %v823
        %v1079 = vunpack.c.l.b16 %v824
        %v1080 = vunpack.c.h.b16 %v824
        %v1081 = vunpack.c.l.b16 %v825
        %v1082 = vunpack.c.h.b16 %v825
        %v1083 = vunpack.c.l.b16 %v826
        %v1084 = vunpack.c.h.b16 %v826
        %v1085 = vunpack.c.l.b16 %v827
        %v1086 = vunpack.c.h.b16 %v827
        %v1087 = vunpack.c.l.b16 %v828
        %v1088 = vunpack.c.h.b16 %v828
        %v1089 = vunpack.c.l.b16 %v829
        %v1090 = vunpack.c.h.b16 %v829
        %v1091 = vunpack.c.l.b16 %v830
        %v1092 = vunpack.c.h.b16 %v830
        %v1093 = vunpack.c.l.b16 %v831
        %v1094 = vunpack.c.h.b16 %v831
        %v1095 = vunpack.c.l.b16 %v832
        %v1096 = vunpack.c.h.b16 %v832
        %v1097 = vunpack.c.l.b16 %v833
        %v1098 = vunpack.c.h.b16 %v833
        %v1099 = vunpack.c.l.b16 %v834
        %v1100 = vunpack.c.h.b16 %v834
        %v1101 = vunpack.c.l.b16 %v835
        %v1102 = vunpack.c.h.b16 %v835
        %v1103 = vunpack.c.l.b16 %v836
        %v1104 = vunpack.c.h.b16 %v836
        %v1105 = vunpack.c.l.b16 %v837
        %v1106 = vunpack.c.h.b16 %v837
        %v1107 = vunpack.c.l.b16 %v838
        %v1108 = vunpack.c.h.b16 %v838
        %v1109 = vunpack.c.l.b16 %v839
        %v1110 = vunpack.c.h.b16 %v839
        %v1111 = vunpack.c.l.b16 %v840
        %v1112 = vunpack.c.h.b16 %v840
        %v1113 = vunpack.c.l.b16 %v841
        %v1114 = vunpack.c.h.b16 %v841
        %v1115 = vunpack.c.l.b16 %v842
        %v1116 = vunpack.c.h.b16 %v842
        %v1117 = vunpack.c.l.b16 %v843
        %v1118 = vunpack.c.h.b16 %v843
        %v1119 = vunpack.c.l.b16 %v844
        %v1120 = vunpack.c.h.b16 %v844
        %v1121 = vunpack.c.l.b16 %v845
        %v1122 = vunpack.c.h.b16 %v845
        %v1123 = vunpack.c.l.b16 %v846
        %v1124 = vunpack.c.h.b16 %v846
        %v1125 = vunpack.c.l.b16 %v847
        %v1126 = vunpack.c.h.b16 %v847
        %v1127 = vunpack.c.l.b16 %v848
        %v1128 = vunpack.c.h.b16 %v848
        %v1129 = vunpack.c.l.b16 %v849
        %v1130 = vunpack.c.h.b16 %v849
        %v1131 = vunpack.c.l.b16 %v850
        %v1132 = vunpack.c.h.b16 %v850
        %v1133 = vunpack.c.l.b16 %v851
        %v1134 = vunpack.c.h.b16 %v851
        %v1135 = vunpack.c.l.b16 %v852
        %v1136 = vunpack.c.h.b16 %v852
        %v1137 = vunpack.c.l.b16 %v853
        %v1138 = vunpack.c.h.b16 %v853
        %v1139 = vunpack.c.l.b16 %v854
        %v1140 = vunpack.c.h.b16 %v854
        %v1141 = vunpack.c.l.b16 %v855
        %v1142 = vunpack.c.h.b16 %v855
        %v1143 = vunpack.c.l.b16 %v856
        %v1144 = vunpack.c.h.b16 %v856
        %v1145 = vpack.c.b16 %v1021, %v1017
        %v1146 = vpack.c.b16 %v1022, %v1018
        %v1147 = vpack.c.b16 %v1023, %v1019
        %v1148 = vpack.c.b16 %v1024, %v1020
        %v1149 = vpack.c.b16 %v1029, %v1025
        %v1150 = vpack.c.b16 %v1030, %v1026
        %v1151 = vpack.c.b16 %v1031, %v1027
        %v1152 = vpack.c.b16 %v1032, %v1028
        %v1153 = vpack.c.b16 %v1037, %v1033
        %v1154 = vpack.c.b16 %v1038, %v1034
        %v1155 = vpack.c.b16 %v1039, %v1035
        %v1156 = vpack.c.b16 %v1040, %v1036
        %v1157 = vpack.c.b16 %v1045, %v1041
        %v1158 = vpack.c.b16 %v1046, %v1042
        %v1159 = vpack.c.b16 %v1047, %v1043
        %v1160 = vpack.c.b16 %v1048, %v1044
        %v1161 = vpack.c.b16 %v1053, %v1049
        %v1162 = vpack.c.b16 %v1054, %v1050
        %v1163 = vpack.c.b16 %v1055, %v1051
        %v1164 = vpack.c.b16 %v1056, %v1052
        %v1165 = vpack.c.b16 %v1061, %v1057
        %v1166 = vpack.c.b16 %v1062, %v1058
        %v1167 = vpack.c.b16 %v1063, %v1059
        %v1168 = vpack.c.b16 %v1064, %v1060
        %v1169 = vpack.c.b16 %v1069, %v1065
        %v1170 = vpack.c.b16 %v1070, %v1066
        %v1171 = vpack.c.b16 %v1071, %v1067
        %v1172 = vpack.c.b16 %v1072, %v1068
        %v1173 = vpack.c.b16 %v1077, %v1073
        %v1174 = vpack.c.b16 %v1078, %v1074
        %v1175 = vpack.c.b16 %v1079, %v1075
        %v1176 = vpack.c.b16 %v1080, %v1076
        %v1177 = vpack.c.b16 %v1085, %v1081
        %v1178 = vpack.c.b16 %v1086, %v1082
        %v1179 = vpack.c.b16 %v1087, %v1083
        %v1180 = vpack.c.b16 %v1088, %v1084
        %v1181 = vpack.c.b16 %v1093, %v1089
        %v1182 = vpack.c.b16 %v1094, %v1090
        %v1183 = vpack.c.b16 %v1095, %v1091
        %v1184 = vpack.c.b16 %v1096, %v1092
        %v1185 = vpack.c.b16 %v1101, %v1097
        %v1186 = vpack.c.b16 %v1102, %v1098
        %v1187 = vpack.c.b16 %v1103, %v1099
        %v1188 = vpack.c.b16 %v1104, %v1100
        %v1189 = vpack.c.b16 %v1109, %v1105
        %v1190 = vpack.c.b16 %v1110, %v1106
        %v1191 = vpack.c.b16 %v1111, %v1107
        %v1192 = vpack.c.b16 %v1112, %v1108
        %v1193 = vpack.c.b16 %v1117, %v1113
        %v1194 = vpack.c.b16 %v1118, %v1114
        %v1195 = vpack.c.b16 %v1119, %v1115
        %v1196 = vpack.c.b16 %v1120, %v1116
        %v1197 = vpack.c.b16 %v1125, %v1121
        %v1198 = vpack.c.b16 %v1126, %v1122
        %v1199 = vpack.c.b16 %v1127, %v1123
        %v1200 = vpack.c.b16 %v1128, %v1124
        %v1201 = vpack.c.b16 %v1133, %v1129
        %v1202 = vpack.c.b16 %v1134, %v1130
        %v1203 = vpack.c.b16 %v1135, %v1131
        %v1204 = vpack.c.b16 %v1136, %v1132
        %v1205 = vpack.c.b16 %v1141, %v1137
        %v1206 = vpack.c.b16 %v1142, %v1138
        %v1207 = vpack.c.b16 %v1143, %v1139
        %v1208 = vpack.c.b16 %v1144, %v1140
        %v1337 = vunpack.c.l.b16 %v889
        %v1338 = vunpack.c.l.b16 %v890
        %v1339 = vunpack.c.l.b16 %v891
        %v1340 = vunpack.c.l.b16 %v892
        %v1341 = vunpack.c.l.b16 %v893
        %v1342 = vunpack.c.l.b16 %v894
        %v1343 = vunpack.c.l.b16 %v895
        %v1344 = vunpack.c.l.b16 %v896
        %v1345 = vunpack.c.l.b16 %v897
        %v1346 = vunpack.c.l.b16 %v898
        %v1347 = vunpack.c.l.b16 %v899
        %v1348 = vunpack.c.l.b16 %v900
        %v1349 = vunpack.c.l.b16 %v901
        %v1350 = vunpack.c.l.b16 %v902
        %v1351 = vunpack.c.l.b16 %v903
        %v1352 = vunpack.c.l.b16 %v904
        %v1353 = vunpack.c.l.b16 %v905
        %v1354 = vunpack.c.l.b16 %v906
        %v1355 = vunpack.c.l.b16 %v907
        %v1356 = vunpack.c.l.b16 %v908
        %v1357 = vunpack.c.l.b16 %v909
        %v1358 = vunpack.c.l.b16 %v910
        %v1359 = vunpack.c.l.b16 %v911
        %v1360 = vunpack.c.l.b16 %v912
        %v1361 = vunpack.c.l.b16 %v913
        %v1362 = vunpack.c.l.b16 %v914
        %v1363 = vunpack.c.l.b16 %v915
        %v1364 = vunpack.c.l.b16 %v916
        %v1365 = vunpack.c.l.b16 %v917
        %v1366 = vunpack.c.l.b16 %v918
        %v1367 = vunpack.c.l.b16 %v919
        %v1368 = vunpack.c.l.b16 %v920
        %v1369 = vunpack.c.l.b16 %v921
        %v1370 = vunpack.c.l.b16 %v922
        %v1371 = vunpack.c.l.b16 %v923
        %v1372 = vunpack.c.l.b16 %v924
        %v1373 = vunpack.c.l.b16 %v925
        %v1374 = vunpack.c.l.b16 %v926
        %v1375 = vunpack.c.l.b16 %v927
        %v1376 = vunpack.c.l.b16 %v928
        %v1377 = vunpack.c.l.b16 %v929
        %v1378 = vunpack.c.l.b16 %v930
        %v1379 = vunpack.c.l.b16 %v931
        %v1380 = vunpack.c.l.b16 %v932
        %v1381 = vunpack.c.l.b16 %v933
        %v1382 = vunpack.c.l.b16 %v934
        %v1383 = vunpack.c.l.b16 %v935
        %v1384 = vunpack.c.l.b16 %v936
        %v1385 = vunpack.c.l.b16 %v937
        %v1386 = vunpack.c.l.b16 %v938
        %v1387 = vunpack.c.l.b16 %v939
        %v1388 = vunpack.c.l.b16 %v940
        %v1389 = vunpack.c.l.b16 %v941
        %v1390 = vunpack.c.l.b16 %v942
        %v1391 = vunpack.c.l.b16 %v943
        %v1392 = vunpack.c.l.b16 %v944
        %v1393 = vunpack.c.l.b16 %v945
        %v1394 = vunpack.c.l.b16 %v946
        %v1395 = vunpack.c.l.b16 %v947
        %v1396 = vunpack.c.l.b16 %v948
        %v1397 = vunpack.c.l.b16 %v949
        %v1398 = vunpack.c.l.b16 %v950
        %v1399 = vunpack.c.l.b16 %v951
        %v1400 = vunpack.c.l.b16 %v952
        %v1401 = vpack.c.b16 %v1338, %v1337
        %v1402 = vpack.c.b16 %v1340, %v1339
        %v1403 = vpack.c.b16 %v1342, %v1341
        %v1404 = vpack.c.b16 %v1344, %v1343
        %v1405 = vpack.c.b16 %v1346, %v1345
        %v1406 = vpack.c.b16 %v1348, %v1347
        %v1407 = vpack.c.b16 %v1350, %v1349
        %v1408 = vpack.c.b16 %v1352, %v1351
        %v1409 = vpack.c.b16 %v1354, %v1353
        %v1410 = vpack.c.b16 %v1356, %v1355
        %v1411 = vpack.c.b16 %v1358, %v1357
        %v1412 = vpack.c.b16 %v1360, %v1359
        %v1413 = vpack.c.b16 %v1362, %v1361
        %v1414 = vpack.c.b16 %v1364, %v1363
        %v1415 = vpack.c.b16 %v1366, %v1365
        %v1416 = vpack.c.b16 %v1368, %v1367
        %v1417 = vpack.c.b16 %v1370, %v1369
        %v1418 = vpack.c.b16 %v1372, %v1371
        %v1419 = vpack.c.b16 %v1374, %v1373
        %v1420 = vpack.c.b16 %v1376, %v1375
        %v1421 = vpack.c.b16 %v1378, %v1377
        %v1422 = vpack.c.b16 %v1380, %v1379
        %v1423 = vpack.c.b16 %v1382, %v1381
        %v1424 = vpack.c.b16 %v1384, %v1383
        %v1425 = vpack.c.b16 %v1386, %v1385
        %v1426 = vpack.c.b16 %v1388, %v1387
        %v1427 = vpack.c.b16 %v1390, %v1389
        %v1428 = vpack.c.b16 %v1392, %v1391
        %v1429 = vpack.c.b16 %v1394, %v1393
        %v1430 = vpack.c.b16 %v1396, %v1395
        %v1431 = vpack.c.b16 %v1398, %v1397
        %v1432 = vpack.c.b16 %v1400, %v1399
        %1465 = vmatpush.bf16.msra.mxu0 %v1408
        %1466 = vmatpush.bf16.msra.mxu0 %v1407
        %1467 = vmatpush.bf16.msra.mxu0 %v1406
        %1468 = vmatpush.bf16.msra.mxu0 %v1405
        %1469 = vmatpush.bf16.msra.mxu0 %v1404
        %1470 = vmatpush.bf16.msra.mxu0 %v1403
        %1471 = vmatpush.bf16.msra.mxu0 %v1402
        %1472 = vmatpush.bf16.msra.mxu0 %v1401
        %1473 = vmatmul.bf16.gmra.mxu0 %v1145
        %v1474 = vpop.f32.mrf.mxu0
        %v1475 = vadd.f32 0.0, %v1474
        %v1476 = vpop.f32.mrf.mxu0
        %v1477 = vadd.f32 0.0, %v1476
        %1478 = vmatmul.bf16.gmra.mxu0 %v1149
        %v1479 = vpop.f32.mrf.mxu0
        %v1480 = vadd.f32 0.0, %v1479
        %v1481 = vpop.f32.mrf.mxu0
        %v1482 = vadd.f32 0.0, %v1481
        %1483 = vmatmul.bf16.gmra.mxu0 %v1153
        %v1484 = vpop.f32.mrf.mxu0
        %v1485 = vadd.f32 0.0, %v1484
        %v1486 = vpop.f32.mrf.mxu0
        %v1487 = vadd.f32 0.0, %v1486
        %1488 = vmatmul.bf16.gmra.mxu0 %v1157
        %v1489 = vpop.f32.mrf.mxu0
        %v1490 = vadd.f32 0.0, %v1489
        %v1491 = vpop.f32.mrf.mxu0
        %v1492 = vadd.f32 0.0, %v1491
        %1493 = vmatmul.bf16.gmra.mxu0 %v1161
        %v1494 = vpop.f32.mrf.mxu0
        %v1495 = vadd.f32 0.0, %v1494
        %v1496 = vpop.f32.mrf.mxu0
        %v1497 = vadd.f32 0.0, %v1496
        %1498 = vmatmul.bf16.gmra.mxu0 %v1165
        %v1499 = vpop.f32.mrf.mxu0
        %v1500 = vadd.f32 0.0, %v1499
        %v1501 = vpop.f32.mrf.mxu0
        %v1502 = vadd.f32 0.0, %v1501
        %1503 = vmatmul.bf16.gmra.mxu0 %v1169
        %v1504 = vpop.f32.mrf.mxu0
        %v1505 = vadd.f32 0.0, %v1504
        %v1506 = vpop.f32.mrf.mxu0
        %v1507 = vadd.f32 0.0, %v1506
        %1508 = vmatmul.bf16.gmra.mxu0 %v1173
        %v1509 = vpop.f32.mrf.mxu0
        %v1510 = vadd.f32 0.0, %v1509
        %v1511 = vpop.f32.mrf.mxu0
        %v1512 = vadd.f32 0.0, %v1511
        %1513 = vmatmul.bf16.gmra.mxu0 %v1177
        %v1514 = vpop.f32.mrf.mxu0
        %v1515 = vadd.f32 0.0, %v1514
        %v1516 = vpop.f32.mrf.mxu0
        %v1517 = vadd.f32 0.0, %v1516
        %1518 = vmatmul.bf16.gmra.mxu0 %v1181
        %v1519 = vpop.f32.mrf.mxu0
        %v1520 = vadd.f32 0.0, %v1519
        %v1521 = vpop.f32.mrf.mxu0
        %v1522 = vadd.f32 0.0, %v1521
        %1523 = vmatmul.bf16.gmra.mxu0 %v1185
        %v1524 = vpop.f32.mrf.mxu0
        %v1525 = vadd.f32 0.0, %v1524
        %v1526 = vpop.f32.mrf.mxu0
        %v1527 = vadd.f32 0.0, %v1526
        %1528 = vmatmul.bf16.gmra.mxu0 %v1189
        %v1529 = vpop.f32.mrf.mxu0
        %v1530 = vadd.f32 0.0, %v1529
        %v1531 = vpop.f32.mrf.mxu0
        %v1532 = vadd.f32 0.0, %v1531
        %1533 = vmatmul.bf16.gmra.mxu0 %v1193
        %v1534 = vpop.f32.mrf.mxu0
        %v1535 = vadd.f32 0.0, %v1534
        %v1536 = vpop.f32.mrf.mxu0
        %v1537 = vadd.f32 0.0, %v1536
        %1538 = vmatmul.bf16.gmra.mxu0 %v1197
        %v1539 = vpop.f32.mrf.mxu0
        %v1540 = vadd.f32 0.0, %v1539
        %v1541 = vpop.f32.mrf.mxu0
        %v1542 = vadd.f32 0.0, %v1541
        %1543 = vmatmul.bf16.gmra.mxu0 %v1201
        %v1544 = vpop.f32.mrf.mxu0
        %v1545 = vadd.f32 0.0, %v1544
        %v1546 = vpop.f32.mrf.mxu0
        %v1547 = vadd.f32 0.0, %v1546
        %1548 = vmatmul.bf16.gmra.mxu0 %v1205
        %v1549 = vpop.f32.mrf.mxu0
        %v1550 = vadd.f32 0.0, %v1549
        %v1551 = vpop.f32.mrf.mxu0
        %v1552 = vadd.f32 0.0, %v1551
        %1553 = vdwg.mxu0
        %1554 = vmatpush.bf16.msra.mxu0 %v1416
        %1555 = vmatpush.bf16.msra.mxu0 %v1415
        %1556 = vmatpush.bf16.msra.mxu0 %v1414
        %1557 = vmatpush.bf16.msra.mxu0 %v1413
        %1558 = vmatpush.bf16.msra.mxu0 %v1412
        %1559 = vmatpush.bf16.msra.mxu0 %v1411
        %1560 = vmatpush.bf16.msra.mxu0 %v1410
        %1561 = vmatpush.bf16.msra.mxu0 %v1409
        %1562 = vmatmul.bf16.gmra.mxu0 %v1146
        %v1563 = vpop.f32.mrf.mxu0
        %v1564 = vadd.f32 %v1475, %v1563
        %v1565 = vpop.f32.mrf.mxu0
        %v1566 = vadd.f32 %v1477, %v1565
        %1567 = vmatmul.bf16.gmra.mxu0 %v1150
        %v1568 = vpop.f32.mrf.mxu0
        %v1569 = vadd.f32 %v1480, %v1568
        %v1570 = vpop.f32.mrf.mxu0
        %v1571 = vadd.f32 %v1482, %v1570
        %1572 = vmatmul.bf16.gmra.mxu0 %v1154
        %v1573 = vpop.f32.mrf.mxu0
        %v1574 = vadd.f32 %v1485, %v1573
        %v1575 = vpop.f32.mrf.mxu0
        %v1576 = vadd.f32 %v1487, %v1575
        %1577 = vmatmul.bf16.gmra.mxu0 %v1158
        %v1578 = vpop.f32.mrf.mxu0
        %v1579 = vadd.f32 %v1490, %v1578
        %v1580 = vpop.f32.mrf.mxu0
        %v1581 = vadd.f32 %v1492, %v1580
        %1582 = vmatmul.bf16.gmra.mxu0 %v1162
        %v1583 = vpop.f32.mrf.mxu0
        %v1584 = vadd.f32 %v1495, %v1583
        %v1585 = vpop.f32.mrf.mxu0
        %v1586 = vadd.f32 %v1497, %v1585
        %1587 = vmatmul.bf16.gmra.mxu0 %v1166
        %v1588 = vpop.f32.mrf.mxu0
        %v1589 = vadd.f32 %v1500, %v1588
        %v1590 = vpop.f32.mrf.mxu0
        %v1591 = vadd.f32 %v1502, %v1590
        %1592 = vmatmul.bf16.gmra.mxu0 %v1170
        %v1593 = vpop.f32.mrf.mxu0
        %v1594 = vadd.f32 %v1505, %v1593
        %v1595 = vpop.f32.mrf.mxu0
        %v1596 = vadd.f32 %v1507, %v1595
        %1597 = vmatmul.bf16.gmra.mxu0 %v1174
        %v1598 = vpop.f32.mrf.mxu0
        %v1599 = vadd.f32 %v1510, %v1598
        %v1600 = vpop.f32.mrf.mxu0
        %v1601 = vadd.f32 %v1512, %v1600
        %1602 = vmatmul.bf16.gmra.mxu0 %v1178
        %v1603 = vpop.f32.mrf.mxu0
        %v1604 = vadd.f32 %v1515, %v1603
        %v1605 = vpop.f32.mrf.mxu0
        %v1606 = vadd.f32 %v1517, %v1605
        %1607 = vmatmul.bf16.gmra.mxu0 %v1182
        %v1608 = vpop.f32.mrf.mxu0
        %v1609 = vadd.f32 %v1520, %v1608
        %v1610 = vpop.f32.mrf.mxu0
        %v1611 = vadd.f32 %v1522, %v1610
        %1612 = vmatmul.bf16.gmra.mxu0 %v1186
        %v1613 = vpop.f32.mrf.mxu0
        %v1614 = vadd.f32 %v1525, %v1613
        %v1615 = vpop.f32.mrf.mxu0
        %v1616 = vadd.f32 %v1527, %v1615
        %1617 = vmatmul.bf16.gmra.mxu0 %v1190
        %v1618 = vpop.f32.mrf.mxu0
        %v1619 = vadd.f32 %v1530, %v1618
        %v1620 = vpop.f32.mrf.mxu0
        %v1621 = vadd.f32 %v1532, %v1620
        %1622 = vmatmul.bf16.gmra.mxu0 %v1194
        %v1623 = vpop.f32.mrf.mxu0
        %v1624 = vadd.f32 %v1535, %v1623
        %v1625 = vpop.f32.mrf.mxu0
        %v1626 = vadd.f32 %v1537, %v1625
        %1627 = vmatmul.bf16.gmra.mxu0 %v1198
        %v1628 = vpop.f32.mrf.mxu0
        %v1629 = vadd.f32 %v1540, %v1628
        %v1630 = vpop.f32.mrf.mxu0
        %v1631 = vadd.f32 %v1542, %v1630
        %1632 = vmatmul.bf16.gmra.mxu0 %v1202
        %v1633 = vpop.f32.mrf.mxu0
        %v1634 = vadd.f32 %v1545, %v1633
        %v1635 = vpop.f32.mrf.mxu0
        %v1636 = vadd.f32 %v1547, %v1635
        %1637 = vmatmul.bf16.gmra.mxu0 %v1206
        %v1638 = vpop.f32.mrf.mxu0
        %v1639 = vadd.f32 %v1550, %v1638
        %v1640 = vpop.f32.mrf.mxu0
        %v1641 = vadd.f32 %v1552, %v1640
        %1642 = vdwg.mxu0
        %1643 = vmatpush.bf16.msra.mxu0 %v1424
        %1644 = vmatpush.bf16.msra.mxu0 %v1423
        %1645 = vmatpush.bf16.msra.mxu0 %v1422
        %1646 = vmatpush.bf16.msra.mxu0 %v1421
        %1647 = vmatpush.bf16.msra.mxu0 %v1420
        %1648 = vmatpush.bf16.msra.mxu0 %v1419
        %1649 = vmatpush.bf16.msra.mxu0 %v1418
        %1650 = vmatpush.bf16.msra.mxu0 %v1417
        %1651 = vmatmul.bf16.gmra.mxu0 %v1147
        %v1652 = vpop.f32.mrf.mxu0
        %v1653 = vadd.f32 %v1564, %v1652
        %v1654 = vpop.f32.mrf.mxu0
        %v1655 = vadd.f32 %v1566, %v1654
        %1656 = vmatmul.bf16.gmra.mxu0 %v1151
        %v1657 = vpop.f32.mrf.mxu0
        %v1658 = vadd.f32 %v1569, %v1657
        %v1659 = vpop.f32.mrf.mxu0
        %v1660 = vadd.f32 %v1571, %v1659
        %1661 = vmatmul.bf16.gmra.mxu0 %v1155
        %v1662 = vpop.f32.mrf.mxu0
        %v1663 = vadd.f32 %v1574, %v1662
        %v1664 = vpop.f32.mrf.mxu0
        %v1665 = vadd.f32 %v1576, %v1664
        %1666 = vmatmul.bf16.gmra.mxu0 %v1159
        %v1667 = vpop.f32.mrf.mxu0
        %v1668 = vadd.f32 %v1579, %v1667
        %v1669 = vpop.f32.mrf.mxu0
        %v1670 = vadd.f32 %v1581, %v1669
        %1671 = vmatmul.bf16.gmra.mxu0 %v1163
        %v1672 = vpop.f32.mrf.mxu0
        %v1673 = vadd.f32 %v1584, %v1672
        %v1674 = vpop.f32.mrf.mxu0
        %v1675 = vadd.f32 %v1586, %v1674
        %1676 = vmatmul.bf16.gmra.mxu0 %v1167
        %v1677 = vpop.f32.mrf.mxu0
        %v1678 = vadd.f32 %v1589, %v1677
        %v1679 = vpop.f32.mrf.mxu0
        %v1680 = vadd.f32 %v1591, %v1679
        %1681 = vmatmul.bf16.gmra.mxu0 %v1171
        %v1682 = vpop.f32.mrf.mxu0
        %v1683 = vadd.f32 %v1594, %v1682
        %v1684 = vpop.f32.mrf.mxu0
        %v1685 = vadd.f32 %v1596, %v1684
        %1686 = vmatmul.bf16.gmra.mxu0 %v1175
        %v1687 = vpop.f32.mrf.mxu0
        %v1688 = vadd.f32 %v1599, %v1687
        %v1689 = vpop.f32.mrf.mxu0
        %v1690 = vadd.f32 %v1601, %v1689
        %1691 = vmatmul.bf16.gmra.mxu0 %v1179
        %v1692 = vpop.f32.mrf.mxu0
        %v1693 = vadd.f32 %v1604, %v1692
        %v1694 = vpop.f32.mrf.mxu0
        %v1695 = vadd.f32 %v1606, %v1694
        %1696 = vmatmul.bf16.gmra.mxu0 %v1183
        %v1697 = vpop.f32.mrf.mxu0
        %v1698 = vadd.f32 %v1609, %v1697
        %v1699 = vpop.f32.mrf.mxu0
        %v1700 = vadd.f32 %v1611, %v1699
        %1701 = vmatmul.bf16.gmra.mxu0 %v1187
        %v1702 = vpop.f32.mrf.mxu0
        %v1703 = vadd.f32 %v1614, %v1702
        %v1704 = vpop.f32.mrf.mxu0
        %v1705 = vadd.f32 %v1616, %v1704
        %1706 = vmatmul.bf16.gmra.mxu0 %v1191
        %v1707 = vpop.f32.mrf.mxu0
        %v1708 = vadd.f32 %v1619, %v1707
        %v1709 = vpop.f32.mrf.mxu0
        %v1710 = vadd.f32 %v1621, %v1709
        %1711 = vmatmul.bf16.gmra.mxu0 %v1195
        %v1712 = vpop.f32.mrf.mxu0
        %v1713 = vadd.f32 %v1624, %v1712
        %v1714 = vpop.f32.mrf.mxu0
        %v1715 = vadd.f32 %v1626, %v1714
        %1716 = vmatmul.bf16.gmra.mxu0 %v1199
        %v1717 = vpop.f32.mrf.mxu0
        %v1718 = vadd.f32 %v1629, %v1717
        %v1719 = vpop.f32.mrf.mxu0
        %v1720 = vadd.f32 %v1631, %v1719
        %1721 = vmatmul.bf16.gmra.mxu0 %v1203
        %v1722 = vpop.f32.mrf.mxu0
        %v1723 = vadd.f32 %v1634, %v1722
        %v1724 = vpop.f32.mrf.mxu0
        %v1725 = vadd.f32 %v1636, %v1724
        %1726 = vmatmul.bf16.gmra.mxu0 %v1207
        %v1727 = vpop.f32.mrf.mxu0
        %v1728 = vadd.f32 %v1639, %v1727
        %v1729 = vpop.f32.mrf.mxu0
        %v1730 = vadd.f32 %v1641, %v1729
        %1731 = vdwg.mxu0
        %1732 = vmatpush.bf16.msra.mxu0 %v1432
        %1733 = vmatpush.bf16.msra.mxu0 %v1431
        %1734 = vmatpush.bf16.msra.mxu0 %v1430
        %1735 = vmatpush.bf16.msra.mxu0 %v1429
        %1736 = vmatpush.bf16.msra.mxu0 %v1428
        %1737 = vmatpush.bf16.msra.mxu0 %v1427
        %1738 = vmatpush.bf16.msra.mxu0 %v1426
        %1739 = vmatpush.bf16.msra.mxu0 %v1425
        %1740 = vmatmul.bf16.gmra.mxu0 %v1148
        %v1741 = vpop.f32.mrf.mxu0
        %v1742 = vadd.f32 %v1653, %v1741
        %v1743 = vpop.f32.mrf.mxu0
        %v1744 = vadd.f32 %v1655, %v1743
        %1745 = vmatmul.bf16.gmra.mxu0 %v1152
        %v1746 = vpop.f32.mrf.mxu0
        %v1747 = vadd.f32 %v1658, %v1746
        %v1748 = vpop.f32.mrf.mxu0
        %v1749 = vadd.f32 %v1660, %v1748
        %1750 = vmatmul.bf16.gmra.mxu0 %v1156
        %v1751 = vpop.f32.mrf.mxu0
        %v1752 = vadd.f32 %v1663, %v1751
        %v1753 = vpop.f32.mrf.mxu0
        %v1754 = vadd.f32 %v1665, %v1753
        %1755 = vmatmul.bf16.gmra.mxu0 %v1160
        %v1756 = vpop.f32.mrf.mxu0
        %v1757 = vadd.f32 %v1668, %v1756
        %v1758 = vpop.f32.mrf.mxu0
        %v1759 = vadd.f32 %v1670, %v1758
        %1760 = vmatmul.bf16.gmra.mxu0 %v1164
        %v1761 = vpop.f32.mrf.mxu0
        %v1762 = vadd.f32 %v1673, %v1761
        %v1763 = vpop.f32.mrf.mxu0
        %v1764 = vadd.f32 %v1675, %v1763
        %1765 = vmatmul.bf16.gmra.mxu0 %v1168
        %v1766 = vpop.f32.mrf.mxu0
        %v1767 = vadd.f32 %v1678, %v1766
        %v1768 = vpop.f32.mrf.mxu0
        %v1769 = vadd.f32 %v1680, %v1768
        %1770 = vmatmul.bf16.gmra.mxu0 %v1172
        %v1771 = vpop.f32.mrf.mxu0
        %v1772 = vadd.f32 %v1683, %v1771
        %v1773 = vpop.f32.mrf.mxu0
        %v1774 = vadd.f32 %v1685, %v1773
        %1775 = vmatmul.bf16.gmra.mxu0 %v1176
        %v1776 = vpop.f32.mrf.mxu0
        %v1777 = vadd.f32 %v1688, %v1776
        %v1778 = vpop.f32.mrf.mxu0
        %v1779 = vadd.f32 %v1690, %v1778
        %1780 = vmatmul.bf16.gmra.mxu0 %v1180
        %v1781 = vpop.f32.mrf.mxu0
        %v1782 = vadd.f32 %v1693, %v1781
        %v1783 = vpop.f32.mrf.mxu0
        %v1784 = vadd.f32 %v1695, %v1783
        %1785 = vmatmul.bf16.gmra.mxu0 %v1184
        %v1786 = vpop.f32.mrf.mxu0
        %v1787 = vadd.f32 %v1698, %v1786
        %v1788 = vpop.f32.mrf.mxu0
        %v1789 = vadd.f32 %v1700, %v1788
        %1790 = vmatmul.bf16.gmra.mxu0 %v1188
        %v1791 = vpop.f32.mrf.mxu0
        %v1792 = vadd.f32 %v1703, %v1791
        %v1793 = vpop.f32.mrf.mxu0
        %v1794 = vadd.f32 %v1705, %v1793
        %1795 = vmatmul.bf16.gmra.mxu0 %v1192
        %v1796 = vpop.f32.mrf.mxu0
        %v1797 = vadd.f32 %v1708, %v1796
        %v1798 = vpop.f32.mrf.mxu0
        %v1799 = vadd.f32 %v1710, %v1798
        %1800 = vmatmul.bf16.gmra.mxu0 %v1196
        %v1801 = vpop.f32.mrf.mxu0
        %v1802 = vadd.f32 %v1713, %v1801
        %v1803 = vpop.f32.mrf.mxu0
        %v1804 = vadd.f32 %v1715, %v1803
        %1805 = vmatmul.bf16.gmra.mxu0 %v1200
        %v1806 = vpop.f32.mrf.mxu0
        %v1807 = vadd.f32 %v1718, %v1806
        %v1808 = vpop.f32.mrf.mxu0
        %v1809 = vadd.f32 %v1720, %v1808
        %1810 = vmatmul.bf16.gmra.mxu0 %v1204
        %v1811 = vpop.f32.mrf.mxu0
        %v1812 = vadd.f32 %v1723, %v1811
        %v1813 = vpop.f32.mrf.mxu0
        %v1814 = vadd.f32 %v1725, %v1813
        %1815 = vmatmul.bf16.gmra.mxu0 %v1208
        %v1816 = vpop.f32.mrf.mxu0
        %v1817 = vadd.f32 %v1728, %v1816
        %v1818 = vpop.f32.mrf.mxu0
        %v1819 = vadd.f32 %v1730, %v1818
        %1820 = vdwg.mxu0
        %v1821 = vadd.f32 %v857, %v1742
        %v1822 = vadd.f32 %v858, %v1744
        %v1823 = vadd.f32 %v859, %v1747
        %v1824 = vadd.f32 %v860, %v1749
        %v1825 = vadd.f32 %v861, %v1752
        %v1826 = vadd.f32 %v862, %v1754
        %v1827 = vadd.f32 %v863, %v1757
        %v1828 = vadd.f32 %v864, %v1759
        %v1829 = vadd.f32 %v865, %v1762
        %v1830 = vadd.f32 %v866, %v1764
        %v1831 = vadd.f32 %v867, %v1767
        %v1832 = vadd.f32 %v868, %v1769
        %v1833 = vadd.f32 %v869, %v1772
        %v1834 = vadd.f32 %v870, %v1774
        %v1835 = vadd.f32 %v871, %v1777
        %v1836 = vadd.f32 %v872, %v1779
        %v1837 = vadd.f32 %v873, %v1782
        %v1838 = vadd.f32 %v874, %v1784
        %v1839 = vadd.f32 %v875, %v1787
        %v1840 = vadd.f32 %v876, %v1789
        %v1841 = vadd.f32 %v877, %v1792
        %v1842 = vadd.f32 %v878, %v1794
        %v1843 = vadd.f32 %v879, %v1797
        %v1844 = vadd.f32 %v880, %v1799
        %v1845 = vadd.f32 %v881, %v1802
        %v1846 = vadd.f32 %v882, %v1804
        %v1847 = vadd.f32 %v883, %v1807
        %v1848 = vadd.f32 %v884, %v1809
        %v1849 = vadd.f32 %v885, %v1812
        %v1850 = vadd.f32 %v886, %v1814
        %v1851 = vadd.f32 %v887, %v1817
        %v1852 = vadd.f32 %v888, %v1819
        %1853 = vst [vmem:[#allocation2] sm:$0xff] %v1821
        %1854 = vst [vmem:[#allocation2 + $0x8] sm:$0xff] %v1822
        %1855 = vst [vmem:[#allocation2 + $0x10] sm:$0xff] %v1823
        %1856 = vst [vmem:[#allocation2 + $0x18] sm:$0xff] %v1824
        %1857 = vst [vmem:[#allocation2 + $0x20] sm:$0xff] %v1825
        %1858 = vst [vmem:[#allocation2 + $0x28] sm:$0xff] %v1826
        %1859 = vst [vmem:[#allocation2 + $0x30] sm:$0xff] %v1827
        %1860 = vst [vmem:[#allocation2 + $0x38] sm:$0xff] %v1828
        %1861 = vst [vmem:[#allocation2 + $0x40] sm:$0xff] %v1829
        %1862 = vst [vmem:[#allocation2 + $0x48] sm:$0xff] %v1830
        %1863 = vst [vmem:[#allocation2 + $0x50] sm:$0xff] %v1831
        %1864 = vst [vmem:[#allocation2 + $0x58] sm:$0xff] %v1832
        %1865 = vst [vmem:[#allocation2 + $0x60] sm:$0xff] %v1833
        %1866 = vst [vmem:[#allocation2 + $0x68] sm:$0xff] %v1834
        %1867 = vst [vmem:[#allocation2 + $0x70] sm:$0xff] %v1835
        %1868 = vst [vmem:[#allocation2 + $0x78] sm:$0xff] %v1836
        %1869 = vst [vmem:[#allocation2 + $0x80] sm:$0xff] %v1837
        %1870 = vst [vmem:[#allocation2 + $0x88] sm:$0xff] %v1838
        %1871 = vst [vmem:[#allocation2 + $0x90] sm:$0xff] %v1839
        %1872 = vst [vmem:[#allocation2 + $0x98] sm:$0xff] %v1840
        %1873 = vst [vmem:[#allocation2 + $0xa0] sm:$0xff] %v1841
        %1874 = vst [vmem:[#allocation2 + $0xa8] sm:$0xff] %v1842
        %1875 = vst [vmem:[#allocation2 + $0xb0] sm:$0xff] %v1843
        %1876 = vst [vmem:[#allocation2 + $0xb8] sm:$0xff] %v1844
        %1877 = vst [vmem:[#allocation2 + $0xc0] sm:$0xff] %v1845
        %1878 = vst [vmem:[#allocation2 + $0xc8] sm:$0xff] %v1846
        %1879 = vst [vmem:[#allocation2 + $0xd0] sm:$0xff] %v1847
        %1880 = vst [vmem:[#allocation2 + $0xd8] sm:$0xff] %v1848
        %1881 = vst [vmem:[#allocation2 + $0xe0] sm:$0xff] %v1849
        %1882 = vst [vmem:[#allocation2 + $0xe8] sm:$0xff] %v1850
        %1883 = vst [vmem:[#allocation2 + $0xf0] sm:$0xff] %v1851
        %1884 = vst [vmem:[#allocation2 + $0xf8] sm:$0xff] %v1852
        %v1885 = vld [vmem:[#allocation4] sm:$0xff]
        %v1886 = vld [vmem:[#allocation4 + $0x8] sm:$0xff]
        %v1887 = vld [vmem:[#allocation4 + $0x10] sm:$0xff]
        %v1888 = vld [vmem:[#allocation4 + $0x18] sm:$0xff]
        %v1889 = vld [vmem:[#allocation4 + $0x20] sm:$0xff]
        %v1890 = vld [vmem:[#allocation4 + $0x28] sm:$0xff]
        %v1891 = vld [vmem:[#allocation4 + $0x30] sm:$0xff]
        %v1892 = vld [vmem:[#allocation4 + $0x38] sm:$0xff]
        %v1893 = vld [vmem:[#allocation4 + $0x40] sm:$0xff]
        %v1894 = vld [vmem:[#allocation4 + $0x48] sm:$0xff]
        %v1895 = vld [vmem:[#allocation4 + $0x50] sm:$0xff]
        %v1896 = vld [vmem:[#allocation4 + $0x58] sm:$0xff]
        %v1897 = vld [vmem:[#allocation4 + $0x60] sm:$0xff]
        %v1898 = vld [vmem:[#allocation4 + $0x68] sm:$0xff]
        %v1899 = vld [vmem:[#allocation4 + $0x70] sm:$0xff]
        %v1900 = vld [vmem:[#allocation4 + $0x78] sm:$0xff]
        %v1901 = vld [vmem:[#allocation4 + $0x80] sm:$0xff]
        %v1902 = vld [vmem:[#allocation4 + $0x88] sm:$0xff]
        %v1903 = vld [vmem:[#allocation4 + $0x90] sm:$0xff]
        %v1904 = vld [vmem:[#allocation4 + $0x98] sm:$0xff]
        %v1905 = vld [vmem:[#allocation4 + $0xa0] sm:$0xff]
        %v1906 = vld [vmem:[#allocation4 + $0xa8] sm:$0xff]
        %v1907 = vld [vmem:[#allocation4 + $0xb0] sm:$0xff]
        %v1908 = vld [vmem:[#allocation4 + $0xb8] sm:$0xff]
        %v1909 = vld [vmem:[#allocation4 + $0xc0] sm:$0xff]
        %v1910 = vld [vmem:[#allocation4 + $0xc8] sm:$0xff]
        %v1911 = vld [vmem:[#allocation4 + $0xd0] sm:$0xff]
        %v1912 = vld [vmem:[#allocation4 + $0xd8] sm:$0xff]
        %v1913 = vld [vmem:[#allocation4 + $0xe0] sm:$0xff]
        %v1914 = vld [vmem:[#allocation4 + $0xe8] sm:$0xff]
        %v1915 = vld [vmem:[#allocation4 + $0xf0] sm:$0xff]
        %v1916 = vld [vmem:[#allocation4 + $0xf8] sm:$0xff]
        %v1917 = vunpack.c.l.bf16 %v793
        %v1918 = vunpack.c.h.bf16 %v793
        %v1919 = vunpack.c.l.bf16 %v794
        %v1920 = vunpack.c.h.bf16 %v794
        %v1921 = vunpack.c.l.bf16 %v795
        %v1922 = vunpack.c.h.bf16 %v795
        %v1923 = vunpack.c.l.bf16 %v796
        %v1924 = vunpack.c.h.bf16 %v796
        %v1925 = vunpack.c.l.bf16 %v797
        %v1926 = vunpack.c.h.bf16 %v797
        %v1927 = vunpack.c.l.bf16 %v798
        %v1928 = vunpack.c.h.bf16 %v798
        %v1929 = vunpack.c.l.bf16 %v799
        %v1930 = vunpack.c.h.bf16 %v799
        %v1931 = vunpack.c.l.bf16 %v800
        %v1932 = vunpack.c.h.bf16 %v800
        %v1933 = vunpack.c.l.bf16 %v801
        %v1934 = vunpack.c.h.bf16 %v801
        %v1935 = vunpack.c.l.bf16 %v802
        %v1936 = vunpack.c.h.bf16 %v802
        %v1937 = vunpack.c.l.bf16 %v803
        %v1938 = vunpack.c.h.bf16 %v803
        %v1939 = vunpack.c.l.bf16 %v804
        %v1940 = vunpack.c.h.bf16 %v804
        %v1941 = vunpack.c.l.bf16 %v805
        %v1942 = vunpack.c.h.bf16 %v805
        %v1943 = vunpack.c.l.bf16 %v806
        %v1944 = vunpack.c.h.bf16 %v806
        %v1945 = vunpack.c.l.bf16 %v807
        %v1946 = vunpack.c.h.bf16 %v807
        %v1947 = vunpack.c.l.bf16 %v808
        %v1948 = vunpack.c.h.bf16 %v808
        %v1949 = vunpack.c.l.bf16 %v809
        %v1950 = vunpack.c.h.bf16 %v809
        %v1951 = vunpack.c.l.bf16 %v810
        %v1952 = vunpack.c.h.bf16 %v810
        %v1953 = vunpack.c.l.bf16 %v811
        %v1954 = vunpack.c.h.bf16 %v811
        %v1955 = vunpack.c.l.bf16 %v812
        %v1956 = vunpack.c.h.bf16 %v812
        %v1957 = vunpack.c.l.bf16 %v813
        %v1958 = vunpack.c.h.bf16 %v813
        %v1959 = vunpack.c.l.bf16 %v814
        %v1960 = vunpack.c.h.bf16 %v814
        %v1961 = vunpack.c.l.bf16 %v815
        %v1962 = vunpack.c.h.bf16 %v815
        %v1963 = vunpack.c.l.bf16 %v816
        %v1964 = vunpack.c.h.bf16 %v816
        %v1965 = vunpack.c.l.bf16 %v817
        %v1966 = vunpack.c.h.bf16 %v817
        %v1967 = vunpack.c.l.bf16 %v818
        %v1968 = vunpack.c.h.bf16 %v818
        %v1969 = vunpack.c.l.bf16 %v819
        %v1970 = vunpack.c.h.bf16 %v819
        %v1971 = vunpack.c.l.bf16 %v820
        %v1972 = vunpack.c.h.bf16 %v820
        %v1973 = vunpack.c.l.bf16 %v821
        %v1974 = vunpack.c.h.bf16 %v821
        %v1975 = vunpack.c.l.bf16 %v822
        %v1976 = vunpack.c.h.bf16 %v822
        %v1977 = vunpack.c.l.bf16 %v823
        %v1978 = vunpack.c.h.bf16 %v823
        %v1979 = vunpack.c.l.bf16 %v824
        %v1980 = vunpack.c.h.bf16 %v824
        %v1981 = vunpack.c.l.bf16 %v825
        %v1982 = vunpack.c.h.bf16 %v825
        %v1983 = vunpack.c.l.bf16 %v826
        %v1984 = vunpack.c.h.bf16 %v826
        %v1985 = vunpack.c.l.bf16 %v827
        %v1986 = vunpack.c.h.bf16 %v827
        %v1987 = vunpack.c.l.bf16 %v828
        %v1988 = vunpack.c.h.bf16 %v828
        %v1989 = vunpack.c.l.bf16 %v829
        %v1990 = vunpack.c.h.bf16 %v829
        %v1991 = vunpack.c.l.bf16 %v830
        %v1992 = vunpack.c.h.bf16 %v830
        %v1993 = vunpack.c.l.bf16 %v831
        %v1994 = vunpack.c.h.bf16 %v831
        %v1995 = vunpack.c.l.bf16 %v832
        %v1996 = vunpack.c.h.bf16 %v832
        %v1997 = vunpack.c.l.bf16 %v833
        %v1998 = vunpack.c.h.bf16 %v833
        %v1999 = vunpack.c.l.bf16 %v834
        %v2000 = vunpack.c.h.bf16 %v834
        %v2001 = vunpack.c.l.bf16 %v835
        %v2002 = vunpack.c.h.bf16 %v835
        %v2003 = vunpack.c.l.bf16 %v836
        %v2004 = vunpack.c.h.bf16 %v836
        %v2005 = vunpack.c.l.bf16 %v837
        %v2006 = vunpack.c.h.bf16 %v837
        %v2007 = vunpack.c.l.bf16 %v838
        %v2008 = vunpack.c.h.bf16 %v838
        %v2009 = vunpack.c.l.bf16 %v839
        %v2010 = vunpack.c.h.bf16 %v839
        %v2011 = vunpack.c.l.bf16 %v840
        %v2012 = vunpack.c.h.bf16 %v840
        %v2013 = vunpack.c.l.bf16 %v841
        %v2014 = vunpack.c.h.bf16 %v841
        %v2015 = vunpack.c.l.bf16 %v842
        %v2016 = vunpack.c.h.bf16 %v842
        %v2017 = vunpack.c.l.bf16 %v843
        %v2018 = vunpack.c.h.bf16 %v843
        %v2019 = vunpack.c.l.bf16 %v844
        %v2020 = vunpack.c.h.bf16 %v844
        %v2021 = vunpack.c.l.bf16 %v845
        %v2022 = vunpack.c.h.bf16 %v845
        %v2023 = vunpack.c.l.bf16 %v846
        %v2024 = vunpack.c.h.bf16 %v846
        %v2025 = vunpack.c.l.bf16 %v847
        %v2026 = vunpack.c.h.bf16 %v847
        %v2027 = vunpack.c.l.bf16 %v848
        %v2028 = vunpack.c.h.bf16 %v848
        %v2029 = vunpack.c.l.bf16 %v849
        %v2030 = vunpack.c.h.bf16 %v849
        %v2031 = vunpack.c.l.bf16 %v850
        %v2032 = vunpack.c.h.bf16 %v850
        %v2033 = vunpack.c.l.bf16 %v851
        %v2034 = vunpack.c.h.bf16 %v851
        %v2035 = vunpack.c.l.bf16 %v852
        %v2036 = vunpack.c.h.bf16 %v852
        %v2037 = vunpack.c.l.bf16 %v853
        %v2038 = vunpack.c.h.bf16 %v853
        %v2039 = vunpack.c.l.bf16 %v854
        %v2040 = vunpack.c.h.bf16 %v854
        %v2041 = vunpack.c.l.bf16 %v855
        %v2042 = vunpack.c.h.bf16 %v855
        %v2043 = vunpack.c.l.bf16 %v856
        %v2044 = vunpack.c.h.bf16 %v856
        %v2045 = vadd.f32 %v1917, %v1918
        %v2046 = vadd.f32 %v2045, %v1919
        %v2047 = vadd.f32 %v2046, %v1920
        %2048 = vadd.xlane.f32.xlu0 %v2047
        %v2049 = vpop.xlane.xlu0 %2048
        %v2050 = vadd.f32 %v1921, %v1922
        %v2051 = vadd.f32 %v2050, %v1923
        %v2052 = vadd.f32 %v2051, %v1924
        %2053 = vadd.xlane.f32.xlu0 %v2052
        %v2054 = vpop.xlane.xlu0 %2053
        %v2055 = vadd.f32 %v1925, %v1926
        %v2056 = vadd.f32 %v2055, %v1927
        %v2057 = vadd.f32 %v2056, %v1928
        %2058 = vadd.xlane.f32.xlu0 %v2057
        %v2059 = vpop.xlane.xlu0 %2058
        %v2060 = vadd.f32 %v1929, %v1930
        %v2061 = vadd.f32 %v2060, %v1931
        %v2062 = vadd.f32 %v2061, %v1932
        %2063 = vadd.xlane.f32.xlu0 %v2062
        %v2064 = vpop.xlane.xlu0 %2063
        %v2065 = vadd.f32 %v1933, %v1934
        %v2066 = vadd.f32 %v2065, %v1935
        %v2067 = vadd.f32 %v2066, %v1936
        %2068 = vadd.xlane.f32.xlu0 %v2067
        %v2069 = vpop.xlane.xlu0 %2068
        %v2070 = vadd.f32 %v1937, %v1938
        %v2071 = vadd.f32 %v2070, %v1939
        %v2072 = vadd.f32 %v2071, %v1940
        %2073 = vadd.xlane.f32.xlu0 %v2072
        %v2074 = vpop.xlane.xlu0 %2073
        %v2075 = vadd.f32 %v1941, %v1942
        %v2076 = vadd.f32 %v2075, %v1943
        %v2077 = vadd.f32 %v2076, %v1944
        %2078 = vadd.xlane.f32.xlu0 %v2077
        %v2079 = vpop.xlane.xlu0 %2078
        %v2080 = vadd.f32 %v1945, %v1946
        %v2081 = vadd.f32 %v2080, %v1947
        %v2082 = vadd.f32 %v2081, %v1948
        %2083 = vadd.xlane.f32.xlu0 %v2082
        %v2084 = vpop.xlane.xlu0 %2083
        %v2085 = vadd.f32 %v1949, %v1950
        %v2086 = vadd.f32 %v2085, %v1951
        %v2087 = vadd.f32 %v2086, %v1952
        %2088 = vadd.xlane.f32.xlu0 %v2087
        %v2089 = vpop.xlane.xlu0 %2088
        %v2090 = vadd.f32 %v1953, %v1954
        %v2091 = vadd.f32 %v2090, %v1955
        %v2092 = vadd.f32 %v2091, %v1956
        %2093 = vadd.xlane.f32.xlu0 %v2092
        %v2094 = vpop.xlane.xlu0 %2093
        %v2095 = vadd.f32 %v1957, %v1958
        %v2096 = vadd.f32 %v2095, %v1959
        %v2097 = vadd.f32 %v2096, %v1960
        %2098 = vadd.xlane.f32.xlu0 %v2097
        %v2099 = vpop.xlane.xlu0 %2098
        %v2100 = vadd.f32 %v1961, %v1962
        %v2101 = vadd.f32 %v2100, %v1963
        %v2102 = vadd.f32 %v2101, %v1964
        %2103 = vadd.xlane.f32.xlu0 %v2102
        %v2104 = vpop.xlane.xlu0 %2103
        %v2105 = vadd.f32 %v1965, %v1966
        %v2106 = vadd.f32 %v2105, %v1967
        %v2107 = vadd.f32 %v2106, %v1968
        %2108 = vadd.xlane.f32.xlu0 %v2107
        %v2109 = vpop.xlane.xlu0 %2108
        %v2110 = vadd.f32 %v1969, %v1970
        %v2111 = vadd.f32 %v2110, %v1971
        %v2112 = vadd.f32 %v2111, %v1972
        %2113 = vadd.xlane.f32.xlu0 %v2112
        %v2114 = vpop.xlane.xlu0 %2113
        %v2115 = vadd.f32 %v1973, %v1974
        %v2116 = vadd.f32 %v2115, %v1975
        %v2117 = vadd.f32 %v2116, %v1976
        %2118 = vadd.xlane.f32.xlu0 %v2117
        %v2119 = vpop.xlane.xlu0 %2118
        %v2120 = vadd.f32 %v1977, %v1978
        %v2121 = vadd.f32 %v2120, %v1979
        %v2122 = vadd.f32 %v2121, %v1980
        %2123 = vadd.xlane.f32.xlu0 %v2122
        %v2124 = vpop.xlane.xlu0 %2123
        %v2125 = vadd.f32 %v1981, %v1982
        %v2126 = vadd.f32 %v2125, %v1983
        %v2127 = vadd.f32 %v2126, %v1984
        %2128 = vadd.xlane.f32.xlu0 %v2127
        %v2129 = vpop.xlane.xlu0 %2128
        %v2130 = vadd.f32 %v1985, %v1986
        %v2131 = vadd.f32 %v2130, %v1987
        %v2132 = vadd.f32 %v2131, %v1988
        %2133 = vadd.xlane.f32.xlu0 %v2132
        %v2134 = vpop.xlane.xlu0 %2133
        %v2135 = vadd.f32 %v1989, %v1990
        %v2136 = vadd.f32 %v2135, %v1991
        %v2137 = vadd.f32 %v2136, %v1992
        %2138 = vadd.xlane.f32.xlu0 %v2137
        %v2139 = vpop.xlane.xlu0 %2138
        %v2140 = vadd.f32 %v1993, %v1994
        %v2141 = vadd.f32 %v2140, %v1995
        %v2142 = vadd.f32 %v2141, %v1996
        %2143 = vadd.xlane.f32.xlu0 %v2142
        %v2144 = vpop.xlane.xlu0 %2143
        %v2145 = vadd.f32 %v1997, %v1998
        %v2146 = vadd.f32 %v2145, %v1999
        %v2147 = vadd.f32 %v2146, %v2000
        %2148 = vadd.xlane.f32.xlu0 %v2147
        %v2149 = vpop.xlane.xlu0 %2148
        %v2150 = vadd.f32 %v2001, %v2002
        %v2151 = vadd.f32 %v2150, %v2003
        %v2152 = vadd.f32 %v2151, %v2004
        %2153 = vadd.xlane.f32.xlu0 %v2152
        %v2154 = vpop.xlane.xlu0 %2153
        %v2155 = vadd.f32 %v2005, %v2006
        %v2156 = vadd.f32 %v2155, %v2007
        %v2157 = vadd.f32 %v2156, %v2008
        %2158 = vadd.xlane.f32.xlu0 %v2157
        %v2159 = vpop.xlane.xlu0 %2158
        %v2160 = vadd.f32 %v2009, %v2010
        %v2161 = vadd.f32 %v2160, %v2011
        %v2162 = vadd.f32 %v2161, %v2012
        %2163 = vadd.xlane.f32.xlu0 %v2162
        %v2164 = vpop.xlane.xlu0 %2163
        %v2165 = vadd.f32 %v2013, %v2014
        %v2166 = vadd.f32 %v2165, %v2015
        %v2167 = vadd.f32 %v2166, %v2016
        %2168 = vadd.xlane.f32.xlu0 %v2167
        %v2169 = vpop.xlane.xlu0 %2168
        %v2170 = vadd.f32 %v2017, %v2018
        %v2171 = vadd.f32 %v2170, %v2019
        %v2172 = vadd.f32 %v2171, %v2020
        %2173 = vadd.xlane.f32.xlu0 %v2172
        %v2174 = vpop.xlane.xlu0 %2173
        %v2175 = vadd.f32 %v2021, %v2022
        %v2176 = vadd.f32 %v2175, %v2023
        %v2177 = vadd.f32 %v2176, %v2024
        %2178 = vadd.xlane.f32.xlu0 %v2177
        %v2179 = vpop.xlane.xlu0 %2178
        %v2180 = vadd.f32 %v2025, %v2026
        %v2181 = vadd.f32 %v2180, %v2027
        %v2182 = vadd.f32 %v2181, %v2028
        %2183 = vadd.xlane.f32.xlu0 %v2182
        %v2184 = vpop.xlane.xlu0 %2183
        %v2185 = vadd.f32 %v2029, %v2030
        %v2186 = vadd.f32 %v2185, %v2031
        %v2187 = vadd.f32 %v2186, %v2032
        %2188 = vadd.xlane.f32.xlu0 %v2187
        %v2189 = vpop.xlane.xlu0 %2188
        %v2190 = vadd.f32 %v2033, %v2034
        %v2191 = vadd.f32 %v2190, %v2035
        %v2192 = vadd.f32 %v2191, %v2036
        %2193 = vadd.xlane.f32.xlu0 %v2192
        %v2194 = vpop.xlane.xlu0 %2193
        %v2195 = vadd.f32 %v2037, %v2038
        %v2196 = vadd.f32 %v2195, %v2039
        %v2197 = vadd.f32 %v2196, %v2040
        %2198 = vadd.xlane.f32.xlu0 %v2197
        %v2199 = vpop.xlane.xlu0 %2198
        %v2200 = vadd.f32 %v2041, %v2042
        %v2201 = vadd.f32 %v2200, %v2043
        %v2202 = vadd.f32 %v2201, %v2044
        %2203 = vadd.xlane.f32.xlu0 %v2202
        %v2204 = vpop.xlane.xlu0 %2203
        %v2205 = vadd.f32 %v1885, %v2049
        %v2206 = vadd.f32 %v1886, %v2054
        %v2207 = vadd.f32 %v1887, %v2059
        %v2208 = vadd.f32 %v1888, %v2064
        %v2209 = vadd.f32 %v1889, %v2069
        %v2210 = vadd.f32 %v1890, %v2074
        %v2211 = vadd.f32 %v1891, %v2079
        %v2212 = vadd.f32 %v1892, %v2084
        %v2213 = vadd.f32 %v1893, %v2089
        %v2214 = vadd.f32 %v1894, %v2094
        %v2215 = vadd.f32 %v1895, %v2099
        %v2216 = vadd.f32 %v1896, %v2104
        %v2217 = vadd.f32 %v1897, %v2109
        %v2218 = vadd.f32 %v1898, %v2114
        %v2219 = vadd.f32 %v1899, %v2119
        %v2220 = vadd.f32 %v1900, %v2124
        %v2221 = vadd.f32 %v1901, %v2129
        %v2222 = vadd.f32 %v1902, %v2134
        %v2223 = vadd.f32 %v1903, %v2139
        %v2224 = vadd.f32 %v1904, %v2144
        %v2225 = vadd.f32 %v1905, %v2149
        %v2226 = vadd.f32 %v1906, %v2154
        %v2227 = vadd.f32 %v1907, %v2159
        %v2228 = vadd.f32 %v1908, %v2164
        %v2229 = vadd.f32 %v1909, %v2169
        %v2230 = vadd.f32 %v1910, %v2174
        %v2231 = vadd.f32 %v1911, %v2179
        %v2232 = vadd.f32 %v1912, %v2184
        %v2233 = vadd.f32 %v1913, %v2189
        %v2234 = vadd.f32 %v1914, %v2194
        %v2235 = vadd.f32 %v1915, %v2199
        %v2236 = vadd.f32 %v1916, %v2204
        %vm2237 = vcmask 7168
        %2238 = vst.msk [vmem:[#allocation4] sm:$0xff] %vm2237, %v2205
        %2239 = vst.msk [vmem:[#allocation4 + $0x8] sm:$0xff] %vm2237, %v2206
        %2240 = vst.msk [vmem:[#allocation4 + $0x10] sm:$0xff] %vm2237, %v2207
        %2241 = vst.msk [vmem:[#allocation4 + $0x18] sm:$0xff] %vm2237, %v2208
        %2242 = vst.msk [vmem:[#allocation4 + $0x20] sm:$0xff] %vm2237, %v2209
        %2243 = vst.msk [vmem:[#allocation4 + $0x28] sm:$0xff] %vm2237, %v2210
        %2244 = vst.msk [vmem:[#allocation4 + $0x30] sm:$0xff] %vm2237, %v2211
        %2245 = vst.msk [vmem:[#allocation4 + $0x38] sm:$0xff] %vm2237, %v2212
        %2246 = vst.msk [vmem:[#allocation4 + $0x40] sm:$0xff] %vm2237, %v2213
        %2247 = vst.msk [vmem:[#allocation4 + $0x48] sm:$0xff] %vm2237, %v2214
        %2248 = vst.msk [vmem:[#allocation4 + $0x50] sm:$0xff] %vm2237, %v2215
        %2249 = vst.msk [vmem:[#allocation4 + $0x58] sm:$0xff] %vm2237, %v2216
        %2250 = vst.msk [vmem:[#allocation4 + $0x60] sm:$0xff] %vm2237, %v2217
        %2251 = vst.msk [vmem:[#allocation4 + $0x68] sm:$0xff] %vm2237, %v2218
        %2252 = vst.msk [vmem:[#allocation4 + $0x70] sm:$0xff] %vm2237, %v2219
        %2253 = vst.msk [vmem:[#allocation4 + $0x78] sm:$0xff] %vm2237, %v2220
        %2254 = vst.msk [vmem:[#allocation4 + $0x80] sm:$0xff] %vm2237, %v2221
        %2255 = vst.msk [vmem:[#allocation4 + $0x88] sm:$0xff] %vm2237, %v2222
        %2256 = vst.msk [vmem:[#allocation4 + $0x90] sm:$0xff] %vm2237, %v2223
        %2257 = vst.msk [vmem:[#allocation4 + $0x98] sm:$0xff] %vm2237, %v2224
        %2258 = vst.msk [vmem:[#allocation4 + $0xa0] sm:$0xff] %vm2237, %v2225
        %2259 = vst.msk [vmem:[#allocation4 + $0xa8] sm:$0xff] %vm2237, %v2226
        %2260 = vst.msk [vmem:[#allocation4 + $0xb0] sm:$0xff] %vm2237, %v2227
        %2261 = vst.msk [vmem:[#allocation4 + $0xb8] sm:$0xff] %vm2237, %v2228
        %2262 = vst.msk [vmem:[#allocation4 + $0xc0] sm:$0xff] %vm2237, %v2229
        %2263 = vst.msk [vmem:[#allocation4 + $0xc8] sm:$0xff] %vm2237, %v2230
        %2264 = vst.msk [vmem:[#allocation4 + $0xd0] sm:$0xff] %vm2237, %v2231
        %2265 = vst.msk [vmem:[#allocation4 + $0xd8] sm:$0xff] %vm2237, %v2232
        %2266 = vst.msk [vmem:[#allocation4 + $0xe0] sm:$0xff] %vm2237, %v2233
        %2267 = vst.msk [vmem:[#allocation4 + $0xe8] sm:$0xff] %vm2237, %v2234
        %2268 = vst.msk [vmem:[#allocation4 + $0xf0] sm:$0xff] %vm2237, %v2235
        %2269 = vst.msk [vmem:[#allocation4 + $0xf8] sm:$0xff] %vm2237, %v2236
        %p2270 = scmp.eq.s32.totalorder %s31, 1
        // Predicated region
        $region61: #{tpu_custom_call.1} parent=39 // pred_check
          %p2271 = pneg %p2270
        $region62: #{tpu_custom_call.1} parent=39 // pred_check_branch
          %2273 = sbr.rel (%p2271) target = $region64
        $region63: #{tpu_custom_call.1} parent=39 // pred_region
          %v2274 = vld [vmem:[#allocation2] sm:$0xff]
          %v2275 = vld [vmem:[#allocation2 + $0x8] sm:$0xff]
          %v2276 = vld [vmem:[#allocation2 + $0x10] sm:$0xff]
          %v2277 = vld [vmem:[#allocation2 + $0x18] sm:$0xff]
          %v2278 = vld [vmem:[#allocation2 + $0x20] sm:$0xff]
          %v2279 = vld [vmem:[#allocation2 + $0x28] sm:$0xff]
          %v2280 = vld [vmem:[#allocation2 + $0x30] sm:$0xff]
          %v2281 = vld [vmem:[#allocation2 + $0x38] sm:$0xff]
          %v2282 = vld [vmem:[#allocation2 + $0x40] sm:$0xff]
          %v2283 = vld [vmem:[#allocation2 + $0x48] sm:$0xff]
          %v2284 = vld [vmem:[#allocation2 + $0x50] sm:$0xff]
          %v2285 = vld [vmem:[#allocation2 + $0x58] sm:$0xff]
          %v2286 = vld [vmem:[#allocation2 + $0x60] sm:$0xff]
          %v2287 = vld [vmem:[#allocation2 + $0x68] sm:$0xff]
          %v2288 = vld [vmem:[#allocation2 + $0x70] sm:$0xff]
          %v2289 = vld [vmem:[#allocation2 + $0x78] sm:$0xff]
          %v2290 = vld [vmem:[#allocation2 + $0x80] sm:$0xff]
          %v2291 = vld [vmem:[#allocation2 + $0x88] sm:$0xff]
          %v2292 = vld [vmem:[#allocation2 + $0x90] sm:$0xff]
          %v2293 = vld [vmem:[#allocation2 + $0x98] sm:$0xff]
          %v2294 = vld [vmem:[#allocation2 + $0xa0] sm:$0xff]
          %v2295 = vld [vmem:[#allocation2 + $0xa8] sm:$0xff]
          %v2296 = vld [vmem:[#allocation2 + $0xb0] sm:$0xff]
          %v2297 = vld [vmem:[#allocation2 + $0xb8] sm:$0xff]
          %v2298 = vld [vmem:[#allocation2 + $0xc0] sm:$0xff]
          %v2299 = vld [vmem:[#allocation2 + $0xc8] sm:$0xff]
          %v2300 = vld [vmem:[#allocation2 + $0xd0] sm:$0xff]
          %v2301 = vld [vmem:[#allocation2 + $0xd8] sm:$0xff]
          %v2302 = vld [vmem:[#allocation2 + $0xe0] sm:$0xff]
          %v2303 = vld [vmem:[#allocation2 + $0xe8] sm:$0xff]
          %v2304 = vld [vmem:[#allocation2 + $0xf0] sm:$0xff]
          %v2305 = vld [vmem:[#allocation2 + $0xf8] sm:$0xff]
          %v2306 = vld [vmem:[#allocation4] sm:$0xff]
          %v2307 = vld [vmem:[#allocation4 + $0x8] sm:$0xff]
          %v2308 = vld [vmem:[#allocation4 + $0x10] sm:$0xff]
          %v2309 = vld [vmem:[#allocation4 + $0x18] sm:$0xff]
          %v2310 = vld [vmem:[#allocation4 + $0x20] sm:$0xff]
          %v2311 = vld [vmem:[#allocation4 + $0x28] sm:$0xff]
          %v2312 = vld [vmem:[#allocation4 + $0x30] sm:$0xff]
          %v2313 = vld [vmem:[#allocation4 + $0x38] sm:$0xff]
          %v2314 = vld [vmem:[#allocation4 + $0x40] sm:$0xff]
          %v2315 = vld [vmem:[#allocation4 + $0x48] sm:$0xff]
          %v2316 = vld [vmem:[#allocation4 + $0x50] sm:$0xff]
          %v2317 = vld [vmem:[#allocation4 + $0x58] sm:$0xff]
          %v2318 = vld [vmem:[#allocation4 + $0x60] sm:$0xff]
          %v2319 = vld [vmem:[#allocation4 + $0x68] sm:$0xff]
          %v2320 = vld [vmem:[#allocation4 + $0x70] sm:$0xff]
          %v2321 = vld [vmem:[#allocation4 + $0x78] sm:$0xff]
          %v2322 = vld [vmem:[#allocation4 + $0x80] sm:$0xff]
          %v2323 = vld [vmem:[#allocation4 + $0x88] sm:$0xff]
          %v2324 = vld [vmem:[#allocation4 + $0x90] sm:$0xff]
          %v2325 = vld [vmem:[#allocation4 + $0x98] sm:$0xff]
          %v2326 = vld [vmem:[#allocation4 + $0xa0] sm:$0xff]
          %v2327 = vld [vmem:[#allocation4 + $0xa8] sm:$0xff]
          %v2328 = vld [vmem:[#allocation4 + $0xb0] sm:$0xff]
          %v2329 = vld [vmem:[#allocation4 + $0xb8] sm:$0xff]
          %v2330 = vld [vmem:[#allocation4 + $0xc0] sm:$0xff]
          %v2331 = vld [vmem:[#allocation4 + $0xc8] sm:$0xff]
          %v2332 = vld [vmem:[#allocation4 + $0xd0] sm:$0xff]
          %v2333 = vld [vmem:[#allocation4 + $0xd8] sm:$0xff]
          %v2334 = vld [vmem:[#allocation4 + $0xe0] sm:$0xff]
          %v2335 = vld [vmem:[#allocation4 + $0xe8] sm:$0xff]
          %v2336 = vld [vmem:[#allocation4 + $0xf0] sm:$0xff]
          %v2337 = vld [vmem:[#allocation4 + $0xf8] sm:$0xff]
          %v2338 = vmax.f32 %v2306, 1.0
          %v2339 = vmax.f32 %v2307, 1.0
          %v2340 = vmax.f32 %v2308, 1.0
          %v2341 = vmax.f32 %v2309, 1.0
          %v2342 = vmax.f32 %v2310, 1.0
          %v2343 = vmax.f32 %v2311, 1.0
          %v2344 = vmax.f32 %v2312, 1.0
          %v2345 = vmax.f32 %v2313, 1.0
          %v2346 = vmax.f32 %v2314, 1.0
          %v2347 = vmax.f32 %v2315, 1.0
          %v2348 = vmax.f32 %v2316, 1.0
          %v2349 = vmax.f32 %v2317, 1.0
          %v2350 = vmax.f32 %v2318, 1.0
          %v2351 = vmax.f32 %v2319, 1.0
          %v2352 = vmax.f32 %v2320, 1.0
          %v2353 = vmax.f32 %v2321, 1.0
          %v2354 = vmax.f32 %v2322, 1.0
          %v2355 = vmax.f32 %v2323, 1.0
          %v2356 = vmax.f32 %v2324, 1.0
          %v2357 = vmax.f32 %v2325, 1.0
          %v2358 = vmax.f32 %v2326, 1.0
          %v2359 = vmax.f32 %v2327, 1.0
          %v2360 = vmax.f32 %v2328, 1.0
          %v2361 = vmax.f32 %v2329, 1.0
          %v2362 = vmax.f32 %v2330, 1.0
          %v2363 = vmax.f32 %v2331, 1.0
          %v2364 = vmax.f32 %v2332, 1.0
          %v2365 = vmax.f32 %v2333, 1.0
          %v2366 = vmax.f32 %v2334, 1.0
          %v2367 = vmax.f32 %v2335, 1.0
          %v2368 = vmax.f32 %v2336, 1.0
          %v2369 = vmax.f32 %v2337, 1.0
          %2371 = vset.pattern.permute.xlu0 0
          %2372 = vperm.xlu0 %2371, %v2338
          %v2373 = vpop.permute.xlu0 %2372
          %2376 = vset.pattern.permute.xlu0 0
          %2377 = vperm.xlu0 %2376, %v2339
          %v2378 = vpop.permute.xlu0 %2377
          %2381 = vset.pattern.permute.xlu0 0
          %2382 = vperm.xlu0 %2381, %v2340
          %v2383 = vpop.permute.xlu0 %2382
          %2386 = vset.pattern.permute.xlu0 0
          %2387 = vperm.xlu0 %2386, %v2341
          %v2388 = vpop.permute.xlu0 %2387
          %2391 = vset.pattern.permute.xlu0 0
          %2392 = vperm.xlu0 %2391, %v2342
          %v2393 = vpop.permute.xlu0 %2392
          %2396 = vset.pattern.permute.xlu0 0
          %2397 = vperm.xlu0 %2396, %v2343
          %v2398 = vpop.permute.xlu0 %2397
          %2401 = vset.pattern.permute.xlu0 0
          %2402 = vperm.xlu0 %2401, %v2344
          %v2403 = vpop.permute.xlu0 %2402
          %2406 = vset.pattern.permute.xlu0 0
          %2407 = vperm.xlu0 %2406, %v2345
          %v2408 = vpop.permute.xlu0 %2407
          %2411 = vset.pattern.permute.xlu0 0
          %2412 = vperm.xlu0 %2411, %v2346
          %v2413 = vpop.permute.xlu0 %2412
          %2416 = vset.pattern.permute.xlu0 0
          %2417 = vperm.xlu0 %2416, %v2347
          %v2418 = vpop.permute.xlu0 %2417
          %2421 = vset.pattern.permute.xlu0 0
          %2422 = vperm.xlu0 %2421, %v2348
          %v2423 = vpop.permute.xlu0 %2422
          %2426 = vset.pattern.permute.xlu0 0
          %2427 = vperm.xlu0 %2426, %v2349
          %v2428 = vpop.permute.xlu0 %2427
          %2431 = vset.pattern.permute.xlu0 0
          %2432 = vperm.xlu0 %2431, %v2350
          %v2433 = vpop.permute.xlu0 %2432
          %2436 = vset.pattern.permute.xlu0 0
          %2437 = vperm.xlu0 %2436, %v2351
          %v2438 = vpop.permute.xlu0 %2437
          %2441 = vset.pattern.permute.xlu0 0
          %2442 = vperm.xlu0 %2441, %v2352
          %v2443 = vpop.permute.xlu0 %2442
          %2446 = vset.pattern.permute.xlu0 0
          %2447 = vperm.xlu0 %2446, %v2353
          %v2448 = vpop.permute.xlu0 %2447
          %2451 = vset.pattern.permute.xlu0 0
          %2452 = vperm.xlu0 %2451, %v2354
          %v2453 = vpop.permute.xlu0 %2452
          %2456 = vset.pattern.permute.xlu0 0
          %2457 = vperm.xlu0 %2456, %v2355
          %v2458 = vpop.permute.xlu0 %2457
          %2461 = vset.pattern.permute.xlu0 0
          %2462 = vperm.xlu0 %2461, %v2356
          %v2463 = vpop.permute.xlu0 %2462
          %2466 = vset.pattern.permute.xlu0 0
          %2467 = vperm.xlu0 %2466, %v2357
          %v2468 = vpop.permute.xlu0 %2467
          %2471 = vset.pattern.permute.xlu0 0
          %2472 = vperm.xlu0 %2471, %v2358
          %v2473 = vpop.permute.xlu0 %2472
          %2476 = vset.pattern.permute.xlu0 0
          %2477 = vperm.xlu0 %2476, %v2359
          %v2478 = vpop.permute.xlu0 %2477
          %2481 = vset.pattern.permute.xlu0 0
          %2482 = vperm.xlu0 %2481, %v2360
          %v2483 = vpop.permute.xlu0 %2482
          %2486 = vset.pattern.permute.xlu0 0
          %2487 = vperm.xlu0 %2486, %v2361
          %v2488 = vpop.permute.xlu0 %2487
          %2491 = vset.pattern.permute.xlu0 0
          %2492 = vperm.xlu0 %2491, %v2362
          %v2493 = vpop.permute.xlu0 %2492
          %2496 = vset.pattern.permute.xlu0 0
          %2497 = vperm.xlu0 %2496, %v2363
          %v2498 = vpop.permute.xlu0 %2497
          %2501 = vset.pattern.permute.xlu0 0
          %2502 = vperm.xlu0 %2501, %v2364
          %v2503 = vpop.permute.xlu0 %2502
          %2506 = vset.pattern.permute.xlu0 0
          %2507 = vperm.xlu0 %2506, %v2365
          %v2508 = vpop.permute.xlu0 %2507
          %2511 = vset.pattern.permute.xlu0 0
          %2512 = vperm.xlu0 %2511, %v2366
          %v2513 = vpop.permute.xlu0 %2512
          %2516 = vset.pattern.permute.xlu0 0
          %2517 = vperm.xlu0 %2516, %v2367
          %v2518 = vpop.permute.xlu0 %2517
          %2521 = vset.pattern.permute.xlu0 0
          %2522 = vperm.xlu0 %2521, %v2368
          %v2523 = vpop.permute.xlu0 %2522
          %2526 = vset.pattern.permute.xlu0 0
          %2527 = vperm.xlu0 %2526, %v2369
          %v2528 = vpop.permute.xlu0 %2527
          %v2530 = vrcp.pop %v2373
          %v2531 = vmul.f32 %v2373, %v2530
          %v2532 = vsub.f32 1.0, %v2531
          %v2533 = vmul.f32 %v2530, %v2532
          %v2534 = vadd.f32 %v2530, %v2533
          %vm2535 = vweird.f32 %v2373
          %vm2536 = vweird.f32 %v2530
          %vm2537 = vmor %vm2535, %vm2536
          %v2538 = vsel %vm2537, %v2530, %v2534
          %v2539 = vand.u32 2147483647, %v2373
          %vm2540 = vcmp.eq.f32.partialorder %v2539, 8.507059e+37
          %v2541 = vand.u32 %v2373, 2147483648
          %v2542 = vor.u32 1.1754944e-38, %v2541
          %v2543 = vsel %vm2540, %v2542, %v2538
          %v2544 = vmul.f32 %v2274, %v2543
          %v2545 = vrcp.pop %v2378
          %v2546 = vmul.f32 %v2378, %v2545
          %v2547 = vsub.f32 1.0, %v2546
          %v2548 = vmul.f32 %v2545, %v2547
          %v2549 = vadd.f32 %v2545, %v2548
          %vm2550 = vweird.f32 %v2378
          %vm2551 = vweird.f32 %v2545
          %vm2552 = vmor %vm2550, %vm2551
          %v2553 = vsel %vm2552, %v2545, %v2549
          %v2554 = vand.u32 2147483647, %v2378
          %vm2555 = vcmp.eq.f32.partialorder %v2554, 8.507059e+37
          %v2556 = vand.u32 %v2378, 2147483648
          %v2557 = vor.u32 1.1754944e-38, %v2556
          %v2558 = vsel %vm2555, %v2557, %v2553
          %v2559 = vmul.f32 %v2275, %v2558
          %v2560 = vrcp.pop %v2383
          %v2561 = vmul.f32 %v2383, %v2560
          %v2562 = vsub.f32 1.0, %v2561
          %v2563 = vmul.f32 %v2560, %v2562
          %v2564 = vadd.f32 %v2560, %v2563
          %vm2565 = vweird.f32 %v2383
          %vm2566 = vweird.f32 %v2560
          %vm2567 = vmor %vm2565, %vm2566
          %v2568 = vsel %vm2567, %v2560, %v2564
          %v2569 = vand.u32 2147483647, %v2383
          %vm2570 = vcmp.eq.f32.partialorder %v2569, 8.507059e+37
          %v2571 = vand.u32 %v2383, 2147483648
          %v2572 = vor.u32 1.1754944e-38, %v2571
          %v2573 = vsel %vm2570, %v2572, %v2568
          %v2574 = vmul.f32 %v2276, %v2573
          %v2575 = vrcp.pop %v2388
          %v2576 = vmul.f32 %v2388, %v2575
          %v2577 = vsub.f32 1.0, %v2576
          %v2578 = vmul.f32 %v2575, %v2577
          %v2579 = vadd.f32 %v2575, %v2578
          %vm2580 = vweird.f32 %v2388
          %vm2581 = vweird.f32 %v2575
          %vm2582 = vmor %vm2580, %vm2581
          %v2583 = vsel %vm2582, %v2575, %v2579
          %v2584 = vand.u32 2147483647, %v2388
          %vm2585 = vcmp.eq.f32.partialorder %v2584, 8.507059e+37
          %v2586 = vand.u32 %v2388, 2147483648
          %v2587 = vor.u32 1.1754944e-38, %v2586
          %v2588 = vsel %vm2585, %v2587, %v2583
          %v2589 = vmul.f32 %v2277, %v2588
          %v2590 = vrcp.pop %v2393
          %v2591 = vmul.f32 %v2393, %v2590
          %v2592 = vsub.f32 1.0, %v2591
          %v2593 = vmul.f32 %v2590, %v2592
          %v2594 = vadd.f32 %v2590, %v2593
          %vm2595 = vweird.f32 %v2393
          %vm2596 = vweird.f32 %v2590
          %vm2597 = vmor %vm2595, %vm2596
          %v2598 = vsel %vm2597, %v2590, %v2594
          %v2599 = vand.u32 2147483647, %v2393
          %vm2600 = vcmp.eq.f32.partialorder %v2599, 8.507059e+37
          %v2601 = vand.u32 %v2393, 2147483648
          %v2602 = vor.u32 1.1754944e-38, %v2601
          %v2603 = vsel %vm2600, %v2602, %v2598
          %v2604 = vmul.f32 %v2278, %v2603
          %v2605 = vrcp.pop %v2398
          %v2606 = vmul.f32 %v2398, %v2605
          %v2607 = vsub.f32 1.0, %v2606
          %v2608 = vmul.f32 %v2605, %v2607
          %v2609 = vadd.f32 %v2605, %v2608
          %vm2610 = vweird.f32 %v2398
          %vm2611 = vweird.f32 %v2605
          %vm2612 = vmor %vm2610, %vm2611
          %v2613 = vsel %vm2612, %v2605, %v2609
          %v2614 = vand.u32 2147483647, %v2398
          %vm2615 = vcmp.eq.f32.partialorder %v2614, 8.507059e+37
          %v2616 = vand.u32 %v2398, 2147483648
          %v2617 = vor.u32 1.1754944e-38, %v2616
          %v2618 = vsel %vm2615, %v2617, %v2613
          %v2619 = vmul.f32 %v2279, %v2618
          %v2620 = vrcp.pop %v2403
          %v2621 = vmul.f32 %v2403, %v2620
          %v2622 = vsub.f32 1.0, %v2621
          %v2623 = vmul.f32 %v2620, %v2622
          %v2624 = vadd.f32 %v2620, %v2623
          %vm2625 = vweird.f32 %v2403
          %vm2626 = vweird.f32 %v2620
          %vm2627 = vmor %vm2625, %vm2626
          %v2628 = vsel %vm2627, %v2620, %v2624
          %v2629 = vand.u32 2147483647, %v2403
          %vm2630 = vcmp.eq.f32.partialorder %v2629, 8.507059e+37
          %v2631 = vand.u32 %v2403, 2147483648
          %v2632 = vor.u32 1.1754944e-38, %v2631
          %v2633 = vsel %vm2630, %v2632, %v2628
          %v2634 = vmul.f32 %v2280, %v2633
          %v2635 = vrcp.pop %v2408
          %v2636 = vmul.f32 %v2408, %v2635
          %v2637 = vsub.f32 1.0, %v2636
          %v2638 = vmul.f32 %v2635, %v2637
          %v2639 = vadd.f32 %v2635, %v2638
          %vm2640 = vweird.f32 %v2408
          %vm2641 = vweird.f32 %v2635
          %vm2642 = vmor %vm2640, %vm2641
          %v2643 = vsel %vm2642, %v2635, %v2639
          %v2644 = vand.u32 2147483647, %v2408
          %vm2645 = vcmp.eq.f32.partialorder %v2644, 8.507059e+37
          %v2646 = vand.u32 %v2408, 2147483648
          %v2647 = vor.u32 1.1754944e-38, %v2646
          %v2648 = vsel %vm2645, %v2647, %v2643
          %v2649 = vmul.f32 %v2281, %v2648
          %v2650 = vrcp.pop %v2413
          %v2651 = vmul.f32 %v2413, %v2650
          %v2652 = vsub.f32 1.0, %v2651
          %v2653 = vmul.f32 %v2650, %v2652
          %v2654 = vadd.f32 %v2650, %v2653
          %vm2655 = vweird.f32 %v2413
          %vm2656 = vweird.f32 %v2650
          %vm2657 = vmor %vm2655, %vm2656
          %v2658 = vsel %vm2657, %v2650, %v2654
          %v2659 = vand.u32 2147483647, %v2413
          %vm2660 = vcmp.eq.f32.partialorder %v2659, 8.507059e+37
          %v2661 = vand.u32 %v2413, 2147483648
          %v2662 = vor.u32 1.1754944e-38, %v2661
          %v2663 = vsel %vm2660, %v2662, %v2658
          %v2664 = vmul.f32 %v2282, %v2663
          %v2665 = vrcp.pop %v2418
          %v2666 = vmul.f32 %v2418, %v2665
          %v2667 = vsub.f32 1.0, %v2666
          %v2668 = vmul.f32 %v2665, %v2667
          %v2669 = vadd.f32 %v2665, %v2668
          %vm2670 = vweird.f32 %v2418
          %vm2671 = vweird.f32 %v2665
          %vm2672 = vmor %vm2670, %vm2671
          %v2673 = vsel %vm2672, %v2665, %v2669
          %v2674 = vand.u32 2147483647, %v2418
          %vm2675 = vcmp.eq.f32.partialorder %v2674, 8.507059e+37
          %v2676 = vand.u32 %v2418, 2147483648
          %v2677 = vor.u32 1.1754944e-38, %v2676
          %v2678 = vsel %vm2675, %v2677, %v2673
          %v2679 = vmul.f32 %v2283, %v2678
          %v2680 = vrcp.pop %v2423
          %v2681 = vmul.f32 %v2423, %v2680
          %v2682 = vsub.f32 1.0, %v2681
          %v2683 = vmul.f32 %v2680, %v2682
          %v2684 = vadd.f32 %v2680, %v2683
          %vm2685 = vweird.f32 %v2423
          %vm2686 = vweird.f32 %v2680
          %vm2687 = vmor %vm2685, %vm2686
          %v2688 = vsel %vm2687, %v2680, %v2684
          %v2689 = vand.u32 2147483647, %v2423
          %vm2690 = vcmp.eq.f32.partialorder %v2689, 8.507059e+37
          %v2691 = vand.u32 %v2423, 2147483648
          %v2692 = vor.u32 1.1754944e-38, %v2691
          %v2693 = vsel %vm2690, %v2692, %v2688
          %v2694 = vmul.f32 %v2284, %v2693
          %v2695 = vrcp.pop %v2428
          %v2696 = vmul.f32 %v2428, %v2695
          %v2697 = vsub.f32 1.0, %v2696
          %v2698 = vmul.f32 %v2695, %v2697
          %v2699 = vadd.f32 %v2695, %v2698
          %vm2700 = vweird.f32 %v2428
          %vm2701 = vweird.f32 %v2695
          %vm2702 = vmor %vm2700, %vm2701
          %v2703 = vsel %vm2702, %v2695, %v2699
          %v2704 = vand.u32 2147483647, %v2428
          %vm2705 = vcmp.eq.f32.partialorder %v2704, 8.507059e+37
          %v2706 = vand.u32 %v2428, 2147483648
          %v2707 = vor.u32 1.1754944e-38, %v2706
          %v2708 = vsel %vm2705, %v2707, %v2703
          %v2709 = vmul.f32 %v2285, %v2708
          %v2710 = vrcp.pop %v2433
          %v2711 = vmul.f32 %v2433, %v2710
          %v2712 = vsub.f32 1.0, %v2711
          %v2713 = vmul.f32 %v2710, %v2712
          %v2714 = vadd.f32 %v2710, %v2713
          %vm2715 = vweird.f32 %v2433
          %vm2716 = vweird.f32 %v2710
          %vm2717 = vmor %vm2715, %vm2716
          %v2718 = vsel %vm2717, %v2710, %v2714
          %v2719 = vand.u32 2147483647, %v2433
          %vm2720 = vcmp.eq.f32.partialorder %v2719, 8.507059e+37
          %v2721 = vand.u32 %v2433, 2147483648
          %v2722 = vor.u32 1.1754944e-38, %v2721
          %v2723 = vsel %vm2720, %v2722, %v2718
          %v2724 = vmul.f32 %v2286, %v2723
          %v2725 = vrcp.pop %v2438
          %v2726 = vmul.f32 %v2438, %v2725
          %v2727 = vsub.f32 1.0, %v2726
          %v2728 = vmul.f32 %v2725, %v2727
          %v2729 = vadd.f32 %v2725, %v2728
          %vm2730 = vweird.f32 %v2438
          %vm2731 = vweird.f32 %v2725
          %vm2732 = vmor %vm2730, %vm2731
          %v2733 = vsel %vm2732, %v2725, %v2729
          %v2734 = vand.u32 2147483647, %v2438
          %vm2735 = vcmp.eq.f32.partialorder %v2734, 8.507059e+37
          %v2736 = vand.u32 %v2438, 2147483648
          %v2737 = vor.u32 1.1754944e-38, %v2736
          %v2738 = vsel %vm2735, %v2737, %v2733
          %v2739 = vmul.f32 %v2287, %v2738
          %v2740 = vrcp.pop %v2443
          %v2741 = vmul.f32 %v2443, %v2740
          %v2742 = vsub.f32 1.0, %v2741
          %v2743 = vmul.f32 %v2740, %v2742
          %v2744 = vadd.f32 %v2740, %v2743
          %vm2745 = vweird.f32 %v2443
          %vm2746 = vweird.f32 %v2740
          %vm2747 = vmor %vm2745, %vm2746
          %v2748 = vsel %vm2747, %v2740, %v2744
          %v2749 = vand.u32 2147483647, %v2443
          %vm2750 = vcmp.eq.f32.partialorder %v2749, 8.507059e+37
          %v2751 = vand.u32 %v2443, 2147483648
          %v2752 = vor.u32 1.1754944e-38, %v2751
          %v2753 = vsel %vm2750, %v2752, %v2748
          %v2754 = vmul.f32 %v2288, %v2753
          %v2755 = vrcp.pop %v2448
          %v2756 = vmul.f32 %v2448, %v2755
          %v2757 = vsub.f32 1.0, %v2756
          %v2758 = vmul.f32 %v2755, %v2757
          %v2759 = vadd.f32 %v2755, %v2758
          %vm2760 = vweird.f32 %v2448
          %vm2761 = vweird.f32 %v2755
          %vm2762 = vmor %vm2760, %vm2761
          %v2763 = vsel %vm2762, %v2755, %v2759
          %v2764 = vand.u32 2147483647, %v2448
          %vm2765 = vcmp.eq.f32.partialorder %v2764, 8.507059e+37
          %v2766 = vand.u32 %v2448, 2147483648
          %v2767 = vor.u32 1.1754944e-38, %v2766
          %v2768 = vsel %vm2765, %v2767, %v2763
          %v2769 = vmul.f32 %v2289, %v2768
          %v2770 = vrcp.pop %v2453
          %v2771 = vmul.f32 %v2453, %v2770
          %v2772 = vsub.f32 1.0, %v2771
          %v2773 = vmul.f32 %v2770, %v2772
          %v2774 = vadd.f32 %v2770, %v2773
          %vm2775 = vweird.f32 %v2453
          %vm2776 = vweird.f32 %v2770
          %vm2777 = vmor %vm2775, %vm2776
          %v2778 = vsel %vm2777, %v2770, %v2774
          %v2779 = vand.u32 2147483647, %v2453
          %vm2780 = vcmp.eq.f32.partialorder %v2779, 8.507059e+37
          %v2781 = vand.u32 %v2453, 2147483648
          %v2782 = vor.u32 1.1754944e-38, %v2781
          %v2783 = vsel %vm2780, %v2782, %v2778
          %v2784 = vmul.f32 %v2290, %v2783
          %v2785 = vrcp.pop %v2458
          %v2786 = vmul.f32 %v2458, %v2785
          %v2787 = vsub.f32 1.0, %v2786
          %v2788 = vmul.f32 %v2785, %v2787
          %v2789 = vadd.f32 %v2785, %v2788
          %vm2790 = vweird.f32 %v2458
          %vm2791 = vweird.f32 %v2785
          %vm2792 = vmor %vm2790, %vm2791
          %v2793 = vsel %vm2792, %v2785, %v2789
          %v2794 = vand.u32 2147483647, %v2458
          %vm2795 = vcmp.eq.f32.partialorder %v2794, 8.507059e+37
          %v2796 = vand.u32 %v2458, 2147483648
          %v2797 = vor.u32 1.1754944e-38, %v2796
          %v2798 = vsel %vm2795, %v2797, %v2793
          %v2799 = vmul.f32 %v2291, %v2798
          %v2800 = vrcp.pop %v2463
          %v2801 = vmul.f32 %v2463, %v2800
          %v2802 = vsub.f32 1.0, %v2801
          %v2803 = vmul.f32 %v2800, %v2802
          %v2804 = vadd.f32 %v2800, %v2803
          %vm2805 = vweird.f32 %v2463
          %vm2806 = vweird.f32 %v2800
          %vm2807 = vmor %vm2805, %vm2806
          %v2808 = vsel %vm2807, %v2800, %v2804
          %v2809 = vand.u32 2147483647, %v2463
          %vm2810 = vcmp.eq.f32.partialorder %v2809, 8.507059e+37
          %v2811 = vand.u32 %v2463, 2147483648
          %v2812 = vor.u32 1.1754944e-38, %v2811
          %v2813 = vsel %vm2810, %v2812, %v2808
          %v2814 = vmul.f32 %v2292, %v2813
          %v2815 = vrcp.pop %v2468
          %v2816 = vmul.f32 %v2468, %v2815
          %v2817 = vsub.f32 1.0, %v2816
          %v2818 = vmul.f32 %v2815, %v2817
          %v2819 = vadd.f32 %v2815, %v2818
          %vm2820 = vweird.f32 %v2468
          %vm2821 = vweird.f32 %v2815
          %vm2822 = vmor %vm2820, %vm2821
          %v2823 = vsel %vm2822, %v2815, %v2819
          %v2824 = vand.u32 2147483647, %v2468
          %vm2825 = vcmp.eq.f32.partialorder %v2824, 8.507059e+37
          %v2826 = vand.u32 %v2468, 2147483648
          %v2827 = vor.u32 1.1754944e-38, %v2826
          %v2828 = vsel %vm2825, %v2827, %v2823
          %v2829 = vmul.f32 %v2293, %v2828
          %v2830 = vrcp.pop %v2473
          %v2831 = vmul.f32 %v2473, %v2830
          %v2832 = vsub.f32 1.0, %v2831
          %v2833 = vmul.f32 %v2830, %v2832
          %v2834 = vadd.f32 %v2830, %v2833
          %vm2835 = vweird.f32 %v2473
          %vm2836 = vweird.f32 %v2830
          %vm2837 = vmor %vm2835, %vm2836
          %v2838 = vsel %vm2837, %v2830, %v2834
          %v2839 = vand.u32 2147483647, %v2473
          %vm2840 = vcmp.eq.f32.partialorder %v2839, 8.507059e+37
          %v2841 = vand.u32 %v2473, 2147483648
          %v2842 = vor.u32 1.1754944e-38, %v2841
          %v2843 = vsel %vm2840, %v2842, %v2838
          %v2844 = vmul.f32 %v2294, %v2843
          %v2845 = vrcp.pop %v2478
          %v2846 = vmul.f32 %v2478, %v2845
          %v2847 = vsub.f32 1.0, %v2846
          %v2848 = vmul.f32 %v2845, %v2847
          %v2849 = vadd.f32 %v2845, %v2848
          %vm2850 = vweird.f32 %v2478
          %vm2851 = vweird.f32 %v2845
          %vm2852 = vmor %vm2850, %vm2851
          %v2853 = vsel %vm2852, %v2845, %v2849
          %v2854 = vand.u32 2147483647, %v2478
          %vm2855 = vcmp.eq.f32.partialorder %v2854, 8.507059e+37
          %v2856 = vand.u32 %v2478, 2147483648
          %v2857 = vor.u32 1.1754944e-38, %v2856
          %v2858 = vsel %vm2855, %v2857, %v2853
          %v2859 = vmul.f32 %v2295, %v2858
          %v2860 = vrcp.pop %v2483
          %v2861 = vmul.f32 %v2483, %v2860
          %v2862 = vsub.f32 1.0, %v2861
          %v2863 = vmul.f32 %v2860, %v2862
          %v2864 = vadd.f32 %v2860, %v2863
          %vm2865 = vweird.f32 %v2483
          %vm2866 = vweird.f32 %v2860
          %vm2867 = vmor %vm2865, %vm2866
          %v2868 = vsel %vm2867, %v2860, %v2864
          %v2869 = vand.u32 2147483647, %v2483
          %vm2870 = vcmp.eq.f32.partialorder %v2869, 8.507059e+37
          %v2871 = vand.u32 %v2483, 2147483648
          %v2872 = vor.u32 1.1754944e-38, %v2871
          %v2873 = vsel %vm2870, %v2872, %v2868
          %v2874 = vmul.f32 %v2296, %v2873
          %v2875 = vrcp.pop %v2488
          %v2876 = vmul.f32 %v2488, %v2875
          %v2877 = vsub.f32 1.0, %v2876
          %v2878 = vmul.f32 %v2875, %v2877
          %v2879 = vadd.f32 %v2875, %v2878
          %vm2880 = vweird.f32 %v2488
          %vm2881 = vweird.f32 %v2875
          %vm2882 = vmor %vm2880, %vm2881
          %v2883 = vsel %vm2882, %v2875, %v2879
          %v2884 = vand.u32 2147483647, %v2488
          %vm2885 = vcmp.eq.f32.partialorder %v2884, 8.507059e+37
          %v2886 = vand.u32 %v2488, 2147483648
          %v2887 = vor.u32 1.1754944e-38, %v2886
          %v2888 = vsel %vm2885, %v2887, %v2883
          %v2889 = vmul.f32 %v2297, %v2888
          %v2890 = vrcp.pop %v2493
          %v2891 = vmul.f32 %v2493, %v2890
          %v2892 = vsub.f32 1.0, %v2891
          %v2893 = vmul.f32 %v2890, %v2892
          %v2894 = vadd.f32 %v2890, %v2893
          %vm2895 = vweird.f32 %v2493
          %vm2896 = vweird.f32 %v2890
          %vm2897 = vmor %vm2895, %vm2896
          %v2898 = vsel %vm2897, %v2890, %v2894
          %v2899 = vand.u32 2147483647, %v2493
          %vm2900 = vcmp.eq.f32.partialorder %v2899, 8.507059e+37
          %v2901 = vand.u32 %v2493, 2147483648
          %v2902 = vor.u32 1.1754944e-38, %v2901
          %v2903 = vsel %vm2900, %v2902, %v2898
          %v2904 = vmul.f32 %v2298, %v2903
          %v2905 = vrcp.pop %v2498
          %v2906 = vmul.f32 %v2498, %v2905
          %v2907 = vsub.f32 1.0, %v2906
          %v2908 = vmul.f32 %v2905, %v2907
          %v2909 = vadd.f32 %v2905, %v2908
          %vm2910 = vweird.f32 %v2498
          %vm2911 = vweird.f32 %v2905
          %vm2912 = vmor %vm2910, %vm2911
          %v2913 = vsel %vm2912, %v2905, %v2909
          %v2914 = vand.u32 2147483647, %v2498
          %vm2915 = vcmp.eq.f32.partialorder %v2914, 8.507059e+37
          %v2916 = vand.u32 %v2498, 2147483648
          %v2917 = vor.u32 1.1754944e-38, %v2916
          %v2918 = vsel %vm2915, %v2917, %v2913
          %v2919 = vmul.f32 %v2299, %v2918
          %v2920 = vrcp.pop %v2503
          %v2921 = vmul.f32 %v2503, %v2920
          %v2922 = vsub.f32 1.0, %v2921
          %v2923 = vmul.f32 %v2920, %v2922
          %v2924 = vadd.f32 %v2920, %v2923
          %vm2925 = vweird.f32 %v2503
          %vm2926 = vweird.f32 %v2920
          %vm2927 = vmor %vm2925, %vm2926
          %v2928 = vsel %vm2927, %v2920, %v2924
          %v2929 = vand.u32 2147483647, %v2503
          %vm2930 = vcmp.eq.f32.partialorder %v2929, 8.507059e+37
          %v2931 = vand.u32 %v2503, 2147483648
          %v2932 = vor.u32 1.1754944e-38, %v2931
          %v2933 = vsel %vm2930, %v2932, %v2928
          %v2934 = vmul.f32 %v2300, %v2933
          %v2935 = vrcp.pop %v2508
          %v2936 = vmul.f32 %v2508, %v2935
          %v2937 = vsub.f32 1.0, %v2936
          %v2938 = vmul.f32 %v2935, %v2937
          %v2939 = vadd.f32 %v2935, %v2938
          %vm2940 = vweird.f32 %v2508
          %vm2941 = vweird.f32 %v2935
          %vm2942 = vmor %vm2940, %vm2941
          %v2943 = vsel %vm2942, %v2935, %v2939
          %v2944 = vand.u32 2147483647, %v2508
          %vm2945 = vcmp.eq.f32.partialorder %v2944, 8.507059e+37
          %v2946 = vand.u32 %v2508, 2147483648
          %v2947 = vor.u32 1.1754944e-38, %v2946
          %v2948 = vsel %vm2945, %v2947, %v2943
          %v2949 = vmul.f32 %v2301, %v2948
          %v2950 = vrcp.pop %v2513
          %v2951 = vmul.f32 %v2513, %v2950
          %v2952 = vsub.f32 1.0, %v2951
          %v2953 = vmul.f32 %v2950, %v2952
          %v2954 = vadd.f32 %v2950, %v2953
          %vm2955 = vweird.f32 %v2513
          %vm2956 = vweird.f32 %v2950
          %vm2957 = vmor %vm2955, %vm2956
          %v2958 = vsel %vm2957, %v2950, %v2954
          %v2959 = vand.u32 2147483647, %v2513
          %vm2960 = vcmp.eq.f32.partialorder %v2959, 8.507059e+37
          %v2961 = vand.u32 %v2513, 2147483648
          %v2962 = vor.u32 1.1754944e-38, %v2961
          %v2963 = vsel %vm2960, %v2962, %v2958
          %v2964 = vmul.f32 %v2302, %v2963
          %v2965 = vrcp.pop %v2518
          %v2966 = vmul.f32 %v2518, %v2965
          %v2967 = vsub.f32 1.0, %v2966
          %v2968 = vmul.f32 %v2965, %v2967
          %v2969 = vadd.f32 %v2965, %v2968
          %vm2970 = vweird.f32 %v2518
          %vm2971 = vweird.f32 %v2965
          %vm2972 = vmor %vm2970, %vm2971
          %v2973 = vsel %vm2972, %v2965, %v2969
          %v2974 = vand.u32 2147483647, %v2518
          %vm2975 = vcmp.eq.f32.partialorder %v2974, 8.507059e+37
          %v2976 = vand.u32 %v2518, 2147483648
          %v2977 = vor.u32 1.1754944e-38, %v2976
          %v2978 = vsel %vm2975, %v2977, %v2973
          %v2979 = vmul.f32 %v2303, %v2978
          %v2980 = vrcp.pop %v2523
          %v2981 = vmul.f32 %v2523, %v2980
          %v2982 = vsub.f32 1.0, %v2981
          %v2983 = vmul.f32 %v2980, %v2982
          %v2984 = vadd.f32 %v2980, %v2983
          %vm2985 = vweird.f32 %v2523
          %vm2986 = vweird.f32 %v2980
          %vm2987 = vmor %vm2985, %vm2986
          %v2988 = vsel %vm2987, %v2980, %v2984
          %v2989 = vand.u32 2147483647, %v2523
          %vm2990 = vcmp.eq.f32.partialorder %v2989, 8.507059e+37
          %v2991 = vand.u32 %v2523, 2147483648
          %v2992 = vor.u32 1.1754944e-38, %v2991
          %v2993 = vsel %vm2990, %v2992, %v2988
          %v2994 = vmul.f32 %v2304, %v2993
          %v2995 = vrcp.pop %v2528
          %v2996 = vmul.f32 %v2528, %v2995
          %v2997 = vsub.f32 1.0, %v2996
          %v2998 = vmul.f32 %v2995, %v2997
          %v2999 = vadd.f32 %v2995, %v2998
          %vm3000 = vweird.f32 %v2528
          %vm3001 = vweird.f32 %v2995
          %vm3002 = vmor %vm3000, %vm3001
          %v3003 = vsel %vm3002, %v2995, %v2999
          %v3004 = vand.u32 2147483647, %v2528
          %vm3005 = vcmp.eq.f32.partialorder %v3004, 8.507059e+37
          %v3006 = vand.u32 %v2528, 2147483648
          %v3007 = vor.u32 1.1754944e-38, %v3006
          %v3008 = vsel %vm3005, %v3007, %v3003
          %v3009 = vmul.f32 %v2305, %v3008
          %v3010 = vld [vmem:[#allocation3] sm:$0xff]
          %v3011 = vld [vmem:[#allocation3 + $0x8] sm:$0xff]
          %v3012 = vld [vmem:[#allocation3 + $0x10] sm:$0xff]
          %v3013 = vld [vmem:[#allocation3 + $0x18] sm:$0xff]
          %v3014 = vld [vmem:[#allocation3 + $0x20] sm:$0xff]
          %v3015 = vld [vmem:[#allocation3 + $0x28] sm:$0xff]
          %v3016 = vld [vmem:[#allocation3 + $0x30] sm:$0xff]
          %v3017 = vld [vmem:[#allocation3 + $0x38] sm:$0xff]
          %v3018 = vld [vmem:[#allocation3 + $0x40] sm:$0xff]
          %v3019 = vld [vmem:[#allocation3 + $0x48] sm:$0xff]
          %v3020 = vld [vmem:[#allocation3 + $0x50] sm:$0xff]
          %v3021 = vld [vmem:[#allocation3 + $0x58] sm:$0xff]
          %v3022 = vld [vmem:[#allocation3 + $0x60] sm:$0xff]
          %v3023 = vld [vmem:[#allocation3 + $0x68] sm:$0xff]
          %v3024 = vld [vmem:[#allocation3 + $0x70] sm:$0xff]
          %v3025 = vld [vmem:[#allocation3 + $0x78] sm:$0xff]
          %v3026 = vld [vmem:[#allocation3 + $0x80] sm:$0xff]
          %v3027 = vld [vmem:[#allocation3 + $0x88] sm:$0xff]
          %v3028 = vld [vmem:[#allocation3 + $0x90] sm:$0xff]
          %v3029 = vld [vmem:[#allocation3 + $0x98] sm:$0xff]
          %v3030 = vld [vmem:[#allocation3 + $0xa0] sm:$0xff]
          %v3031 = vld [vmem:[#allocation3 + $0xa8] sm:$0xff]
          %v3032 = vld [vmem:[#allocation3 + $0xb0] sm:$0xff]
          %v3033 = vld [vmem:[#allocation3 + $0xb8] sm:$0xff]
          %v3034 = vld [vmem:[#allocation3 + $0xc0] sm:$0xff]
          %v3035 = vld [vmem:[#allocation3 + $0xc8] sm:$0xff]
          %v3036 = vld [vmem:[#allocation3 + $0xd0] sm:$0xff]
          %v3037 = vld [vmem:[#allocation3 + $0xd8] sm:$0xff]
          %v3038 = vld [vmem:[#allocation3 + $0xe0] sm:$0xff]
          %v3039 = vld [vmem:[#allocation3 + $0xe8] sm:$0xff]
          %v3040 = vld [vmem:[#allocation3 + $0xf0] sm:$0xff]
          %v3041 = vld [vmem:[#allocation3 + $0xf8] sm:$0xff]
          %v3042 = vadd.f32 %v2544, %v3010
          %v3043 = vadd.f32 %v2559, %v3011
          %v3044 = vadd.f32 %v2574, %v3012
          %v3045 = vadd.f32 %v2589, %v3013
          %v3046 = vadd.f32 %v2604, %v3014
          %v3047 = vadd.f32 %v2619, %v3015
          %v3048 = vadd.f32 %v2634, %v3016
          %v3049 = vadd.f32 %v2649, %v3017
          %v3050 = vadd.f32 %v2664, %v3018
          %v3051 = vadd.f32 %v2679, %v3019
          %v3052 = vadd.f32 %v2694, %v3020
          %v3053 = vadd.f32 %v2709, %v3021
          %v3054 = vadd.f32 %v2724, %v3022
          %v3055 = vadd.f32 %v2739, %v3023
          %v3056 = vadd.f32 %v2754, %v3024
          %v3057 = vadd.f32 %v2769, %v3025
          %v3058 = vadd.f32 %v2784, %v3026
          %v3059 = vadd.f32 %v2799, %v3027
          %v3060 = vadd.f32 %v2814, %v3028
          %v3061 = vadd.f32 %v2829, %v3029
          %v3062 = vadd.f32 %v2844, %v3030
          %v3063 = vadd.f32 %v2859, %v3031
          %v3064 = vadd.f32 %v2874, %v3032
          %v3065 = vadd.f32 %v2889, %v3033
          %v3066 = vadd.f32 %v2904, %v3034
          %v3067 = vadd.f32 %v2919, %v3035
          %v3068 = vadd.f32 %v2934, %v3036
          %v3069 = vadd.f32 %v2949, %v3037
          %v3070 = vadd.f32 %v2964, %v3038
          %v3071 = vadd.f32 %v2979, %v3039
          %v3072 = vadd.f32 %v2994, %v3040
          %v3073 = vadd.f32 %v3009, %v3041
          %v3074 = vmax.f32 %v3042, 0.0
          %v3075 = vmax.f32 %v3043, 0.0
          %v3076 = vmax.f32 %v3044, 0.0
          %v3077 = vmax.f32 %v3045, 0.0
          %v3078 = vmax.f32 %v3046, 0.0
          %v3079 = vmax.f32 %v3047, 0.0
          %v3080 = vmax.f32 %v3048, 0.0
          %v3081 = vmax.f32 %v3049, 0.0
          %v3082 = vmax.f32 %v3050, 0.0
          %v3083 = vmax.f32 %v3051, 0.0
          %v3084 = vmax.f32 %v3052, 0.0
          %v3085 = vmax.f32 %v3053, 0.0
          %v3086 = vmax.f32 %v3054, 0.0
          %v3087 = vmax.f32 %v3055, 0.0
          %v3088 = vmax.f32 %v3056, 0.0
          %v3089 = vmax.f32 %v3057, 0.0
          %v3090 = vmax.f32 %v3058, 0.0
          %v3091 = vmax.f32 %v3059, 0.0
          %v3092 = vmax.f32 %v3060, 0.0
          %v3093 = vmax.f32 %v3061, 0.0
          %v3094 = vmax.f32 %v3062, 0.0
          %v3095 = vmax.f32 %v3063, 0.0
          %v3096 = vmax.f32 %v3064, 0.0
          %v3097 = vmax.f32 %v3065, 0.0
          %v3098 = vmax.f32 %v3066, 0.0
          %v3099 = vmax.f32 %v3067, 0.0
          %v3100 = vmax.f32 %v3068, 0.0
          %v3101 = vmax.f32 %v3069, 0.0
          %v3102 = vmax.f32 %v3070, 0.0
          %v3103 = vmax.f32 %v3071, 0.0
          %v3104 = vmax.f32 %v3072, 0.0
          %v3105 = vmax.f32 %v3073, 0.0
          %3106 = vst [vmem:[%s360] sm:$0xff] %v3074
          %3107 = vst [vmem:[%s360 + $0x8] sm:$0xff] %v3075
          %3108 = vst [vmem:[%s360 + $0x10] sm:$0xff] %v3076
          %3109 = vst [vmem:[%s360 + $0x18] sm:$0xff] %v3077
          %3110 = vst [vmem:[%s360 + $0x20] sm:$0xff] %v3078
          %3111 = vst [vmem:[%s360 + $0x28] sm:$0xff] %v3079
          %3112 = vst [vmem:[%s360 + $0x30] sm:$0xff] %v3080
          %3113 = vst [vmem:[%s360 + $0x38] sm:$0xff] %v3081
          %3114 = vst [vmem:[%s360 + $0x40] sm:$0xff] %v3082
          %3115 = vst [vmem:[%s360 + $0x48] sm:$0xff] %v3083
          %3116 = vst [vmem:[%s360 + $0x50] sm:$0xff] %v3084
          %3117 = vst [vmem:[%s360 + $0x58] sm:$0xff] %v3085
          %3118 = vst [vmem:[%s360 + $0x60] sm:$0xff] %v3086
          %3119 = vst [vmem:[%s360 + $0x68] sm:$0xff] %v3087
          %3120 = vst [vmem:[%s360 + $0x70] sm:$0xff] %v3088
          %3121 = vst [vmem:[%s360 + $0x78] sm:$0xff] %v3089
          %3122 = vst [vmem:[%s360 + $0x80] sm:$0xff] %v3090
          %3123 = vst [vmem:[%s360 + $0x88] sm:$0xff] %v3091
          %3124 = vst [vmem:[%s360 + $0x90] sm:$0xff] %v3092
          %3125 = vst [vmem:[%s360 + $0x98] sm:$0xff] %v3093
          %3126 = vst [vmem:[%s360 + $0xa0] sm:$0xff] %v3094
          %3127 = vst [vmem:[%s360 + $0xa8] sm:$0xff] %v3095
          %3128 = vst [vmem:[%s360 + $0xb0] sm:$0xff] %v3096
          %3129 = vst [vmem:[%s360 + $0xb8] sm:$0xff] %v3097
          %3130 = vst [vmem:[%s360 + $0xc0] sm:$0xff] %v3098
          %3131 = vst [vmem:[%s360 + $0xc8] sm:$0xff] %v3099
          %3132 = vst [vmem:[%s360 + $0xd0] sm:$0xff] %v3100
          %3133 = vst [vmem:[%s360 + $0xd8] sm:$0xff] %v3101
          %3134 = vst [vmem:[%s360 + $0xe0] sm:$0xff] %v3102
          %3135 = vst [vmem:[%s360 + $0xe8] sm:$0xff] %v3103
          %3136 = vst [vmem:[%s360 + $0xf0] sm:$0xff] %v3104
          %3137 = vst [vmem:[%s360 + $0xf8] sm:$0xff] %v3105
        $region64: #{tpu_custom_call.1} parent=39 // pred_fallthru
          _
        %s3138 = sand.u32 %s168, 1
        %s3139 = scalar_lea.sflag [#allocation7], %s3138
        %s3140 = sand.u32 %s168, 1
        %s3141 = smul.addr %s3140, 256
        %s3142 = scalar_lea.vmem [#allocation13], %s3141
        // Predicated region
        $region65: #{tpu_custom_call.1} parent=39 // pred_check
          %p3143 = pneg %p178
        $region66: #{tpu_custom_call.1} parent=39 // pred_check_branch
          %3145 = sbr.rel (%p3143) target = $region68
        $region67: #{tpu_custom_call.1} parent=39 // pred_region
          %s3146 = smul.u32 32, %s30
          %3148 = vsyncadd %s3139, 0
          %s3149 = smul.addr %s3146, 8
          %s3150 = scalar_lea.hbm %s5, %s3149
          %s3151 = sshll.u32 %s3142, 4
          %s3152 = int_to_ptr.vmem [resolvable:$true] %s3151
          %s3153 = sshll.u32 %s3150, 4
          %s3154 = int_to_ptr.hbm [resolvable:$true] %s3153
          %3159 = dma.vmem_to_hbm [thread:$0]  %s3152, 4096, %s3154, %s3139, 128, 128, 8
        $region68: #{tpu_custom_call.1} parent=39 // pred_fallthru
          _
      $region40: #{tpu_custom_call.1} parent=5 // pred_fallthru
        _
      %p3160 = scmp.le.s32.totalorder 2, %s21
      // Predicated region
      $region69: #{tpu_custom_call.1} parent=5 // pred_check
        %p3161 = pneg %p3160
      $region70: #{tpu_custom_call.1} parent=5 // pred_check_branch
        %3163 = sbr.rel (%p3161) target = $region72
      $region71: #{tpu_custom_call.1} parent=5 // pred_region
        %s3164 = ssub.s32 %s21, 2
        // Predicated region
        $region73: #{tpu_custom_call.1} parent=71 // pred_check
          %p3165 = pneg %p184
        $region74: #{tpu_custom_call.1} parent=71 // pred_check_branch
          %3167 = sbr.rel (%p3165) target = $region76
        $region75: #{tpu_custom_call.1} parent=71 // pred_region
          %s3168 = sand.u32 %s169, 1
          %s3169 = scalar_lea.sflag [#allocation7], %s3168
          %s3170 = sand.u32 %s169, 1
          %s3171 = smul.addr %s3170, 256
          %s3172 = scalar_lea.vmem [#allocation13], %s3171
          %3174 = dma.done %s3169, 4096
        $region76: #{tpu_custom_call.1} parent=71 // pred_fallthru
          _
      $region72: #{tpu_custom_call.1} parent=5 // pred_fallthru
        _
    $region6: #{tpu_custom_call.1} parent=1 // loop_footer
      %s25 = sadd.s32 1, %s21
    $region7: #{tpu_custom_call.1} parent=1 // loop_footer_branch
      %20 = sbr.rel target = $region3
    $region8: #{tpu_custom_call.1} parent=1 // loop_exit
      _
    %3175 = vsyncpa [#allocation6], 1
    %s3176 = scalar_lea.sflag [#allocation6], 1
    %3177 = vsyncpa %s3176, 1
    %3178 = vsyncpa [#allocation9], 1
    %s3179 = scalar_lea.sflag [#allocation9], 1
    %3180 = vsyncpa %s3179, 1
    %3181 = vsyncpa [#allocation12], 1
    %3182 = vsyncpa [#allocation7], 1
    %s3183 = scalar_lea.sflag [#allocation7], 1
    %3184 = vsyncpa %s3183, 1

</llo_original>
